<compile_context>
chip_gen: v5e
topology: v5e:2x2
jax: 0.10.0
libtpu: 0.0.40
codegen_flags: <defaults>
</compile_context>

<pallas_src>
import jax
import jax.numpy as jnp
from jax.experimental import pallas as pl
from jax.experimental.pallas import tpu as pltpu


def _ts_kernel_2d(x_ref, f_ref, o_ref):
    """half % 128 == 0 path: two lane-0-aligned sub-stores into a (tile, C) block."""
    half = f_ref.shape[1]
    x = x_ref[...].astype(jnp.float32)          # (tile, 1) f32 (bf16/int inputs upcast)
    phase = x * f_ref[...]                      # broadcast outer product, (tile, half) f32
    o_ref[:, :half] = jnp.cos(phase).astype(o_ref.dtype)
    o_ref[:, half:] = jnp.sin(phase).astype(o_ref.dtype)


def _ts_kernel_3d(x_ref, f_ref, o_ref):
    """half % 128 != 0 path: (tile, 2, half) block, per-half lane-0-aligned stores."""
    x = x_ref[...].astype(jnp.float32)          # (tile, 1) f32
    phase = x * f_ref[...]                      # (tile, half) f32
    o_ref[:, 0, :] = jnp.cos(phase).astype(o_ref.dtype)
    o_ref[:, 1, :] = jnp.sin(phase).astype(o_ref.dtype)


def timestep_embedding(x, num_channels, max_positions=10000, endpoint=False,
                       tile_n=1024, out_dtype=None):
    """x: (N,) timesteps -> (N, num_channels) sinusoidal embedding."""
    assert num_channels % 2 == 0 and num_channels >= 2
    half = num_channels // 2
    # Guard endpoint=True with half == 1 (PyTorch would produce 0/0 -> NaN).
    denom = max(half - (1 if endpoint else 0), 1)
    freqs = jnp.arange(half, dtype=jnp.float32) / float(denom)
    freqs = (1.0 / float(max_positions)) ** freqs          # (half,) f32
    f2d = freqs.reshape(1, half)

    if out_dtype is None:
        out_dtype = x.dtype if jnp.issubdtype(x.dtype, jnp.floating) else jnp.float32
    out_dtype = jnp.dtype(out_dtype)

    n = x.shape[0]
    n_up8 = ((n + 7) // 8) * 8
    split_out = (half % 128 != 0)               # -> (N, 2, half) output layout

    # --- tile-size selection -------------------------------------------------
    lane_half = ((half + 127) // 128) * 128
    if split_out:
        # (tile, 2, half) blocks: last-two-dims tile pads to (8, lane_half) in VMEM.
        out_row_bytes = 8 * lane_half * out_dtype.itemsize
    else:
        out_row_bytes = num_channels * out_dtype.itemsize
    x_row_bytes = 128 * 4                        # (tile, 1) input tile lane padding
    vmem_budget = 16 * 1024 * 1024               # fits v7x 32 MiB scoped VMEM w/ headroom
    vmem_rows = max(8, vmem_budget // (2 * (out_row_bytes + x_row_bytes)))

    tile = min(int(tile_n), vmem_rows, n_up8)
    if n_up8 >= 16:
        tile = min(tile, n_up8 // 2)             # >= 2 grid steps for v7x's 2 TCs
    tile = max(8, (tile // 8) * 8)
    grid = (pl.cdiv(n, tile),)                   # edge block clipped by Pallas

    x2d = x.reshape(n, 1)

    cost = pl.CostEstimate(
        flops=n * half,
        transcendentals=n * num_channels,
        bytes_accessed=(n * jnp.dtype(x.dtype).itemsize
                        + half * 4
                        + n * num_channels * out_dtype.itemsize),
    )
    in_specs = [
        pl.BlockSpec((tile, 1), lambda i: (i, 0)),     # x tile (per-step)
        pl.BlockSpec((1, half), lambda i: (0, 0)),     # freqs, resident
    ]
    cparams = pltpu.CompilerParams(dimension_semantics=("parallel",))

    if split_out:
        out = pl.pallas_call(
            _ts_kernel_3d,
            out_shape=jax.ShapeDtypeStruct((n, 2, half), out_dtype),
            grid=grid,
            in_specs=in_specs,
            out_specs=pl.BlockSpec((tile, 2, half), lambda i: (i, 0, 0)),
            compiler_params=cparams,
            cost_estimate=cost,
        )(x2d, f2d)
        return out.reshape(n, num_channels)      # free contiguous reshape
    else:
        return pl.pallas_call(
            _ts_kernel_2d,
            out_shape=jax.ShapeDtypeStruct((n, num_channels), out_dtype),
            grid=grid,
            in_specs=in_specs,
            out_specs=pl.BlockSpec((tile, num_channels), lambda i: (i, 0)),
            compiler_params=cparams,
            cost_estimate=cost,
        )(x2d, f2d)


def _reference(x, num_channels, max_positions=10000, endpoint=False):
    half = num_channels // 2
    denom = max(half - (1 if endpoint else 0), 1)
    freqs = jnp.arange(half, dtype=jnp.float32) / denom
    freqs = (1.0 / max_positions) ** freqs
    phase = jnp.outer(x.astype(jnp.float32), freqs)
    return jnp.concatenate([jnp.cos(phase), jnp.sin(phase)], axis=1)


if __name__ == "__main__":
    key = jax.random.PRNGKey(0)
    N = 200          # not a multiple of the tile -> exercises the clipped edge block
    C_SMALL = 32     # half = 16  -> (N, 2, half) store path
    C_WIDE = 256     # half = 128 -> lane-0-aligned two-store 2-D path

    # Deterministic "timesteps": random positive floats (e.g. diffusion steps).
    x = jax.random.uniform(key, (N,), dtype=jnp.float32, minval=0.0, maxval=1000.0)

    out_small = jax.block_until_ready(timestep_embedding(x, C_SMALL))
    out_wide = jax.block_until_ready(timestep_embedding(x, C_WIDE))
    out_bf16 = jax.block_until_ready(
        timestep_embedding(x, C_WIDE, out_dtype=jnp.bfloat16))

    ref_small = _reference(x, C_SMALL)
    ref_wide = _reference(x, C_WIDE)

    assert out_small.shape == (N, C_SMALL) and out_small.dtype == jnp.float32
    assert out_wide.shape == (N, C_WIDE) and out_wide.dtype == jnp.float32
    assert out_bf16.shape == (N, C_WIDE) and out_bf16.dtype == jnp.bfloat16
    assert jnp.allclose(out_small, ref_small, atol=3e-5, rtol=1e-5), "mismatch (C=32)"
    assert jnp.allclose(out_wide, ref_wide, atol=3e-5, rtol=1e-5), "mismatch (C=256)"
    assert jnp.allclose(out_bf16.astype(jnp.float32), ref_wide,
                        atol=2e-2, rtol=2e-2), "mismatch (C=256, bf16 out)"

    print("KERNEL_OK")
</pallas_src>

<mosaic_0001>
module attributes {stable_mosaic.version = 11 : i64} {
  func.func @_ts_kernel_3d(%arg0: i32, %arg1: memref<96x1xf32, #tpu.memory_space<vmem>>, %arg2: memref<1x16xf32, #tpu.memory_space<vmem>>, %arg3: memref<96x2x16xf32, #tpu.memory_space<vmem>>) attributes {dimension_semantics = [#tpu.dimension_semantics<parallel>], iteration_bounds = array<i64: 3>, scalar_prefetch = 0 : i64, scratch_operands = 0 : i64, tpu.core_type = #tpu.core_type<tc>, window_params = [{transform_indices = @transform_0, window_bounds = array<i64: 96, 1>}, {pipeline_mode = #tpu.pipeline_mode<synchronous>, transform_indices = @transform_1, window_bounds = array<i64: 1, 16>}, {transform_indices = @transform_2, window_bounds = array<i64: 96, 2, 16>}]} {
    %c0 = arith.constant 0 : index
    %c0_0 = arith.constant 0 : index
    %0 = vector.load %arg1[%c0, %c0_0] : memref<96x1xf32, #tpu.memory_space<vmem>>, vector<96x1xf32>
    %c0_1 = arith.constant 0 : index
    %c0_2 = arith.constant 0 : index
    %1 = vector.load %arg2[%c0_1, %c0_2] : memref<1x16xf32, #tpu.memory_space<vmem>>, vector<1x16xf32>
    %2 = vector.broadcast %0 : vector<96x1xf32> to vector<96x16xf32>
    %3 = vector.broadcast %1 : vector<1x16xf32> to vector<96x16xf32>
    %4 = arith.mulf %2, %3 : vector<96x16xf32>
    %5 = math.cos %4 : vector<96x16xf32>
    %c0_3 = arith.constant 0 : index
    %c0_4 = arith.constant 0 : index
    %c0_5 = arith.constant 0 : index
    %6 = vector.load %arg3[%c0_3, %c0_4, %c0_5] : memref<96x2x16xf32, #tpu.memory_space<vmem>>, vector<96x1x16xf32>
    %7 = vector.shape_cast %6 : vector<96x1x16xf32> to vector<96x16xf32>
    %8 = vector.shape_cast %5 : vector<96x16xf32> to vector<96x1x16xf32>
    tpu.vector_store %arg3[%c0_3, %c0_4, %c0_5], %8 {strides = array<i32>} : memref<96x2x16xf32, #tpu.memory_space<vmem>>, vector<96x1x16xf32>,
    %9 = math.sin %4 : vector<96x16xf32>
    %c0_6 = arith.constant 0 : index
    %c1 = arith.constant 1 : index
    %c0_7 = arith.constant 0 : index
    %10 = vector.load %arg3[%c0_6, %c1, %c0_7] : memref<96x2x16xf32, #tpu.memory_space<vmem>>, vector<96x1x16xf32>
    %11 = vector.shape_cast %10 : vector<96x1x16xf32> to vector<96x16xf32>
    %12 = vector.shape_cast %9 : vector<96x16xf32> to vector<96x1x16xf32>
    tpu.vector_store %arg3[%c0_6, %c1, %c0_7], %12 {strides = array<i32>} : memref<96x2x16xf32, #tpu.memory_space<vmem>>, vector<96x1x16xf32>,
    return
  }
  func.func @transform_0(%arg0: i32) -> (i32, i32) {
    %c0_i32 = arith.constant 0 : i32
    %c0_i32_0 = arith.constant 0 : i32
    return %arg0, %c0_i32 : i32, i32
  }
  func.func @transform_1(%arg0: i32) -> (i32, i32) {
    %c0_i32 = arith.constant 0 : i32
    %c0_i32_0 = arith.constant 0 : i32
    %c0_i32_1 = arith.constant 0 : i32
    return %c0_i32, %c0_i32_0 : i32, i32
  }
  func.func @transform_2(%arg0: i32) -> (i32, i32, i32) {
    %c0_i32 = arith.constant 0 : i32
    %c0_i32_0 = arith.constant 0 : i32
    %c0_i32_1 = arith.constant 0 : i32
    return %arg0, %c0_i32, %c0_i32_0 : i32, i32, i32
  }
}

</mosaic_0001>

<llo_original>
// kernel: tpu_custom_call.1
$region0: #{tpu_custom_call.1}
  #allocation0 [shape = 'u32[]', space=smem, size = 0x4, offset = 0x4, fixed_abs, tag = 'smem constant byte address 0x4 - core index']
  #allocation1 [shape = 'u32[72,128]{1,0:T(1,128)}', space=vmem, size = 0x9000, scoped, tag = 'internal scratch']
  %s0 = inlined_call_operand.vmem [shape: f32[200,1], index: 0, kind: input, shape index: {}]
  %s1 = inlined_call_operand.vmem [shape: f32[1,16], index: 1, kind: input, shape index: {}]
  %s2 = inlined_call_operand.vmem [shape: f32[200,2,16], index: 2, kind: output, shape index: {}]
  %s3 = sld [smem:[#allocation0]]
  $region85: #{tpu_custom_call.1} parent=0
    _
  %s5 = ssub.s32 1, %s3
  %s6 = scalar_select 0, %s5, %s3
  $region1: #{tpu_custom_call.1} parent=0
    #allocation2 [shape = 'u8[196608]{0}', space=vmem, size = 0x30000, scoped, tag = 'output window, operand 0']
    loop: start=0, step=1, limit=5
    $region2: #{tpu_custom_call.1} parent=1 // loop_pre_header
      _
    $region3: #{tpu_custom_call.1} parent=1 // loop_header
      %s8 = sphi 0, %s12
      %p9 = scmp.ge.s32.totalorder %s8, 5
      %s18 = sphi 0, %s20
      %s21 = sphi 0, %s18
      %s22 = sphi 0, %s21
      %s38 = sphi 0, %s22
      %s42 = sphi 0, %s42
      %s44 = sphi 0, %s42
      %s45 = sphi 0, %s44
      %s59 = sphi 0, %s45
      %s65 = sphi 0, %s67
      %s68 = sphi 0, %s65
      %s69 = sphi 0, %s68
      %s85 = sphi 0, %s69
    $region4: #{tpu_custom_call.1} parent=1 // loop_header_branch
      %11 = sbr.rel (%p9) target = $region8
    $region5: #{tpu_custom_call.1} parent=1 // loop_body
      %s13 = ssub.s32 %s8, 1
      %s14 = ssub.s32 %s8, 2
      %s15 = sadd.s32 %s8, 1
      %s16 = ssub.s32 %s8, %s15
      %p17 = scmp.eq.s32.totalorder %s16, 0
      %s19 = sadd.s32 %s18, 1
      %s20 = scalar_select %p17, %s18, %s19
      %p23 = pneg %p17
      %p24 = scmp.eq.s32.totalorder %s8, 2
      %p25 = por %p23, %p24
      %p26 = scmp.ne.s32.totalorder %s18, %s21
      %p27 = scmp.eq.s32.totalorder %s8, 0
      %p28 = por %p26, %p27
      %p29 = scmp.ne.s32.totalorder %s18, %s21
      %p30 = scmp.eq.s32.totalorder %s13, 2
      %p31 = por %p29, %p30
      %p32 = scmp.ne.s32.totalorder %s21, %s22
      %p33 = scmp.eq.s32.totalorder %s13, 0
      %p34 = por %p32, %p33
      %p35 = scmp.ne.s32.totalorder %s21, %s22
      %p36 = scmp.eq.s32.totalorder %s14, 2
      %p37 = por %p35, %p36
      %p39 = scmp.ne.s32.totalorder %s22, %s38
      %p40 = scmp.eq.s32.totalorder %s14, 0
      %p41 = por %p39, %p40
      %s43 = sadd.s32 %s42, 1
      %p46 = scmp.eq.s32.totalorder %s8, 2
      %p47 = scmp.ne.s32.totalorder %s42, %s44
      %p48 = scmp.eq.s32.totalorder %s8, 0
      %p49 = por %p47, %p48
      %p50 = scmp.ne.s32.totalorder %s42, %s44
      %p51 = scmp.eq.s32.totalorder %s13, 2
      %p52 = por %p50, %p51
      %p53 = scmp.ne.s32.totalorder %s44, %s45
      %p54 = scmp.eq.s32.totalorder %s13, 0
      %p55 = por %p53, %p54
      %p56 = scmp.ne.s32.totalorder %s44, %s45
      %p57 = scmp.eq.s32.totalorder %s14, 2
      %p58 = por %p56, %p57
      %p60 = scmp.ne.s32.totalorder %s45, %s59
      %p61 = scmp.eq.s32.totalorder %s14, 0
      %p62 = por %p60, %p61
      %s63 = ssub.s32 %s8, %s15
      %p64 = scmp.eq.s32.totalorder %s63, 0
      %s66 = sadd.s32 %s65, 1
      %s67 = scalar_select %p64, %s65, %s66
      %p70 = pneg %p64
      %p71 = scmp.eq.s32.totalorder %s8, 2
      %p72 = por %p70, %p71
      %p73 = scmp.ne.s32.totalorder %s65, %s68
      %p74 = scmp.eq.s32.totalorder %s8, 0
      %p75 = por %p73, %p74
      %p76 = scmp.ne.s32.totalorder %s65, %s68
      %p77 = scmp.eq.s32.totalorder %s13, 2
      %p78 = por %p76, %p77
      %p79 = scmp.ne.s32.totalorder %s68, %s69
      %p80 = scmp.eq.s32.totalorder %s13, 0
      %p81 = por %p79, %p80
      %p82 = scmp.ne.s32.totalorder %s68, %s69
      %p83 = scmp.eq.s32.totalorder %s14, 2
      %p84 = por %p82, %p83
      %p86 = scmp.ne.s32.totalorder %s69, %s85
      %p87 = scmp.eq.s32.totalorder %s14, 0
      %p88 = por %p86, %p87
      %p89 = scmp.le.s32.totalorder 1, %s8
      %p90 = scmp.lt.s32.totalorder %s8, 4
      %p91 = pnand %p89, %p90
      %p92 = pneg %p91
      // Predicated region
      $region9: #{tpu_custom_call.1} parent=5 // pred_check
        _
      $region10: #{tpu_custom_call.1} parent=5 // pred_check_branch
        %94 = sbr.rel (%p91) target = $region12
      $region11: #{tpu_custom_call.1} parent=5 // pred_region
        %s95 = ssub.s32 %s8, 1
        // Predicated region
        $region13: #{tpu_custom_call.1} parent=11 // pred_check
          %p96 = pneg %p55
        $region14: #{tpu_custom_call.1} parent=11 // pred_check_branch
          %98 = sbr.rel (%p96) target = $region16
        $region15: #{tpu_custom_call.1} parent=11 // pred_region
          _
        $region16: #{tpu_custom_call.1} parent=11 // pred_fallthru
          _
      $region12: #{tpu_custom_call.1} parent=5 // pred_fallthru
        _
      %p99 = scmp.lt.s32.totalorder %s8, 3
      // Predicated region
      $region17: #{tpu_custom_call.1} parent=5 // pred_check
        %p100 = pneg %p99
      $region18: #{tpu_custom_call.1} parent=5 // pred_check_branch
        %102 = sbr.rel (%p100) target = $region20
      $region19: #{tpu_custom_call.1} parent=5 // pred_region
        // Predicated region
        $region21: #{tpu_custom_call.1} parent=19 // pred_check
          %p103 = pneg %p28
        $region22: #{tpu_custom_call.1} parent=19 // pred_check_branch
          %105 = sbr.rel (%p103) target = $region24
        $region23: #{tpu_custom_call.1} parent=19 // pred_region
          %s106 = smul.u32 12, %s8
          %s107 = ssub.s32 25, %s106
          %p108 = scmp.lt.s32.totalorder %s107, 12
          %s109 = scalar_select %p108, %s107, 12
          %s110 = smul.u32 8, %s109
          %p111 = scmp.lt.s32.totalorder %s106, 24
          %s112 = scalar_select %p111, %s106, 24
          %s113 = smul.addr %s112, 8
          %s114 = scalar_lea.vmem %s0, %s113
          %s115 = smul.u32 12, %s8
          %s116 = ssub.s32 25, %s115
          %p117 = scmp.lt.s32.totalorder %s116, 12
          %s118 = scalar_select %p117, %s116, 12
          %s119 = smul.u32 8, %s118
        $region24: #{tpu_custom_call.1} parent=19 // pred_fallthru
          _
      $region20: #{tpu_custom_call.1} parent=5 // pred_fallthru
        _
      %p120 = scmp.le.s32.totalorder 1, %s8
      %p121 = scmp.lt.s32.totalorder %s8, 4
      %p122 = pnand %p120, %p121
      %p123 = pneg %p122
      // Predicated region
      $region25: #{tpu_custom_call.1} parent=5 // pred_check
        _
      $region26: #{tpu_custom_call.1} parent=5 // pred_check_branch
        %125 = sbr.rel (%p122) target = $region28
      $region27: #{tpu_custom_call.1} parent=5 // pred_region
        %s126 = ssub.s32 %s8, 1
        %s127 = smul.u32 12, %s13
        %s128 = ssub.s32 25, %s127
        %p129 = scmp.lt.s32.totalorder %s128, 12
        %s130 = scalar_select %p129, %s128, 12
        %s131 = smul.u32 8, %s130
        %p132 = scmp.lt.s32.totalorder %s127, 24
        %s133 = scalar_select %p132, %s127, 24
        %s134 = smul.addr %s133, 8
        %s135 = scalar_lea.vmem %s0, %s134
        %p136 = pneg %p34
        %p137 = pneg %p31
        %p138 = pneg %p55
        %p139 = pneg %p52
        %p140 = pneg %p81
        %p141 = pneg %p78
        %s142 = sand.u32 %s68, 1
        %s143 = sand.u32 %s68, 1
        %s144 = smul.addr %s143, 192
        %s145 = scalar_lea.vmem [#allocation2], %s144
        %s146 = smul.u32 12, %s13
        %s147 = ssub.s32 25, %s146
        %p148 = scmp.lt.s32.totalorder %s147, 12
        %s149 = scalar_select %p148, %s147, 12
        %s150 = smul.u32 8, %s149
        %p151 = scmp.lt.s32.totalorder %s146, 24
        %s152 = scalar_select %p151, %s146, 24
        %s153 = smul.addr %s152, 8
        %s154 = scalar_lea.vmem %s0, %s153
        %s155 = smul.u32 12, %s13
        %s156 = ssub.s32 25, %s155
        %p157 = scmp.lt.s32.totalorder %s156, 12
        %s158 = scalar_select %p157, %s156, 12
        %s159 = smul.u32 8, %s158
        %s160 = smul.u32 96, %s13
        %s161 = ssub.s32 200, %s160
        %p162 = scmp.lt.s32.totalorder %s161, 96
        %s163 = scalar_select %p162, %s161, 96
        %s164 = smul.u32 2, %s163
        %v165 = vld [vmem:[%s154] sm:$0xff]
        %v166 = vld [vmem:[%s154 + $0x8] sm:$0xff]
        %v167 = vld [vmem:[%s154 + $0x10] sm:$0xff]
        %v168 = vld [vmem:[%s154 + $0x18] sm:$0xff]
        %v169 = vld [vmem:[%s154 + $0x20] sm:$0xff]
        %v170 = vld [vmem:[%s154 + $0x28] sm:$0xff]
        %v171 = vld [vmem:[%s154 + $0x30] sm:$0xff]
        %v172 = vld [vmem:[%s154 + $0x38] sm:$0xff]
        %v173 = vld [vmem:[%s154 + $0x40] sm:$0xff]
        %v174 = vld [vmem:[%s154 + $0x48] sm:$0xff]
        %v175 = vld [vmem:[%s154 + $0x50] sm:$0xff]
        %v176 = vld [vmem:[%s154 + $0x58] sm:$0xff]
        %v177 = vld [vmem:[%s1] sm:$0x1]
        %179 = vset.pattern.permute.xlu0 0
        %180 = vperm.xlu0 %179, %v165
        %v181 = vpop.permute.xlu0 %180
        %184 = vset.pattern.permute.xlu0 0
        %185 = vperm.xlu0 %184, %v166
        %v186 = vpop.permute.xlu0 %185
        %189 = vset.pattern.permute.xlu0 0
        %190 = vperm.xlu0 %189, %v167
        %v191 = vpop.permute.xlu0 %190
        %194 = vset.pattern.permute.xlu0 0
        %195 = vperm.xlu0 %194, %v168
        %v196 = vpop.permute.xlu0 %195
        %199 = vset.pattern.permute.xlu0 0
        %200 = vperm.xlu0 %199, %v169
        %v201 = vpop.permute.xlu0 %200
        %204 = vset.pattern.permute.xlu0 0
        %205 = vperm.xlu0 %204, %v170
        %v206 = vpop.permute.xlu0 %205
        %209 = vset.pattern.permute.xlu0 0
        %210 = vperm.xlu0 %209, %v171
        %v211 = vpop.permute.xlu0 %210
        %214 = vset.pattern.permute.xlu0 0
        %215 = vperm.xlu0 %214, %v172
        %v216 = vpop.permute.xlu0 %215
        %219 = vset.pattern.permute.xlu0 0
        %220 = vperm.xlu0 %219, %v173
        %v221 = vpop.permute.xlu0 %220
        %224 = vset.pattern.permute.xlu0 0
        %225 = vperm.xlu0 %224, %v174
        %v226 = vpop.permute.xlu0 %225
        %229 = vset.pattern.permute.xlu0 0
        %230 = vperm.xlu0 %229, %v175
        %v231 = vpop.permute.xlu0 %230
        %234 = vset.pattern.permute.xlu0 0
        %235 = vperm.xlu0 %234, %v176
        %v236 = vpop.permute.xlu0 %235
        %v239 = vperm.slane %v177, 0
        %v241 = vmul.f32 %v181, %v239
        %v242 = vmul.f32 %v186, %v239
        %v243 = vmul.f32 %v191, %v239
        %v244 = vmul.f32 %v196, %v239
        %v245 = vmul.f32 %v201, %v239
        %v246 = vmul.f32 %v206, %v239
        %v247 = vmul.f32 %v211, %v239
        %v248 = vmul.f32 %v216, %v239
        %v249 = vmul.f32 %v221, %v239
        %v250 = vmul.f32 %v226, %v239
        %v251 = vmul.f32 %v231, %v239
        %v252 = vmul.f32 %v236, %v239
        %v253 = vand.u32 2147483647, %v241
        %vm254 = vcmp.le.f32.partialorder %v253, 0.7853982
        %vm255 = vcmp.lt.s32.totalorder %v241, 0
        %v256 = vand.u32 %v241, 2139095040
        %v257 = vshrl.u32 %v256, 23
        %v258 = vsub.s32 %v257, 127
        %v259 = vand.u32 2147483647, %v241
        %v260 = vand.u32 %v259, 8388607
        %v261 = vor.u32 %v260, 8388608
        %v262 = vsub.s32 0, %v261
        %v263 = vadd.s32 %v258, 1
        %vm264 = vcmp.gt.s32.totalorder %v263, 0
        %v265 = vsel %vm264, %v263, 0
        %v266 = vshrl.u32 %v265, 5
        %v267 = vand.u32 %v265, 31
        %v268 = vsub.s32 32, %v267
        %v269 = vshrl.u32 683565275, %v268
        %v270 = vshll.u32 683565275, %v267
        %v271 = vshrl.u32 2475754826, %v268
        %v272 = vor.u32 %v270, %v271
        %v273 = vshll.u32 2475754826, %v267
        %v274 = vshrl.u32 2131351028, %v268
        %v275 = vor.u32 %v273, %v274
        %v276 = vshll.u32 2131351028, %v267
        %v277 = vshrl.u32 2102212464, %v268
        %v278 = vor.u32 %v276, %v277
        %v279 = vshll.u32 2102212464, %v267
        %v280 = vshrl.u32 920167782, %v268
        %v281 = vor.u32 %v279, %v280
        %v282 = vshll.u32 920167782, %v267
        %v283 = vshrl.u32 1326507024, %v268
        %v284 = vor.u32 %v282, %v283
        %vm285 = vcmp.lt.s32.totalorder %v266, 1
        %vm286 = vcmp.lt.s32.totalorder %v266, 2
        %vm287 = vcmp.lt.s32.totalorder %v266, 3
        %vm288 = vcmp.lt.s32.totalorder %v266, 4
        %v289 = vsel %vm285, %v269, %v272
        %v290 = vsel %vm288, %v278, 2102212464
        %v291 = vsel %vm287, %v275, %v290
        %v292 = vsel %vm286, %v289, %v291
        %v293 = vsel %vm285, %v272, %v275
        %v294 = vsel %vm288, %v281, 920167782
        %v295 = vsel %vm287, %v278, %v294
        %v296 = vsel %vm286, %v293, %v295
        %v297 = vsel %vm285, %v275, %v278
        %v298 = vsel %vm288, %v284, 1326507024
        %v299 = vsel %vm287, %v281, %v298
        %v300 = vsel %vm286, %v297, %v299
        %v301 = vshll.u32 %v261, 8
        %v302 = vand.u32 %v301, 65535
        %v303 = vshrl.u32 %v301, 16
        %v304 = vand.u32 %v300, 65535
        %v305 = vshrl.u32 %v300, 16
        %v306 = vmul.u32 %v302, %v304
        %v307 = vmul.u32 %v302, %v305
        %v308 = vmul.u32 %v303, %v304
        %v309 = vmul.u32 %v303, %v305
        %v310 = vshll.u32 %v307, 16
        %v311 = vshrl.u32 %v307, 16
        %v312 = vshll.u32 %v308, 16
        %v313 = vshrl.u32 %v308, 16
        %vm314 = vc.u32 %v306, %v310
        %v315 = vsel %vm314, 1, 0
        %v316 = vadd.s32 %v306, %v310
        %v317 = vadd.s32 %v309, %v315
        %vm318 = vc.u32 %v316, %v312
        %v319 = vsel %vm318, 1, 0
        %v320 = vadd.s32 %v316, %v312
        %v321 = vadd.s32 %v317, %v319
        %v322 = vadd.s32 %v321, %v311
        %v323 = vadd.s32 %v322, %v313
        %v324 = vand.u32 %v301, 65535
        %v325 = vshrl.u32 %v301, 16
        %v326 = vand.u32 %v296, 65535
        %v327 = vshrl.u32 %v296, 16
        %v328 = vmul.u32 %v324, %v326
        %v329 = vmul.u32 %v324, %v327
        %v330 = vmul.u32 %v325, %v326
        %v331 = vmul.u32 %v325, %v327
        %v332 = vshll.u32 %v329, 16
        %v333 = vshrl.u32 %v329, 16
        %v334 = vshll.u32 %v330, 16
        %v335 = vshrl.u32 %v330, 16
        %vm336 = vc.u32 %v328, %v332
        %v337 = vsel %vm336, 1, 0
        %v338 = vadd.s32 %v328, %v332
        %v339 = vadd.s32 %v331, %v337
        %vm340 = vc.u32 %v338, %v334
        %v341 = vsel %vm340, 1, 0
        %v342 = vadd.s32 %v338, %v334
        %v343 = vadd.s32 %v339, %v341
        %v344 = vadd.s32 %v343, %v333
        %v345 = vadd.s32 %v344, %v335
        %v346 = vmul.u32 %v301, %v292
        %v347 = vadd.s32 %v323, %v342
        %vm348 = vc.u32 %v323, %v342
        %v349 = vadd.s32 %v345, 1
        %v350 = vsel %vm348, %v349, %v345
        %v351 = vadd.s32 %v346, %v350
        %v352 = vadd.s32 %v351, 536870912
        %v353 = vshrl.u32 %v352, 30
        %v354 = vshll.u32 %v353, 30
        %v355 = vsub.s32 %v351, %v354
        %vm356 = vcmp.lt.s32.totalorder %v355, 0
        %v357 = vsub.s32 0, %v355
        %v358 = vsel %vm356, %v357, %v355
        %v359 = vclz %v358
        %v360 = vsub.s32 %v359, 2
        %vm361 = vcmp.gt.s32.totalorder 0, %v360
        %v362 = vsel %vm361, 0, %v360
        %v363 = vsub.s32 32, %v362
        %v364 = vshll.u32 %v355, %v362
        %v365 = vshrl.u32 %v347, %v363
        %v366 = vor.u32 %v364, %v365
        %v367 = vsub.s32 4294967266, %v362
        %v368 = vadd.s32 %v367, 127
        %v369 = vshll.u32 %v368, 23
        %v370 = vor.u32 4788187, %v369
        %v371 = vand.u32 2147483647, %v370
        %v373 = vcvt.s32.f32 %v366
        %v374 = vmul.f32 %v373, %v371
        %v375 = vxor.u32 %v374, 2147483648
        %v376 = vsel %vm255, %v375, %v374
        %v377 = vsub.s32 4, %v353
        %v378 = vsel %vm255, %v377, %v353
        %v379 = vsel %vm254, %v241, %v376
        %v380 = vsel %vm254, 0, %v378
        %v381 = vmul.f32 %v379, %v379
        %v382 = vmul.f32 %v381, -0.001358992
        %v383 = vadd.f32 %v382, 0.041655596
        %v384 = vmul.f32 %v381, %v383
        %v385 = vadd.f32 %v384, -0.4999988
        %v386 = vmul.f32 %v381, %v385
        %v387 = vadd.f32 1.0, %v386
        %v388 = vmul.f32 %v379, %v379
        %v389 = vmul.f32 %v388, -0.00019511016
        %v390 = vadd.f32 %v389, 0.008332121
        %v391 = vmul.f32 %v388, %v390
        %v392 = vadd.f32 %v391, -0.16666654
        %v393 = vmul.f32 %v388, %v392
        %v394 = vadd.f32 %v393, 1.0
        %v395 = vmul.f32 %v394, %v379
        %vm396 = vweird.f32 %v241
        %v397 = vand.u32 %v380, 3
        %vm398 = vcmp.lt.s32.totalorder %v397, 2
        %vm399 = vcmp.eq.s32.totalorder %v397, 0
        %v400 = vxor.u32 %v395, 2147483648
        %v401 = vsel %vm399, %v387, %v400
        %vm402 = vcmp.eq.s32.totalorder %v397, 2
        %v403 = vxor.u32 %v387, 2147483648
        %v404 = vsel %vm402, %v403, %v395
        %v405 = vsel %vm398, %v401, %v404
        %v406 = vsel %vm396, nan, %v405
        %v407 = vand.u32 2147483647, %v242
        %vm408 = vcmp.le.f32.partialorder %v407, 0.7853982
        %vm409 = vcmp.lt.s32.totalorder %v242, 0
        %v410 = vand.u32 %v242, 2139095040
        %v411 = vshrl.u32 %v410, 23
        %v412 = vsub.s32 %v411, 127
        %v413 = vand.u32 2147483647, %v242
        %v414 = vand.u32 %v413, 8388607
        %v415 = vor.u32 %v414, 8388608
        %v416 = vsub.s32 0, %v415
        %v417 = vadd.s32 %v412, 1
        %vm418 = vcmp.gt.s32.totalorder %v417, 0
        %v419 = vsel %vm418, %v417, 0
        %v420 = vshrl.u32 %v419, 5
        %v421 = vand.u32 %v419, 31
        %v422 = vsub.s32 32, %v421
        %v423 = vshrl.u32 683565275, %v422
        %v424 = vshll.u32 683565275, %v421
        %v425 = vshrl.u32 2475754826, %v422
        %v426 = vor.u32 %v424, %v425
        %v427 = vshll.u32 2475754826, %v421
        %v428 = vshrl.u32 2131351028, %v422
        %v429 = vor.u32 %v427, %v428
        %v430 = vshll.u32 2131351028, %v421
        %v431 = vshrl.u32 2102212464, %v422
        %v432 = vor.u32 %v430, %v431
        %v433 = vshll.u32 2102212464, %v421
        %v434 = vshrl.u32 920167782, %v422
        %v435 = vor.u32 %v433, %v434
        %v436 = vshll.u32 920167782, %v421
        %v437 = vshrl.u32 1326507024, %v422
        %v438 = vor.u32 %v436, %v437
        %vm439 = vcmp.lt.s32.totalorder %v420, 1
        %vm440 = vcmp.lt.s32.totalorder %v420, 2
        %vm441 = vcmp.lt.s32.totalorder %v420, 3
        %vm442 = vcmp.lt.s32.totalorder %v420, 4
        %v443 = vsel %vm439, %v423, %v426
        %v444 = vsel %vm442, %v432, 2102212464
        %v445 = vsel %vm441, %v429, %v444
        %v446 = vsel %vm440, %v443, %v445
        %v447 = vsel %vm439, %v426, %v429
        %v448 = vsel %vm442, %v435, 920167782
        %v449 = vsel %vm441, %v432, %v448
        %v450 = vsel %vm440, %v447, %v449
        %v451 = vsel %vm439, %v429, %v432
        %v452 = vsel %vm442, %v438, 1326507024
        %v453 = vsel %vm441, %v435, %v452
        %v454 = vsel %vm440, %v451, %v453
        %v455 = vshll.u32 %v415, 8
        %v456 = vand.u32 %v455, 65535
        %v457 = vshrl.u32 %v455, 16
        %v458 = vand.u32 %v454, 65535
        %v459 = vshrl.u32 %v454, 16
        %v460 = vmul.u32 %v456, %v458
        %v461 = vmul.u32 %v456, %v459
        %v462 = vmul.u32 %v457, %v458
        %v463 = vmul.u32 %v457, %v459
        %v464 = vshll.u32 %v461, 16
        %v465 = vshrl.u32 %v461, 16
        %v466 = vshll.u32 %v462, 16
        %v467 = vshrl.u32 %v462, 16
        %vm468 = vc.u32 %v460, %v464
        %v469 = vsel %vm468, 1, 0
        %v470 = vadd.s32 %v460, %v464
        %v471 = vadd.s32 %v463, %v469
        %vm472 = vc.u32 %v470, %v466
        %v473 = vsel %vm472, 1, 0
        %v474 = vadd.s32 %v470, %v466
        %v475 = vadd.s32 %v471, %v473
        %v476 = vadd.s32 %v475, %v465
        %v477 = vadd.s32 %v476, %v467
        %v478 = vand.u32 %v455, 65535
        %v479 = vshrl.u32 %v455, 16
        %v480 = vand.u32 %v450, 65535
        %v481 = vshrl.u32 %v450, 16
        %v482 = vmul.u32 %v478, %v480
        %v483 = vmul.u32 %v478, %v481
        %v484 = vmul.u32 %v479, %v480
        %v485 = vmul.u32 %v479, %v481
        %v486 = vshll.u32 %v483, 16
        %v487 = vshrl.u32 %v483, 16
        %v488 = vshll.u32 %v484, 16
        %v489 = vshrl.u32 %v484, 16
        %vm490 = vc.u32 %v482, %v486
        %v491 = vsel %vm490, 1, 0
        %v492 = vadd.s32 %v482, %v486
        %v493 = vadd.s32 %v485, %v491
        %vm494 = vc.u32 %v492, %v488
        %v495 = vsel %vm494, 1, 0
        %v496 = vadd.s32 %v492, %v488
        %v497 = vadd.s32 %v493, %v495
        %v498 = vadd.s32 %v497, %v487
        %v499 = vadd.s32 %v498, %v489
        %v500 = vmul.u32 %v455, %v446
        %v501 = vadd.s32 %v477, %v496
        %vm502 = vc.u32 %v477, %v496
        %v503 = vadd.s32 %v499, 1
        %v504 = vsel %vm502, %v503, %v499
        %v505 = vadd.s32 %v500, %v504
        %v506 = vadd.s32 %v505, 536870912
        %v507 = vshrl.u32 %v506, 30
        %v508 = vshll.u32 %v507, 30
        %v509 = vsub.s32 %v505, %v508
        %vm510 = vcmp.lt.s32.totalorder %v509, 0
        %v511 = vsub.s32 0, %v509
        %v512 = vsel %vm510, %v511, %v509
        %v513 = vclz %v512
        %v514 = vsub.s32 %v513, 2
        %vm515 = vcmp.gt.s32.totalorder 0, %v514
        %v516 = vsel %vm515, 0, %v514
        %v517 = vsub.s32 32, %v516
        %v518 = vshll.u32 %v509, %v516
        %v519 = vshrl.u32 %v501, %v517
        %v520 = vor.u32 %v518, %v519
        %v521 = vsub.s32 4294967266, %v516
        %v522 = vadd.s32 %v521, 127
        %v523 = vshll.u32 %v522, 23
        %v524 = vor.u32 4788187, %v523
        %v525 = vand.u32 2147483647, %v524
        %v527 = vcvt.s32.f32 %v520
        %v528 = vmul.f32 %v527, %v525
        %v529 = vxor.u32 %v528, 2147483648
        %v530 = vsel %vm409, %v529, %v528
        %v531 = vsub.s32 4, %v507
        %v532 = vsel %vm409, %v531, %v507
        %v533 = vsel %vm408, %v242, %v530
        %v534 = vsel %vm408, 0, %v532
        %v535 = vmul.f32 %v533, %v533
        %v536 = vmul.f32 %v535, -0.001358992
        %v537 = vadd.f32 %v536, 0.041655596
        %v538 = vmul.f32 %v535, %v537
        %v539 = vadd.f32 %v538, -0.4999988
        %v540 = vmul.f32 %v535, %v539
        %v541 = vadd.f32 1.0, %v540
        %v542 = vmul.f32 %v533, %v533
        %v543 = vmul.f32 %v542, -0.00019511016
        %v544 = vadd.f32 %v543, 0.008332121
        %v545 = vmul.f32 %v542, %v544
        %v546 = vadd.f32 %v545, -0.16666654
        %v547 = vmul.f32 %v542, %v546
        %v548 = vadd.f32 %v547, 1.0
        %v549 = vmul.f32 %v548, %v533
        %vm550 = vweird.f32 %v242
        %v551 = vand.u32 %v534, 3
        %vm552 = vcmp.lt.s32.totalorder %v551, 2
        %vm553 = vcmp.eq.s32.totalorder %v551, 0
        %v554 = vxor.u32 %v549, 2147483648
        %v555 = vsel %vm553, %v541, %v554
        %vm556 = vcmp.eq.s32.totalorder %v551, 2
        %v557 = vxor.u32 %v541, 2147483648
        %v558 = vsel %vm556, %v557, %v549
        %v559 = vsel %vm552, %v555, %v558
        %v560 = vsel %vm550, nan, %v559
        %v561 = vand.u32 2147483647, %v243
        %vm562 = vcmp.le.f32.partialorder %v561, 0.7853982
        %vm563 = vcmp.lt.s32.totalorder %v243, 0
        %v564 = vand.u32 %v243, 2139095040
        %v565 = vshrl.u32 %v564, 23
        %v566 = vsub.s32 %v565, 127
        %v567 = vand.u32 2147483647, %v243
        %v568 = vand.u32 %v567, 8388607
        %v569 = vor.u32 %v568, 8388608
        %v570 = vsub.s32 0, %v569
        %v571 = vadd.s32 %v566, 1
        %vm572 = vcmp.gt.s32.totalorder %v571, 0
        %v573 = vsel %vm572, %v571, 0
        %v574 = vshrl.u32 %v573, 5
        %v575 = vand.u32 %v573, 31
        %v576 = vsub.s32 32, %v575
        %v577 = vshrl.u32 683565275, %v576
        %v578 = vshll.u32 683565275, %v575
        %v579 = vshrl.u32 2475754826, %v576
        %v580 = vor.u32 %v578, %v579
        %v581 = vshll.u32 2475754826, %v575
        %v582 = vshrl.u32 2131351028, %v576
        %v583 = vor.u32 %v581, %v582
        %v584 = vshll.u32 2131351028, %v575
        %v585 = vshrl.u32 2102212464, %v576
        %v586 = vor.u32 %v584, %v585
        %v587 = vshll.u32 2102212464, %v575
        %v588 = vshrl.u32 920167782, %v576
        %v589 = vor.u32 %v587, %v588
        %v590 = vshll.u32 920167782, %v575
        %v591 = vshrl.u32 1326507024, %v576
        %v592 = vor.u32 %v590, %v591
        %vm593 = vcmp.lt.s32.totalorder %v574, 1
        %vm594 = vcmp.lt.s32.totalorder %v574, 2
        %vm595 = vcmp.lt.s32.totalorder %v574, 3
        %vm596 = vcmp.lt.s32.totalorder %v574, 4
        %v597 = vsel %vm593, %v577, %v580
        %v598 = vsel %vm596, %v586, 2102212464
        %v599 = vsel %vm595, %v583, %v598
        %v600 = vsel %vm594, %v597, %v599
        %v601 = vsel %vm593, %v580, %v583
        %v602 = vsel %vm596, %v589, 920167782
        %v603 = vsel %vm595, %v586, %v602
        %v604 = vsel %vm594, %v601, %v603
        %v605 = vsel %vm593, %v583, %v586
        %v606 = vsel %vm596, %v592, 1326507024
        %v607 = vsel %vm595, %v589, %v606
        %v608 = vsel %vm594, %v605, %v607
        %v609 = vshll.u32 %v569, 8
        %v610 = vand.u32 %v609, 65535
        %v611 = vshrl.u32 %v609, 16
        %v612 = vand.u32 %v608, 65535
        %v613 = vshrl.u32 %v608, 16
        %v614 = vmul.u32 %v610, %v612
        %v615 = vmul.u32 %v610, %v613
        %v616 = vmul.u32 %v611, %v612
        %v617 = vmul.u32 %v611, %v613
        %v618 = vshll.u32 %v615, 16
        %v619 = vshrl.u32 %v615, 16
        %v620 = vshll.u32 %v616, 16
        %v621 = vshrl.u32 %v616, 16
        %vm622 = vc.u32 %v614, %v618
        %v623 = vsel %vm622, 1, 0
        %v624 = vadd.s32 %v614, %v618
        %v625 = vadd.s32 %v617, %v623
        %vm626 = vc.u32 %v624, %v620
        %v627 = vsel %vm626, 1, 0
        %v628 = vadd.s32 %v624, %v620
        %v629 = vadd.s32 %v625, %v627
        %v630 = vadd.s32 %v629, %v619
        %v631 = vadd.s32 %v630, %v621
        %v632 = vand.u32 %v609, 65535
        %v633 = vshrl.u32 %v609, 16
        %v634 = vand.u32 %v604, 65535
        %v635 = vshrl.u32 %v604, 16
        %v636 = vmul.u32 %v632, %v634
        %v637 = vmul.u32 %v632, %v635
        %v638 = vmul.u32 %v633, %v634
        %v639 = vmul.u32 %v633, %v635
        %v640 = vshll.u32 %v637, 16
        %v641 = vshrl.u32 %v637, 16
        %v642 = vshll.u32 %v638, 16
        %v643 = vshrl.u32 %v638, 16
        %vm644 = vc.u32 %v636, %v640
        %v645 = vsel %vm644, 1, 0
        %v646 = vadd.s32 %v636, %v640
        %v647 = vadd.s32 %v639, %v645
        %vm648 = vc.u32 %v646, %v642
        %v649 = vsel %vm648, 1, 0
        %v650 = vadd.s32 %v646, %v642
        %v651 = vadd.s32 %v647, %v649
        %v652 = vadd.s32 %v651, %v641
        %v653 = vadd.s32 %v652, %v643
        %v654 = vmul.u32 %v609, %v600
        %v655 = vadd.s32 %v631, %v650
        %vm656 = vc.u32 %v631, %v650
        %v657 = vadd.s32 %v653, 1
        %v658 = vsel %vm656, %v657, %v653
        %v659 = vadd.s32 %v654, %v658
        %v660 = vadd.s32 %v659, 536870912
        %v661 = vshrl.u32 %v660, 30
        %v662 = vshll.u32 %v661, 30
        %v663 = vsub.s32 %v659, %v662
        %vm664 = vcmp.lt.s32.totalorder %v663, 0
        %v665 = vsub.s32 0, %v663
        %v666 = vsel %vm664, %v665, %v663
        %v667 = vclz %v666
        %v668 = vsub.s32 %v667, 2
        %vm669 = vcmp.gt.s32.totalorder 0, %v668
        %v670 = vsel %vm669, 0, %v668
        %v671 = vsub.s32 32, %v670
        %v672 = vshll.u32 %v663, %v670
        %v673 = vshrl.u32 %v655, %v671
        %v674 = vor.u32 %v672, %v673
        %v675 = vsub.s32 4294967266, %v670
        %v676 = vadd.s32 %v675, 127
        %v677 = vshll.u32 %v676, 23
        %v678 = vor.u32 4788187, %v677
        %v679 = vand.u32 2147483647, %v678
        %v681 = vcvt.s32.f32 %v674
        %v682 = vmul.f32 %v681, %v679
        %v683 = vxor.u32 %v682, 2147483648
        %v684 = vsel %vm563, %v683, %v682
        %v685 = vsub.s32 4, %v661
        %v686 = vsel %vm563, %v685, %v661
        %v687 = vsel %vm562, %v243, %v684
        %v688 = vsel %vm562, 0, %v686
        %v689 = vmul.f32 %v687, %v687
        %v690 = vmul.f32 %v689, -0.001358992
        %v691 = vadd.f32 %v690, 0.041655596
        %v692 = vmul.f32 %v689, %v691
        %v693 = vadd.f32 %v692, -0.4999988
        %v694 = vmul.f32 %v689, %v693
        %v695 = vadd.f32 1.0, %v694
        %v696 = vmul.f32 %v687, %v687
        %v697 = vmul.f32 %v696, -0.00019511016
        %v698 = vadd.f32 %v697, 0.008332121
        %v699 = vmul.f32 %v696, %v698
        %v700 = vadd.f32 %v699, -0.16666654
        %v701 = vmul.f32 %v696, %v700
        %v702 = vadd.f32 %v701, 1.0
        %v703 = vmul.f32 %v702, %v687
        %vm704 = vweird.f32 %v243
        %v705 = vand.u32 %v688, 3
        %vm706 = vcmp.lt.s32.totalorder %v705, 2
        %vm707 = vcmp.eq.s32.totalorder %v705, 0
        %v708 = vxor.u32 %v703, 2147483648
        %v709 = vsel %vm707, %v695, %v708
        %vm710 = vcmp.eq.s32.totalorder %v705, 2
        %v711 = vxor.u32 %v695, 2147483648
        %v712 = vsel %vm710, %v711, %v703
        %v713 = vsel %vm706, %v709, %v712
        %v714 = vsel %vm704, nan, %v713
        %v715 = vand.u32 2147483647, %v244
        %vm716 = vcmp.le.f32.partialorder %v715, 0.7853982
        %vm717 = vcmp.lt.s32.totalorder %v244, 0
        %v718 = vand.u32 %v244, 2139095040
        %v719 = vshrl.u32 %v718, 23
        %v720 = vsub.s32 %v719, 127
        %v721 = vand.u32 2147483647, %v244
        %v722 = vand.u32 %v721, 8388607
        %v723 = vor.u32 %v722, 8388608
        %v724 = vsub.s32 0, %v723
        %v725 = vadd.s32 %v720, 1
        %vm726 = vcmp.gt.s32.totalorder %v725, 0
        %v727 = vsel %vm726, %v725, 0
        %v728 = vshrl.u32 %v727, 5
        %v729 = vand.u32 %v727, 31
        %v730 = vsub.s32 32, %v729
        %v731 = vshrl.u32 683565275, %v730
        %v732 = vshll.u32 683565275, %v729
        %v733 = vshrl.u32 2475754826, %v730
        %v734 = vor.u32 %v732, %v733
        %v735 = vshll.u32 2475754826, %v729
        %v736 = vshrl.u32 2131351028, %v730
        %v737 = vor.u32 %v735, %v736
        %v738 = vshll.u32 2131351028, %v729
        %v739 = vshrl.u32 2102212464, %v730
        %v740 = vor.u32 %v738, %v739
        %v741 = vshll.u32 2102212464, %v729
        %v742 = vshrl.u32 920167782, %v730
        %v743 = vor.u32 %v741, %v742
        %v744 = vshll.u32 920167782, %v729
        %v745 = vshrl.u32 1326507024, %v730
        %v746 = vor.u32 %v744, %v745
        %vm747 = vcmp.lt.s32.totalorder %v728, 1
        %vm748 = vcmp.lt.s32.totalorder %v728, 2
        %vm749 = vcmp.lt.s32.totalorder %v728, 3
        %vm750 = vcmp.lt.s32.totalorder %v728, 4
        %v751 = vsel %vm747, %v731, %v734
        %v752 = vsel %vm750, %v740, 2102212464
        %v753 = vsel %vm749, %v737, %v752
        %v754 = vsel %vm748, %v751, %v753
        %v755 = vsel %vm747, %v734, %v737
        %v756 = vsel %vm750, %v743, 920167782
        %v757 = vsel %vm749, %v740, %v756
        %v758 = vsel %vm748, %v755, %v757
        %v759 = vsel %vm747, %v737, %v740
        %v760 = vsel %vm750, %v746, 1326507024
        %v761 = vsel %vm749, %v743, %v760
        %v762 = vsel %vm748, %v759, %v761
        %v763 = vshll.u32 %v723, 8
        %v764 = vand.u32 %v763, 65535
        %v765 = vshrl.u32 %v763, 16
        %v766 = vand.u32 %v762, 65535
        %v767 = vshrl.u32 %v762, 16
        %v768 = vmul.u32 %v764, %v766
        %v769 = vmul.u32 %v764, %v767
        %v770 = vmul.u32 %v765, %v766
        %v771 = vmul.u32 %v765, %v767
        %v772 = vshll.u32 %v769, 16
        %v773 = vshrl.u32 %v769, 16
        %v774 = vshll.u32 %v770, 16
        %v775 = vshrl.u32 %v770, 16
        %vm776 = vc.u32 %v768, %v772
        %v777 = vsel %vm776, 1, 0
        %v778 = vadd.s32 %v768, %v772
        %v779 = vadd.s32 %v771, %v777
        %vm780 = vc.u32 %v778, %v774
        %v781 = vsel %vm780, 1, 0
        %v782 = vadd.s32 %v778, %v774
        %v783 = vadd.s32 %v779, %v781
        %v784 = vadd.s32 %v783, %v773
        %v785 = vadd.s32 %v784, %v775
        %v786 = vand.u32 %v763, 65535
        %v787 = vshrl.u32 %v763, 16
        %v788 = vand.u32 %v758, 65535
        %v789 = vshrl.u32 %v758, 16
        %v790 = vmul.u32 %v786, %v788
        %v791 = vmul.u32 %v786, %v789
        %v792 = vmul.u32 %v787, %v788
        %v793 = vmul.u32 %v787, %v789
        %v794 = vshll.u32 %v791, 16
        %v795 = vshrl.u32 %v791, 16
        %v796 = vshll.u32 %v792, 16
        %v797 = vshrl.u32 %v792, 16
        %vm798 = vc.u32 %v790, %v794
        %v799 = vsel %vm798, 1, 0
        %v800 = vadd.s32 %v790, %v794
        %v801 = vadd.s32 %v793, %v799
        %vm802 = vc.u32 %v800, %v796
        %v803 = vsel %vm802, 1, 0
        %v804 = vadd.s32 %v800, %v796
        %v805 = vadd.s32 %v801, %v803
        %v806 = vadd.s32 %v805, %v795
        %v807 = vadd.s32 %v806, %v797
        %v808 = vmul.u32 %v763, %v754
        %v809 = vadd.s32 %v785, %v804
        %vm810 = vc.u32 %v785, %v804
        %v811 = vadd.s32 %v807, 1
        %v812 = vsel %vm810, %v811, %v807
        %v813 = vadd.s32 %v808, %v812
        %v814 = vadd.s32 %v813, 536870912
        %v815 = vshrl.u32 %v814, 30
        %v816 = vshll.u32 %v815, 30
        %v817 = vsub.s32 %v813, %v816
        %vm818 = vcmp.lt.s32.totalorder %v817, 0
        %v819 = vsub.s32 0, %v817
        %v820 = vsel %vm818, %v819, %v817
        %v821 = vclz %v820
        %v822 = vsub.s32 %v821, 2
        %vm823 = vcmp.gt.s32.totalorder 0, %v822
        %v824 = vsel %vm823, 0, %v822
        %v825 = vsub.s32 32, %v824
        %v826 = vshll.u32 %v817, %v824
        %v827 = vshrl.u32 %v809, %v825
        %v828 = vor.u32 %v826, %v827
        %v829 = vsub.s32 4294967266, %v824
        %v830 = vadd.s32 %v829, 127
        %v831 = vshll.u32 %v830, 23
        %v832 = vor.u32 4788187, %v831
        %v833 = vand.u32 2147483647, %v832
        %v835 = vcvt.s32.f32 %v828
        %v836 = vmul.f32 %v835, %v833
        %v837 = vxor.u32 %v836, 2147483648
        %v838 = vsel %vm717, %v837, %v836
        %v839 = vsub.s32 4, %v815
        %v840 = vsel %vm717, %v839, %v815
        %v841 = vsel %vm716, %v244, %v838
        %v842 = vsel %vm716, 0, %v840
        %v843 = vmul.f32 %v841, %v841
        %v844 = vmul.f32 %v843, -0.001358992
        %v845 = vadd.f32 %v844, 0.041655596
        %v846 = vmul.f32 %v843, %v845
        %v847 = vadd.f32 %v846, -0.4999988
        %v848 = vmul.f32 %v843, %v847
        %v849 = vadd.f32 1.0, %v848
        %v850 = vmul.f32 %v841, %v841
        %v851 = vmul.f32 %v850, -0.00019511016
        %v852 = vadd.f32 %v851, 0.008332121
        %v853 = vmul.f32 %v850, %v852
        %v854 = vadd.f32 %v853, -0.16666654
        %v855 = vmul.f32 %v850, %v854
        %v856 = vadd.f32 %v855, 1.0
        %v857 = vmul.f32 %v856, %v841
        %vm858 = vweird.f32 %v244
        %v859 = vand.u32 %v842, 3
        %vm860 = vcmp.lt.s32.totalorder %v859, 2
        %vm861 = vcmp.eq.s32.totalorder %v859, 0
        %v862 = vxor.u32 %v857, 2147483648
        %v863 = vsel %vm861, %v849, %v862
        %vm864 = vcmp.eq.s32.totalorder %v859, 2
        %v865 = vxor.u32 %v849, 2147483648
        %v866 = vsel %vm864, %v865, %v857
        %v867 = vsel %vm860, %v863, %v866
        %v868 = vsel %vm858, nan, %v867
        %v869 = vand.u32 2147483647, %v245
        %vm870 = vcmp.le.f32.partialorder %v869, 0.7853982
        %vm871 = vcmp.lt.s32.totalorder %v245, 0
        %v872 = vand.u32 %v245, 2139095040
        %v873 = vshrl.u32 %v872, 23
        %v874 = vsub.s32 %v873, 127
        %v875 = vand.u32 2147483647, %v245
        %v876 = vand.u32 %v875, 8388607
        %v877 = vor.u32 %v876, 8388608
        %v878 = vsub.s32 0, %v877
        %v879 = vadd.s32 %v874, 1
        %vm880 = vcmp.gt.s32.totalorder %v879, 0
        %v881 = vsel %vm880, %v879, 0
        %v882 = vshrl.u32 %v881, 5
        %v883 = vand.u32 %v881, 31
        %v884 = vsub.s32 32, %v883
        %v885 = vshrl.u32 683565275, %v884
        %v886 = vshll.u32 683565275, %v883
        %v887 = vshrl.u32 2475754826, %v884
        %v888 = vor.u32 %v886, %v887
        %v889 = vshll.u32 2475754826, %v883
        %v890 = vshrl.u32 2131351028, %v884
        %v891 = vor.u32 %v889, %v890
        %v892 = vshll.u32 2131351028, %v883
        %v893 = vshrl.u32 2102212464, %v884
        %v894 = vor.u32 %v892, %v893
        %v895 = vshll.u32 2102212464, %v883
        %v896 = vshrl.u32 920167782, %v884
        %v897 = vor.u32 %v895, %v896
        %v898 = vshll.u32 920167782, %v883
        %v899 = vshrl.u32 1326507024, %v884
        %v900 = vor.u32 %v898, %v899
        %vm901 = vcmp.lt.s32.totalorder %v882, 1
        %vm902 = vcmp.lt.s32.totalorder %v882, 2
        %vm903 = vcmp.lt.s32.totalorder %v882, 3
        %vm904 = vcmp.lt.s32.totalorder %v882, 4
        %v905 = vsel %vm901, %v885, %v888
        %v906 = vsel %vm904, %v894, 2102212464
        %v907 = vsel %vm903, %v891, %v906
        %v908 = vsel %vm902, %v905, %v907
        %v909 = vsel %vm901, %v888, %v891
        %v910 = vsel %vm904, %v897, 920167782
        %v911 = vsel %vm903, %v894, %v910
        %v912 = vsel %vm902, %v909, %v911
        %v913 = vsel %vm901, %v891, %v894
        %v914 = vsel %vm904, %v900, 1326507024
        %v915 = vsel %vm903, %v897, %v914
        %v916 = vsel %vm902, %v913, %v915
        %v917 = vshll.u32 %v877, 8
        %v918 = vand.u32 %v917, 65535
        %v919 = vshrl.u32 %v917, 16
        %v920 = vand.u32 %v916, 65535
        %v921 = vshrl.u32 %v916, 16
        %v922 = vmul.u32 %v918, %v920
        %v923 = vmul.u32 %v918, %v921
        %v924 = vmul.u32 %v919, %v920
        %v925 = vmul.u32 %v919, %v921
        %v926 = vshll.u32 %v923, 16
        %v927 = vshrl.u32 %v923, 16
        %v928 = vshll.u32 %v924, 16
        %v929 = vshrl.u32 %v924, 16
        %vm930 = vc.u32 %v922, %v926
        %v931 = vsel %vm930, 1, 0
        %v932 = vadd.s32 %v922, %v926
        %v933 = vadd.s32 %v925, %v931
        %vm934 = vc.u32 %v932, %v928
        %v935 = vsel %vm934, 1, 0
        %v936 = vadd.s32 %v932, %v928
        %v937 = vadd.s32 %v933, %v935
        %v938 = vadd.s32 %v937, %v927
        %v939 = vadd.s32 %v938, %v929
        %v940 = vand.u32 %v917, 65535
        %v941 = vshrl.u32 %v917, 16
        %v942 = vand.u32 %v912, 65535
        %v943 = vshrl.u32 %v912, 16
        %v944 = vmul.u32 %v940, %v942
        %v945 = vmul.u32 %v940, %v943
        %v946 = vmul.u32 %v941, %v942
        %v947 = vmul.u32 %v941, %v943
        %v948 = vshll.u32 %v945, 16
        %v949 = vshrl.u32 %v945, 16
        %v950 = vshll.u32 %v946, 16
        %v951 = vshrl.u32 %v946, 16
        %vm952 = vc.u32 %v944, %v948
        %v953 = vsel %vm952, 1, 0
        %v954 = vadd.s32 %v944, %v948
        %v955 = vadd.s32 %v947, %v953
        %vm956 = vc.u32 %v954, %v950
        %v957 = vsel %vm956, 1, 0
        %v958 = vadd.s32 %v954, %v950
        %v959 = vadd.s32 %v955, %v957
        %v960 = vadd.s32 %v959, %v949
        %v961 = vadd.s32 %v960, %v951
        %v962 = vmul.u32 %v917, %v908
        %v963 = vadd.s32 %v939, %v958
        %vm964 = vc.u32 %v939, %v958
        %v965 = vadd.s32 %v961, 1
        %v966 = vsel %vm964, %v965, %v961
        %v967 = vadd.s32 %v962, %v966
        %v968 = vadd.s32 %v967, 536870912
        %v969 = vshrl.u32 %v968, 30
        %v970 = vshll.u32 %v969, 30
        %v971 = vsub.s32 %v967, %v970
        %vm972 = vcmp.lt.s32.totalorder %v971, 0
        %v973 = vsub.s32 0, %v971
        %v974 = vsel %vm972, %v973, %v971
        %v975 = vclz %v974
        %v976 = vsub.s32 %v975, 2
        %vm977 = vcmp.gt.s32.totalorder 0, %v976
        %v978 = vsel %vm977, 0, %v976
        %v979 = vsub.s32 32, %v978
        %v980 = vshll.u32 %v971, %v978
        %v981 = vshrl.u32 %v963, %v979
        %v982 = vor.u32 %v980, %v981
        %v983 = vsub.s32 4294967266, %v978
        %v984 = vadd.s32 %v983, 127
        %v985 = vshll.u32 %v984, 23
        %v986 = vor.u32 4788187, %v985
        %v987 = vand.u32 2147483647, %v986
        %v989 = vcvt.s32.f32 %v982
        %v990 = vmul.f32 %v989, %v987
        %v991 = vxor.u32 %v990, 2147483648
        %v992 = vsel %vm871, %v991, %v990
        %v993 = vsub.s32 4, %v969
        %v994 = vsel %vm871, %v993, %v969
        %v995 = vsel %vm870, %v245, %v992
        %v996 = vsel %vm870, 0, %v994
        %v997 = vmul.f32 %v995, %v995
        %v998 = vmul.f32 %v997, -0.001358992
        %v999 = vadd.f32 %v998, 0.041655596
        %v1000 = vmul.f32 %v997, %v999
        %v1001 = vadd.f32 %v1000, -0.4999988
        %v1002 = vmul.f32 %v997, %v1001
        %v1003 = vadd.f32 1.0, %v1002
        %v1004 = vmul.f32 %v995, %v995
        %v1005 = vmul.f32 %v1004, -0.00019511016
        %v1006 = vadd.f32 %v1005, 0.008332121
        %v1007 = vmul.f32 %v1004, %v1006
        %v1008 = vadd.f32 %v1007, -0.16666654
        %v1009 = vmul.f32 %v1004, %v1008
        %v1010 = vadd.f32 %v1009, 1.0
        %v1011 = vmul.f32 %v1010, %v995
        %vm1012 = vweird.f32 %v245
        %v1013 = vand.u32 %v996, 3
        %vm1014 = vcmp.lt.s32.totalorder %v1013, 2
        %vm1015 = vcmp.eq.s32.totalorder %v1013, 0
        %v1016 = vxor.u32 %v1011, 2147483648
        %v1017 = vsel %vm1015, %v1003, %v1016
        %vm1018 = vcmp.eq.s32.totalorder %v1013, 2
        %v1019 = vxor.u32 %v1003, 2147483648
        %v1020 = vsel %vm1018, %v1019, %v1011
        %v1021 = vsel %vm1014, %v1017, %v1020
        %v1022 = vsel %vm1012, nan, %v1021
        %v1023 = vand.u32 2147483647, %v246
        %vm1024 = vcmp.le.f32.partialorder %v1023, 0.7853982
        %vm1025 = vcmp.lt.s32.totalorder %v246, 0
        %v1026 = vand.u32 %v246, 2139095040
        %v1027 = vshrl.u32 %v1026, 23
        %v1028 = vsub.s32 %v1027, 127
        %v1029 = vand.u32 2147483647, %v246
        %v1030 = vand.u32 %v1029, 8388607
        %v1031 = vor.u32 %v1030, 8388608
        %v1032 = vsub.s32 0, %v1031
        %v1033 = vadd.s32 %v1028, 1
        %vm1034 = vcmp.gt.s32.totalorder %v1033, 0
        %v1035 = vsel %vm1034, %v1033, 0
        %v1036 = vshrl.u32 %v1035, 5
        %v1037 = vand.u32 %v1035, 31
        %v1038 = vsub.s32 32, %v1037
        %v1039 = vshrl.u32 683565275, %v1038
        %v1040 = vshll.u32 683565275, %v1037
        %v1041 = vshrl.u32 2475754826, %v1038
        %v1042 = vor.u32 %v1040, %v1041
        %v1043 = vshll.u32 2475754826, %v1037
        %v1044 = vshrl.u32 2131351028, %v1038
        %v1045 = vor.u32 %v1043, %v1044
        %v1046 = vshll.u32 2131351028, %v1037
        %v1047 = vshrl.u32 2102212464, %v1038
        %v1048 = vor.u32 %v1046, %v1047
        %v1049 = vshll.u32 2102212464, %v1037
        %v1050 = vshrl.u32 920167782, %v1038
        %v1051 = vor.u32 %v1049, %v1050
        %v1052 = vshll.u32 920167782, %v1037
        %v1053 = vshrl.u32 1326507024, %v1038
        %v1054 = vor.u32 %v1052, %v1053
        %vm1055 = vcmp.lt.s32.totalorder %v1036, 1
        %vm1056 = vcmp.lt.s32.totalorder %v1036, 2
        %vm1057 = vcmp.lt.s32.totalorder %v1036, 3
        %vm1058 = vcmp.lt.s32.totalorder %v1036, 4
        %v1059 = vsel %vm1055, %v1039, %v1042
        %v1060 = vsel %vm1058, %v1048, 2102212464
        %v1061 = vsel %vm1057, %v1045, %v1060
        %v1062 = vsel %vm1056, %v1059, %v1061
        %v1063 = vsel %vm1055, %v1042, %v1045
        %v1064 = vsel %vm1058, %v1051, 920167782
        %v1065 = vsel %vm1057, %v1048, %v1064
        %v1066 = vsel %vm1056, %v1063, %v1065
        %v1067 = vsel %vm1055, %v1045, %v1048
        %v1068 = vsel %vm1058, %v1054, 1326507024
        %v1069 = vsel %vm1057, %v1051, %v1068
        %v1070 = vsel %vm1056, %v1067, %v1069
        %v1071 = vshll.u32 %v1031, 8
        %v1072 = vand.u32 %v1071, 65535
        %v1073 = vshrl.u32 %v1071, 16
        %v1074 = vand.u32 %v1070, 65535
        %v1075 = vshrl.u32 %v1070, 16
        %v1076 = vmul.u32 %v1072, %v1074
        %v1077 = vmul.u32 %v1072, %v1075
        %v1078 = vmul.u32 %v1073, %v1074
        %v1079 = vmul.u32 %v1073, %v1075
        %v1080 = vshll.u32 %v1077, 16
        %v1081 = vshrl.u32 %v1077, 16
        %v1082 = vshll.u32 %v1078, 16
        %v1083 = vshrl.u32 %v1078, 16
        %vm1084 = vc.u32 %v1076, %v1080
        %v1085 = vsel %vm1084, 1, 0
        %v1086 = vadd.s32 %v1076, %v1080
        %v1087 = vadd.s32 %v1079, %v1085
        %vm1088 = vc.u32 %v1086, %v1082
        %v1089 = vsel %vm1088, 1, 0
        %v1090 = vadd.s32 %v1086, %v1082
        %v1091 = vadd.s32 %v1087, %v1089
        %v1092 = vadd.s32 %v1091, %v1081
        %v1093 = vadd.s32 %v1092, %v1083
        %v1094 = vand.u32 %v1071, 65535
        %v1095 = vshrl.u32 %v1071, 16
        %v1096 = vand.u32 %v1066, 65535
        %v1097 = vshrl.u32 %v1066, 16
        %v1098 = vmul.u32 %v1094, %v1096
        %v1099 = vmul.u32 %v1094, %v1097
        %v1100 = vmul.u32 %v1095, %v1096
        %v1101 = vmul.u32 %v1095, %v1097
        %v1102 = vshll.u32 %v1099, 16
        %v1103 = vshrl.u32 %v1099, 16
        %v1104 = vshll.u32 %v1100, 16
        %v1105 = vshrl.u32 %v1100, 16
        %vm1106 = vc.u32 %v1098, %v1102
        %v1107 = vsel %vm1106, 1, 0
        %v1108 = vadd.s32 %v1098, %v1102
        %v1109 = vadd.s32 %v1101, %v1107
        %vm1110 = vc.u32 %v1108, %v1104
        %v1111 = vsel %vm1110, 1, 0
        %v1112 = vadd.s32 %v1108, %v1104
        %v1113 = vadd.s32 %v1109, %v1111
        %v1114 = vadd.s32 %v1113, %v1103
        %v1115 = vadd.s32 %v1114, %v1105
        %v1116 = vmul.u32 %v1071, %v1062
        %v1117 = vadd.s32 %v1093, %v1112
        %vm1118 = vc.u32 %v1093, %v1112
        %v1119 = vadd.s32 %v1115, 1
        %v1120 = vsel %vm1118, %v1119, %v1115
        %v1121 = vadd.s32 %v1116, %v1120
        %v1122 = vadd.s32 %v1121, 536870912
        %v1123 = vshrl.u32 %v1122, 30
        %v1124 = vshll.u32 %v1123, 30
        %v1125 = vsub.s32 %v1121, %v1124
        %vm1126 = vcmp.lt.s32.totalorder %v1125, 0
        %v1127 = vsub.s32 0, %v1125
        %v1128 = vsel %vm1126, %v1127, %v1125
        %v1129 = vclz %v1128
        %v1130 = vsub.s32 %v1129, 2
        %vm1131 = vcmp.gt.s32.totalorder 0, %v1130
        %v1132 = vsel %vm1131, 0, %v1130
        %v1133 = vsub.s32 32, %v1132
        %v1134 = vshll.u32 %v1125, %v1132
        %v1135 = vshrl.u32 %v1117, %v1133
        %v1136 = vor.u32 %v1134, %v1135
        %v1137 = vsub.s32 4294967266, %v1132
        %v1138 = vadd.s32 %v1137, 127
        %v1139 = vshll.u32 %v1138, 23
        %v1140 = vor.u32 4788187, %v1139
        %v1141 = vand.u32 2147483647, %v1140
        %v1143 = vcvt.s32.f32 %v1136
        %v1144 = vmul.f32 %v1143, %v1141
        %v1145 = vxor.u32 %v1144, 2147483648
        %v1146 = vsel %vm1025, %v1145, %v1144
        %v1147 = vsub.s32 4, %v1123
        %v1148 = vsel %vm1025, %v1147, %v1123
        %v1149 = vsel %vm1024, %v246, %v1146
        %v1150 = vsel %vm1024, 0, %v1148
        %v1151 = vmul.f32 %v1149, %v1149
        %v1152 = vmul.f32 %v1151, -0.001358992
        %v1153 = vadd.f32 %v1152, 0.041655596
        %v1154 = vmul.f32 %v1151, %v1153
        %v1155 = vadd.f32 %v1154, -0.4999988
        %v1156 = vmul.f32 %v1151, %v1155
        %v1157 = vadd.f32 1.0, %v1156
        %v1158 = vmul.f32 %v1149, %v1149
        %v1159 = vmul.f32 %v1158, -0.00019511016
        %v1160 = vadd.f32 %v1159, 0.008332121
        %v1161 = vmul.f32 %v1158, %v1160
        %v1162 = vadd.f32 %v1161, -0.16666654
        %v1163 = vmul.f32 %v1158, %v1162
        %v1164 = vadd.f32 %v1163, 1.0
        %v1165 = vmul.f32 %v1164, %v1149
        %vm1166 = vweird.f32 %v246
        %v1167 = vand.u32 %v1150, 3
        %vm1168 = vcmp.lt.s32.totalorder %v1167, 2
        %vm1169 = vcmp.eq.s32.totalorder %v1167, 0
        %v1170 = vxor.u32 %v1165, 2147483648
        %v1171 = vsel %vm1169, %v1157, %v1170
        %vm1172 = vcmp.eq.s32.totalorder %v1167, 2
        %v1173 = vxor.u32 %v1157, 2147483648
        %v1174 = vsel %vm1172, %v1173, %v1165
        %v1175 = vsel %vm1168, %v1171, %v1174
        %v1176 = vsel %vm1166, nan, %v1175
        %v1177 = vand.u32 2147483647, %v247
        %vm1178 = vcmp.le.f32.partialorder %v1177, 0.7853982
        %vm1179 = vcmp.lt.s32.totalorder %v247, 0
        %v1180 = vand.u32 %v247, 2139095040
        %v1181 = vshrl.u32 %v1180, 23
        %v1182 = vsub.s32 %v1181, 127
        %v1183 = vand.u32 2147483647, %v247
        %v1184 = vand.u32 %v1183, 8388607
        %v1185 = vor.u32 %v1184, 8388608
        %v1186 = vsub.s32 0, %v1185
        %v1187 = vadd.s32 %v1182, 1
        %vm1188 = vcmp.gt.s32.totalorder %v1187, 0
        %v1189 = vsel %vm1188, %v1187, 0
        %v1190 = vshrl.u32 %v1189, 5
        %v1191 = vand.u32 %v1189, 31
        %v1192 = vsub.s32 32, %v1191
        %v1193 = vshrl.u32 683565275, %v1192
        %v1194 = vshll.u32 683565275, %v1191
        %v1195 = vshrl.u32 2475754826, %v1192
        %v1196 = vor.u32 %v1194, %v1195
        %v1197 = vshll.u32 2475754826, %v1191
        %v1198 = vshrl.u32 2131351028, %v1192
        %v1199 = vor.u32 %v1197, %v1198
        %v1200 = vshll.u32 2131351028, %v1191
        %v1201 = vshrl.u32 2102212464, %v1192
        %v1202 = vor.u32 %v1200, %v1201
        %v1203 = vshll.u32 2102212464, %v1191
        %v1204 = vshrl.u32 920167782, %v1192
        %v1205 = vor.u32 %v1203, %v1204
        %v1206 = vshll.u32 920167782, %v1191
        %v1207 = vshrl.u32 1326507024, %v1192
        %v1208 = vor.u32 %v1206, %v1207
        %vm1209 = vcmp.lt.s32.totalorder %v1190, 1
        %vm1210 = vcmp.lt.s32.totalorder %v1190, 2
        %vm1211 = vcmp.lt.s32.totalorder %v1190, 3
        %vm1212 = vcmp.lt.s32.totalorder %v1190, 4
        %v1213 = vsel %vm1209, %v1193, %v1196
        %v1214 = vsel %vm1212, %v1202, 2102212464
        %v1215 = vsel %vm1211, %v1199, %v1214
        %v1216 = vsel %vm1210, %v1213, %v1215
        %v1217 = vsel %vm1209, %v1196, %v1199
        %v1218 = vsel %vm1212, %v1205, 920167782
        %v1219 = vsel %vm1211, %v1202, %v1218
        %v1220 = vsel %vm1210, %v1217, %v1219
        %v1221 = vsel %vm1209, %v1199, %v1202
        %v1222 = vsel %vm1212, %v1208, 1326507024
        %v1223 = vsel %vm1211, %v1205, %v1222
        %v1224 = vsel %vm1210, %v1221, %v1223
        %v1225 = vshll.u32 %v1185, 8
        %v1226 = vand.u32 %v1225, 65535
        %v1227 = vshrl.u32 %v1225, 16
        %v1228 = vand.u32 %v1224, 65535
        %v1229 = vshrl.u32 %v1224, 16
        %v1230 = vmul.u32 %v1226, %v1228
        %v1231 = vmul.u32 %v1226, %v1229
        %v1232 = vmul.u32 %v1227, %v1228
        %v1233 = vmul.u32 %v1227, %v1229
        %v1234 = vshll.u32 %v1231, 16
        %v1235 = vshrl.u32 %v1231, 16
        %v1236 = vshll.u32 %v1232, 16
        %v1237 = vshrl.u32 %v1232, 16
        %vm1238 = vc.u32 %v1230, %v1234
        %v1239 = vsel %vm1238, 1, 0
        %v1240 = vadd.s32 %v1230, %v1234
        %v1241 = vadd.s32 %v1233, %v1239
        %vm1242 = vc.u32 %v1240, %v1236
        %v1243 = vsel %vm1242, 1, 0
        %v1244 = vadd.s32 %v1240, %v1236
        %v1245 = vadd.s32 %v1241, %v1243
        %v1246 = vadd.s32 %v1245, %v1235
        %v1247 = vadd.s32 %v1246, %v1237
        %v1248 = vand.u32 %v1225, 65535
        %v1249 = vshrl.u32 %v1225, 16
        %v1250 = vand.u32 %v1220, 65535
        %v1251 = vshrl.u32 %v1220, 16
        %v1252 = vmul.u32 %v1248, %v1250
        %v1253 = vmul.u32 %v1248, %v1251
        %v1254 = vmul.u32 %v1249, %v1250
        %v1255 = vmul.u32 %v1249, %v1251
        %v1256 = vshll.u32 %v1253, 16
        %v1257 = vshrl.u32 %v1253, 16
        %v1258 = vshll.u32 %v1254, 16
        %v1259 = vshrl.u32 %v1254, 16
        %vm1260 = vc.u32 %v1252, %v1256
        %v1261 = vsel %vm1260, 1, 0
        %v1262 = vadd.s32 %v1252, %v1256
        %v1263 = vadd.s32 %v1255, %v1261
        %vm1264 = vc.u32 %v1262, %v1258
        %v1265 = vsel %vm1264, 1, 0
        %v1266 = vadd.s32 %v1262, %v1258
        %v1267 = vadd.s32 %v1263, %v1265
        %v1268 = vadd.s32 %v1267, %v1257
        %v1269 = vadd.s32 %v1268, %v1259
        %v1270 = vmul.u32 %v1225, %v1216
        %v1271 = vadd.s32 %v1247, %v1266
        %vm1272 = vc.u32 %v1247, %v1266
        %v1273 = vadd.s32 %v1269, 1
        %v1274 = vsel %vm1272, %v1273, %v1269
        %v1275 = vadd.s32 %v1270, %v1274
        %v1276 = vadd.s32 %v1275, 536870912
        %v1277 = vshrl.u32 %v1276, 30
        %v1278 = vshll.u32 %v1277, 30
        %v1279 = vsub.s32 %v1275, %v1278
        %vm1280 = vcmp.lt.s32.totalorder %v1279, 0
        %v1281 = vsub.s32 0, %v1279
        %v1282 = vsel %vm1280, %v1281, %v1279
        %v1283 = vclz %v1282
        %v1284 = vsub.s32 %v1283, 2
        %vm1285 = vcmp.gt.s32.totalorder 0, %v1284
        %v1286 = vsel %vm1285, 0, %v1284
        %v1287 = vsub.s32 32, %v1286
        %v1288 = vshll.u32 %v1279, %v1286
        %v1289 = vshrl.u32 %v1271, %v1287
        %v1290 = vor.u32 %v1288, %v1289
        %v1291 = vsub.s32 4294967266, %v1286
        %v1292 = vadd.s32 %v1291, 127
        %v1293 = vshll.u32 %v1292, 23
        %v1294 = vor.u32 4788187, %v1293
        %v1295 = vand.u32 2147483647, %v1294
        %v1297 = vcvt.s32.f32 %v1290
        %v1298 = vmul.f32 %v1297, %v1295
        %v1299 = vxor.u32 %v1298, 2147483648
        %v1300 = vsel %vm1179, %v1299, %v1298
        %v1301 = vsub.s32 4, %v1277
        %v1302 = vsel %vm1179, %v1301, %v1277
        %v1303 = vsel %vm1178, %v247, %v1300
        %v1304 = vsel %vm1178, 0, %v1302
        %v1305 = vmul.f32 %v1303, %v1303
        %v1306 = vmul.f32 %v1305, -0.001358992
        %v1307 = vadd.f32 %v1306, 0.041655596
        %v1308 = vmul.f32 %v1305, %v1307
        %v1309 = vadd.f32 %v1308, -0.4999988
        %v1310 = vmul.f32 %v1305, %v1309
        %v1311 = vadd.f32 1.0, %v1310
        %v1312 = vmul.f32 %v1303, %v1303
        %v1313 = vmul.f32 %v1312, -0.00019511016
        %v1314 = vadd.f32 %v1313, 0.008332121
        %v1315 = vmul.f32 %v1312, %v1314
        %v1316 = vadd.f32 %v1315, -0.16666654
        %v1317 = vmul.f32 %v1312, %v1316
        %v1318 = vadd.f32 %v1317, 1.0
        %v1319 = vmul.f32 %v1318, %v1303
        %vm1320 = vweird.f32 %v247
        %v1321 = vand.u32 %v1304, 3
        %vm1322 = vcmp.lt.s32.totalorder %v1321, 2
        %vm1323 = vcmp.eq.s32.totalorder %v1321, 0
        %v1324 = vxor.u32 %v1319, 2147483648
        %v1325 = vsel %vm1323, %v1311, %v1324
        %vm1326 = vcmp.eq.s32.totalorder %v1321, 2
        %v1327 = vxor.u32 %v1311, 2147483648
        %v1328 = vsel %vm1326, %v1327, %v1319
        %v1329 = vsel %vm1322, %v1325, %v1328
        %v1330 = vsel %vm1320, nan, %v1329
        %v1331 = vand.u32 2147483647, %v248
        %vm1332 = vcmp.le.f32.partialorder %v1331, 0.7853982
        %vm1333 = vcmp.lt.s32.totalorder %v248, 0
        %v1334 = vand.u32 %v248, 2139095040
        %v1335 = vshrl.u32 %v1334, 23
        %v1336 = vsub.s32 %v1335, 127
        %v1337 = vand.u32 2147483647, %v248
        %v1338 = vand.u32 %v1337, 8388607
        %v1339 = vor.u32 %v1338, 8388608
        %v1340 = vsub.s32 0, %v1339
        %v1341 = vadd.s32 %v1336, 1
        %vm1342 = vcmp.gt.s32.totalorder %v1341, 0
        %v1343 = vsel %vm1342, %v1341, 0
        %v1344 = vshrl.u32 %v1343, 5
        %v1345 = vand.u32 %v1343, 31
        %v1346 = vsub.s32 32, %v1345
        %v1347 = vshrl.u32 683565275, %v1346
        %v1348 = vshll.u32 683565275, %v1345
        %v1349 = vshrl.u32 2475754826, %v1346
        %v1350 = vor.u32 %v1348, %v1349
        %v1351 = vshll.u32 2475754826, %v1345
        %v1352 = vshrl.u32 2131351028, %v1346
        %v1353 = vor.u32 %v1351, %v1352
        %v1354 = vshll.u32 2131351028, %v1345
        %v1355 = vshrl.u32 2102212464, %v1346
        %v1356 = vor.u32 %v1354, %v1355
        %v1357 = vshll.u32 2102212464, %v1345
        %v1358 = vshrl.u32 920167782, %v1346
        %v1359 = vor.u32 %v1357, %v1358
        %v1360 = vshll.u32 920167782, %v1345
        %v1361 = vshrl.u32 1326507024, %v1346
        %v1362 = vor.u32 %v1360, %v1361
        %vm1363 = vcmp.lt.s32.totalorder %v1344, 1
        %vm1364 = vcmp.lt.s32.totalorder %v1344, 2
        %vm1365 = vcmp.lt.s32.totalorder %v1344, 3
        %vm1366 = vcmp.lt.s32.totalorder %v1344, 4
        %v1367 = vsel %vm1363, %v1347, %v1350
        %v1368 = vsel %vm1366, %v1356, 2102212464
        %v1369 = vsel %vm1365, %v1353, %v1368
        %v1370 = vsel %vm1364, %v1367, %v1369
        %v1371 = vsel %vm1363, %v1350, %v1353
        %v1372 = vsel %vm1366, %v1359, 920167782
        %v1373 = vsel %vm1365, %v1356, %v1372
        %v1374 = vsel %vm1364, %v1371, %v1373
        %v1375 = vsel %vm1363, %v1353, %v1356
        %v1376 = vsel %vm1366, %v1362, 1326507024
        %v1377 = vsel %vm1365, %v1359, %v1376
        %v1378 = vsel %vm1364, %v1375, %v1377
        %v1379 = vshll.u32 %v1339, 8
        %v1380 = vand.u32 %v1379, 65535
        %v1381 = vshrl.u32 %v1379, 16
        %v1382 = vand.u32 %v1378, 65535
        %v1383 = vshrl.u32 %v1378, 16
        %v1384 = vmul.u32 %v1380, %v1382
        %v1385 = vmul.u32 %v1380, %v1383
        %v1386 = vmul.u32 %v1381, %v1382
        %v1387 = vmul.u32 %v1381, %v1383
        %v1388 = vshll.u32 %v1385, 16
        %v1389 = vshrl.u32 %v1385, 16
        %v1390 = vshll.u32 %v1386, 16
        %v1391 = vshrl.u32 %v1386, 16
        %vm1392 = vc.u32 %v1384, %v1388
        %v1393 = vsel %vm1392, 1, 0
        %v1394 = vadd.s32 %v1384, %v1388
        %v1395 = vadd.s32 %v1387, %v1393
        %vm1396 = vc.u32 %v1394, %v1390
        %v1397 = vsel %vm1396, 1, 0
        %v1398 = vadd.s32 %v1394, %v1390
        %v1399 = vadd.s32 %v1395, %v1397
        %v1400 = vadd.s32 %v1399, %v1389
        %v1401 = vadd.s32 %v1400, %v1391
        %v1402 = vand.u32 %v1379, 65535
        %v1403 = vshrl.u32 %v1379, 16
        %v1404 = vand.u32 %v1374, 65535
        %v1405 = vshrl.u32 %v1374, 16
        %v1406 = vmul.u32 %v1402, %v1404
        %v1407 = vmul.u32 %v1402, %v1405
        %v1408 = vmul.u32 %v1403, %v1404
        %v1409 = vmul.u32 %v1403, %v1405
        %v1410 = vshll.u32 %v1407, 16
        %v1411 = vshrl.u32 %v1407, 16
        %v1412 = vshll.u32 %v1408, 16
        %v1413 = vshrl.u32 %v1408, 16
        %vm1414 = vc.u32 %v1406, %v1410
        %v1415 = vsel %vm1414, 1, 0
        %v1416 = vadd.s32 %v1406, %v1410
        %v1417 = vadd.s32 %v1409, %v1415
        %vm1418 = vc.u32 %v1416, %v1412
        %v1419 = vsel %vm1418, 1, 0
        %v1420 = vadd.s32 %v1416, %v1412
        %v1421 = vadd.s32 %v1417, %v1419
        %v1422 = vadd.s32 %v1421, %v1411
        %v1423 = vadd.s32 %v1422, %v1413
        %v1424 = vmul.u32 %v1379, %v1370
        %v1425 = vadd.s32 %v1401, %v1420
        %vm1426 = vc.u32 %v1401, %v1420
        %v1427 = vadd.s32 %v1423, 1
        %v1428 = vsel %vm1426, %v1427, %v1423
        %v1429 = vadd.s32 %v1424, %v1428
        %v1430 = vadd.s32 %v1429, 536870912
        %v1431 = vshrl.u32 %v1430, 30
        %v1432 = vshll.u32 %v1431, 30
        %v1433 = vsub.s32 %v1429, %v1432
        %vm1434 = vcmp.lt.s32.totalorder %v1433, 0
        %v1435 = vsub.s32 0, %v1433
        %v1436 = vsel %vm1434, %v1435, %v1433
        %v1437 = vclz %v1436
        %v1438 = vsub.s32 %v1437, 2
        %vm1439 = vcmp.gt.s32.totalorder 0, %v1438
        %v1440 = vsel %vm1439, 0, %v1438
        %v1441 = vsub.s32 32, %v1440
        %v1442 = vshll.u32 %v1433, %v1440
        %v1443 = vshrl.u32 %v1425, %v1441
        %v1444 = vor.u32 %v1442, %v1443
        %v1445 = vsub.s32 4294967266, %v1440
        %v1446 = vadd.s32 %v1445, 127
        %v1447 = vshll.u32 %v1446, 23
        %v1448 = vor.u32 4788187, %v1447
        %v1449 = vand.u32 2147483647, %v1448
        %v1451 = vcvt.s32.f32 %v1444
        %v1452 = vmul.f32 %v1451, %v1449
        %v1453 = vxor.u32 %v1452, 2147483648
        %v1454 = vsel %vm1333, %v1453, %v1452
        %v1455 = vsub.s32 4, %v1431
        %v1456 = vsel %vm1333, %v1455, %v1431
        %v1457 = vsel %vm1332, %v248, %v1454
        %v1458 = vsel %vm1332, 0, %v1456
        %v1459 = vmul.f32 %v1457, %v1457
        %v1460 = vmul.f32 %v1459, -0.001358992
        %v1461 = vadd.f32 %v1460, 0.041655596
        %v1462 = vmul.f32 %v1459, %v1461
        %v1463 = vadd.f32 %v1462, -0.4999988
        %v1464 = vmul.f32 %v1459, %v1463
        %v1465 = vadd.f32 1.0, %v1464
        %v1466 = vmul.f32 %v1457, %v1457
        %v1467 = vmul.f32 %v1466, -0.00019511016
        %v1468 = vadd.f32 %v1467, 0.008332121
        %v1469 = vmul.f32 %v1466, %v1468
        %v1470 = vadd.f32 %v1469, -0.16666654
        %v1471 = vmul.f32 %v1466, %v1470
        %v1472 = vadd.f32 %v1471, 1.0
        %v1473 = vmul.f32 %v1472, %v1457
        %vm1474 = vweird.f32 %v248
        %v1475 = vand.u32 %v1458, 3
        %vm1476 = vcmp.lt.s32.totalorder %v1475, 2
        %vm1477 = vcmp.eq.s32.totalorder %v1475, 0
        %v1478 = vxor.u32 %v1473, 2147483648
        %v1479 = vsel %vm1477, %v1465, %v1478
        %vm1480 = vcmp.eq.s32.totalorder %v1475, 2
        %v1481 = vxor.u32 %v1465, 2147483648
        %v1482 = vsel %vm1480, %v1481, %v1473
        %v1483 = vsel %vm1476, %v1479, %v1482
        %v1484 = vsel %vm1474, nan, %v1483
        %v1485 = vand.u32 2147483647, %v249
        %vm1486 = vcmp.le.f32.partialorder %v1485, 0.7853982
        %vm1487 = vcmp.lt.s32.totalorder %v249, 0
        %v1488 = vand.u32 %v249, 2139095040
        %v1489 = vshrl.u32 %v1488, 23
        %v1490 = vsub.s32 %v1489, 127
        %v1491 = vand.u32 2147483647, %v249
        %v1492 = vand.u32 %v1491, 8388607
        %v1493 = vor.u32 %v1492, 8388608
        %v1494 = vsub.s32 0, %v1493
        %v1495 = vadd.s32 %v1490, 1
        %vm1496 = vcmp.gt.s32.totalorder %v1495, 0
        %v1497 = vsel %vm1496, %v1495, 0
        %v1498 = vshrl.u32 %v1497, 5
        %v1499 = vand.u32 %v1497, 31
        %v1500 = vsub.s32 32, %v1499
        %v1501 = vshrl.u32 683565275, %v1500
        %v1502 = vshll.u32 683565275, %v1499
        %v1503 = vshrl.u32 2475754826, %v1500
        %v1504 = vor.u32 %v1502, %v1503
        %v1505 = vshll.u32 2475754826, %v1499
        %v1506 = vshrl.u32 2131351028, %v1500
        %v1507 = vor.u32 %v1505, %v1506
        %v1508 = vshll.u32 2131351028, %v1499
        %v1509 = vshrl.u32 2102212464, %v1500
        %v1510 = vor.u32 %v1508, %v1509
        %v1511 = vshll.u32 2102212464, %v1499
        %v1512 = vshrl.u32 920167782, %v1500
        %v1513 = vor.u32 %v1511, %v1512
        %v1514 = vshll.u32 920167782, %v1499
        %v1515 = vshrl.u32 1326507024, %v1500
        %v1516 = vor.u32 %v1514, %v1515
        %vm1517 = vcmp.lt.s32.totalorder %v1498, 1
        %vm1518 = vcmp.lt.s32.totalorder %v1498, 2
        %vm1519 = vcmp.lt.s32.totalorder %v1498, 3
        %vm1520 = vcmp.lt.s32.totalorder %v1498, 4
        %v1521 = vsel %vm1517, %v1501, %v1504
        %v1522 = vsel %vm1520, %v1510, 2102212464
        %v1523 = vsel %vm1519, %v1507, %v1522
        %v1524 = vsel %vm1518, %v1521, %v1523
        %v1525 = vsel %vm1517, %v1504, %v1507
        %v1526 = vsel %vm1520, %v1513, 920167782
        %v1527 = vsel %vm1519, %v1510, %v1526
        %v1528 = vsel %vm1518, %v1525, %v1527
        %v1529 = vsel %vm1517, %v1507, %v1510
        %v1530 = vsel %vm1520, %v1516, 1326507024
        %v1531 = vsel %vm1519, %v1513, %v1530
        %v1532 = vsel %vm1518, %v1529, %v1531
        %v1533 = vshll.u32 %v1493, 8
        %v1534 = vand.u32 %v1533, 65535
        %v1535 = vshrl.u32 %v1533, 16
        %v1536 = vand.u32 %v1532, 65535
        %v1537 = vshrl.u32 %v1532, 16
        %v1538 = vmul.u32 %v1534, %v1536
        %v1539 = vmul.u32 %v1534, %v1537
        %v1540 = vmul.u32 %v1535, %v1536
        %v1541 = vmul.u32 %v1535, %v1537
        %v1542 = vshll.u32 %v1539, 16
        %v1543 = vshrl.u32 %v1539, 16
        %v1544 = vshll.u32 %v1540, 16
        %v1545 = vshrl.u32 %v1540, 16
        %vm1546 = vc.u32 %v1538, %v1542
        %v1547 = vsel %vm1546, 1, 0
        %v1548 = vadd.s32 %v1538, %v1542
        %v1549 = vadd.s32 %v1541, %v1547
        %vm1550 = vc.u32 %v1548, %v1544
        %v1551 = vsel %vm1550, 1, 0
        %v1552 = vadd.s32 %v1548, %v1544
        %v1553 = vadd.s32 %v1549, %v1551
        %v1554 = vadd.s32 %v1553, %v1543
        %v1555 = vadd.s32 %v1554, %v1545
        %v1556 = vand.u32 %v1533, 65535
        %v1557 = vshrl.u32 %v1533, 16
        %v1558 = vand.u32 %v1528, 65535
        %v1559 = vshrl.u32 %v1528, 16
        %v1560 = vmul.u32 %v1556, %v1558
        %v1561 = vmul.u32 %v1556, %v1559
        %v1562 = vmul.u32 %v1557, %v1558
        %v1563 = vmul.u32 %v1557, %v1559
        %v1564 = vshll.u32 %v1561, 16
        %v1565 = vshrl.u32 %v1561, 16
        %v1566 = vshll.u32 %v1562, 16
        %v1567 = vshrl.u32 %v1562, 16
        %vm1568 = vc.u32 %v1560, %v1564
        %v1569 = vsel %vm1568, 1, 0
        %v1570 = vadd.s32 %v1560, %v1564
        %v1571 = vadd.s32 %v1563, %v1569
        %vm1572 = vc.u32 %v1570, %v1566
        %v1573 = vsel %vm1572, 1, 0
        %v1574 = vadd.s32 %v1570, %v1566
        %v1575 = vadd.s32 %v1571, %v1573
        %v1576 = vadd.s32 %v1575, %v1565
        %v1577 = vadd.s32 %v1576, %v1567
        %v1578 = vmul.u32 %v1533, %v1524
        %v1579 = vadd.s32 %v1555, %v1574
        %vm1580 = vc.u32 %v1555, %v1574
        %v1581 = vadd.s32 %v1577, 1
        %v1582 = vsel %vm1580, %v1581, %v1577
        %v1583 = vadd.s32 %v1578, %v1582
        %v1584 = vadd.s32 %v1583, 536870912
        %v1585 = vshrl.u32 %v1584, 30
        %v1586 = vshll.u32 %v1585, 30
        %v1587 = vsub.s32 %v1583, %v1586
        %vm1588 = vcmp.lt.s32.totalorder %v1587, 0
        %v1589 = vsub.s32 0, %v1587
        %v1590 = vsel %vm1588, %v1589, %v1587
        %v1591 = vclz %v1590
        %v1592 = vsub.s32 %v1591, 2
        %vm1593 = vcmp.gt.s32.totalorder 0, %v1592
        %v1594 = vsel %vm1593, 0, %v1592
        %v1595 = vsub.s32 32, %v1594
        %v1596 = vshll.u32 %v1587, %v1594
        %v1597 = vshrl.u32 %v1579, %v1595
        %v1598 = vor.u32 %v1596, %v1597
        %v1599 = vsub.s32 4294967266, %v1594
        %v1600 = vadd.s32 %v1599, 127
        %v1601 = vshll.u32 %v1600, 23
        %v1602 = vor.u32 4788187, %v1601
        %v1603 = vand.u32 2147483647, %v1602
        %v1605 = vcvt.s32.f32 %v1598
        %v1606 = vmul.f32 %v1605, %v1603
        %v1607 = vxor.u32 %v1606, 2147483648
        %v1608 = vsel %vm1487, %v1607, %v1606
        %v1609 = vsub.s32 4, %v1585
        %v1610 = vsel %vm1487, %v1609, %v1585
        %v1611 = vsel %vm1486, %v249, %v1608
        %v1612 = vsel %vm1486, 0, %v1610
        %v1613 = vmul.f32 %v1611, %v1611
        %v1614 = vmul.f32 %v1613, -0.001358992
        %v1615 = vadd.f32 %v1614, 0.041655596
        %v1616 = vmul.f32 %v1613, %v1615
        %v1617 = vadd.f32 %v1616, -0.4999988
        %v1618 = vmul.f32 %v1613, %v1617
        %v1619 = vadd.f32 1.0, %v1618
        %v1620 = vmul.f32 %v1611, %v1611
        %v1621 = vmul.f32 %v1620, -0.00019511016
        %v1622 = vadd.f32 %v1621, 0.008332121
        %v1623 = vmul.f32 %v1620, %v1622
        %v1624 = vadd.f32 %v1623, -0.16666654
        %v1625 = vmul.f32 %v1620, %v1624
        %v1626 = vadd.f32 %v1625, 1.0
        %v1627 = vmul.f32 %v1626, %v1611
        %vm1628 = vweird.f32 %v249
        %v1629 = vand.u32 %v1612, 3
        %vm1630 = vcmp.lt.s32.totalorder %v1629, 2
        %vm1631 = vcmp.eq.s32.totalorder %v1629, 0
        %v1632 = vxor.u32 %v1627, 2147483648
        %v1633 = vsel %vm1631, %v1619, %v1632
        %vm1634 = vcmp.eq.s32.totalorder %v1629, 2
        %v1635 = vxor.u32 %v1619, 2147483648
        %v1636 = vsel %vm1634, %v1635, %v1627
        %v1637 = vsel %vm1630, %v1633, %v1636
        %v1638 = vsel %vm1628, nan, %v1637
        %v1639 = vand.u32 2147483647, %v250
        %vm1640 = vcmp.le.f32.partialorder %v1639, 0.7853982
        %vm1641 = vcmp.lt.s32.totalorder %v250, 0
        %v1642 = vand.u32 %v250, 2139095040
        %v1643 = vshrl.u32 %v1642, 23
        %v1644 = vsub.s32 %v1643, 127
        %v1645 = vand.u32 2147483647, %v250
        %v1646 = vand.u32 %v1645, 8388607
        %v1647 = vor.u32 %v1646, 8388608
        %v1648 = vsub.s32 0, %v1647
        %v1649 = vadd.s32 %v1644, 1
        %vm1650 = vcmp.gt.s32.totalorder %v1649, 0
        %v1651 = vsel %vm1650, %v1649, 0
        %v1652 = vshrl.u32 %v1651, 5
        %v1653 = vand.u32 %v1651, 31
        %v1654 = vsub.s32 32, %v1653
        %v1655 = vshrl.u32 683565275, %v1654
        %v1656 = vshll.u32 683565275, %v1653
        %v1657 = vshrl.u32 2475754826, %v1654
        %v1658 = vor.u32 %v1656, %v1657
        %v1659 = vshll.u32 2475754826, %v1653
        %v1660 = vshrl.u32 2131351028, %v1654
        %v1661 = vor.u32 %v1659, %v1660
        %v1662 = vshll.u32 2131351028, %v1653
        %v1663 = vshrl.u32 2102212464, %v1654
        %v1664 = vor.u32 %v1662, %v1663
        %v1665 = vshll.u32 2102212464, %v1653
        %v1666 = vshrl.u32 920167782, %v1654
        %v1667 = vor.u32 %v1665, %v1666
        %v1668 = vshll.u32 920167782, %v1653
        %v1669 = vshrl.u32 1326507024, %v1654
        %v1670 = vor.u32 %v1668, %v1669
        %vm1671 = vcmp.lt.s32.totalorder %v1652, 1
        %vm1672 = vcmp.lt.s32.totalorder %v1652, 2
        %vm1673 = vcmp.lt.s32.totalorder %v1652, 3
        %vm1674 = vcmp.lt.s32.totalorder %v1652, 4
        %v1675 = vsel %vm1671, %v1655, %v1658
        %v1676 = vsel %vm1674, %v1664, 2102212464
        %v1677 = vsel %vm1673, %v1661, %v1676
        %v1678 = vsel %vm1672, %v1675, %v1677
        %v1679 = vsel %vm1671, %v1658, %v1661
        %v1680 = vsel %vm1674, %v1667, 920167782
        %v1681 = vsel %vm1673, %v1664, %v1680
        %v1682 = vsel %vm1672, %v1679, %v1681
        %v1683 = vsel %vm1671, %v1661, %v1664
        %v1684 = vsel %vm1674, %v1670, 1326507024
        %v1685 = vsel %vm1673, %v1667, %v1684
        %v1686 = vsel %vm1672, %v1683, %v1685
        %v1687 = vshll.u32 %v1647, 8
        %v1688 = vand.u32 %v1687, 65535
        %v1689 = vshrl.u32 %v1687, 16
        %v1690 = vand.u32 %v1686, 65535
        %v1691 = vshrl.u32 %v1686, 16
        %v1692 = vmul.u32 %v1688, %v1690
        %v1693 = vmul.u32 %v1688, %v1691
        %v1694 = vmul.u32 %v1689, %v1690
        %v1695 = vmul.u32 %v1689, %v1691
        %v1696 = vshll.u32 %v1693, 16
        %v1697 = vshrl.u32 %v1693, 16
        %v1698 = vshll.u32 %v1694, 16
        %v1699 = vshrl.u32 %v1694, 16
        %vm1700 = vc.u32 %v1692, %v1696
        %v1701 = vsel %vm1700, 1, 0
        %v1702 = vadd.s32 %v1692, %v1696
        %v1703 = vadd.s32 %v1695, %v1701
        %vm1704 = vc.u32 %v1702, %v1698
        %v1705 = vsel %vm1704, 1, 0
        %v1706 = vadd.s32 %v1702, %v1698
        %v1707 = vadd.s32 %v1703, %v1705
        %v1708 = vadd.s32 %v1707, %v1697
        %v1709 = vadd.s32 %v1708, %v1699
        %v1710 = vand.u32 %v1687, 65535
        %v1711 = vshrl.u32 %v1687, 16
        %v1712 = vand.u32 %v1682, 65535
        %v1713 = vshrl.u32 %v1682, 16
        %v1714 = vmul.u32 %v1710, %v1712
        %v1715 = vmul.u32 %v1710, %v1713
        %v1716 = vmul.u32 %v1711, %v1712
        %v1717 = vmul.u32 %v1711, %v1713
        %v1718 = vshll.u32 %v1715, 16
        %v1719 = vshrl.u32 %v1715, 16
        %v1720 = vshll.u32 %v1716, 16
        %v1721 = vshrl.u32 %v1716, 16
        %vm1722 = vc.u32 %v1714, %v1718
        %v1723 = vsel %vm1722, 1, 0
        %v1724 = vadd.s32 %v1714, %v1718
        %v1725 = vadd.s32 %v1717, %v1723
        %vm1726 = vc.u32 %v1724, %v1720
        %v1727 = vsel %vm1726, 1, 0
        %v1728 = vadd.s32 %v1724, %v1720
        %v1729 = vadd.s32 %v1725, %v1727
        %v1730 = vadd.s32 %v1729, %v1719
        %v1731 = vadd.s32 %v1730, %v1721
        %v1732 = vmul.u32 %v1687, %v1678
        %v1733 = vadd.s32 %v1709, %v1728
        %vm1734 = vc.u32 %v1709, %v1728
        %v1735 = vadd.s32 %v1731, 1
        %v1736 = vsel %vm1734, %v1735, %v1731
        %v1737 = vadd.s32 %v1732, %v1736
        %v1738 = vadd.s32 %v1737, 536870912
        %v1739 = vshrl.u32 %v1738, 30
        %v1740 = vshll.u32 %v1739, 30
        %v1741 = vsub.s32 %v1737, %v1740
        %vm1742 = vcmp.lt.s32.totalorder %v1741, 0
        %v1743 = vsub.s32 0, %v1741
        %v1744 = vsel %vm1742, %v1743, %v1741
        %v1745 = vclz %v1744
        %v1746 = vsub.s32 %v1745, 2
        %vm1747 = vcmp.gt.s32.totalorder 0, %v1746
        %v1748 = vsel %vm1747, 0, %v1746
        %v1749 = vsub.s32 32, %v1748
        %v1750 = vshll.u32 %v1741, %v1748
        %v1751 = vshrl.u32 %v1733, %v1749
        %v1752 = vor.u32 %v1750, %v1751
        %v1753 = vsub.s32 4294967266, %v1748
        %v1754 = vadd.s32 %v1753, 127
        %v1755 = vshll.u32 %v1754, 23
        %v1756 = vor.u32 4788187, %v1755
        %v1757 = vand.u32 2147483647, %v1756
        %v1759 = vcvt.s32.f32 %v1752
        %v1760 = vmul.f32 %v1759, %v1757
        %v1761 = vxor.u32 %v1760, 2147483648
        %v1762 = vsel %vm1641, %v1761, %v1760
        %v1763 = vsub.s32 4, %v1739
        %v1764 = vsel %vm1641, %v1763, %v1739
        %v1765 = vsel %vm1640, %v250, %v1762
        %v1766 = vsel %vm1640, 0, %v1764
        %v1767 = vmul.f32 %v1765, %v1765
        %v1768 = vmul.f32 %v1767, -0.001358992
        %v1769 = vadd.f32 %v1768, 0.041655596
        %v1770 = vmul.f32 %v1767, %v1769
        %v1771 = vadd.f32 %v1770, -0.4999988
        %v1772 = vmul.f32 %v1767, %v1771
        %v1773 = vadd.f32 1.0, %v1772
        %v1774 = vmul.f32 %v1765, %v1765
        %v1775 = vmul.f32 %v1774, -0.00019511016
        %v1776 = vadd.f32 %v1775, 0.008332121
        %v1777 = vmul.f32 %v1774, %v1776
        %v1778 = vadd.f32 %v1777, -0.16666654
        %v1779 = vmul.f32 %v1774, %v1778
        %v1780 = vadd.f32 %v1779, 1.0
        %v1781 = vmul.f32 %v1780, %v1765
        %vm1782 = vweird.f32 %v250
        %v1783 = vand.u32 %v1766, 3
        %vm1784 = vcmp.lt.s32.totalorder %v1783, 2
        %vm1785 = vcmp.eq.s32.totalorder %v1783, 0
        %v1786 = vxor.u32 %v1781, 2147483648
        %v1787 = vsel %vm1785, %v1773, %v1786
        %vm1788 = vcmp.eq.s32.totalorder %v1783, 2
        %v1789 = vxor.u32 %v1773, 2147483648
        %v1790 = vsel %vm1788, %v1789, %v1781
        %v1791 = vsel %vm1784, %v1787, %v1790
        %v1792 = vsel %vm1782, nan, %v1791
        %v1793 = vand.u32 2147483647, %v251
        %vm1794 = vcmp.le.f32.partialorder %v1793, 0.7853982
        %vm1795 = vcmp.lt.s32.totalorder %v251, 0
        %v1796 = vand.u32 %v251, 2139095040
        %v1797 = vshrl.u32 %v1796, 23
        %v1798 = vsub.s32 %v1797, 127
        %v1799 = vand.u32 2147483647, %v251
        %v1800 = vand.u32 %v1799, 8388607
        %v1801 = vor.u32 %v1800, 8388608
        %v1802 = vsub.s32 0, %v1801
        %v1803 = vadd.s32 %v1798, 1
        %vm1804 = vcmp.gt.s32.totalorder %v1803, 0
        %v1805 = vsel %vm1804, %v1803, 0
        %v1806 = vshrl.u32 %v1805, 5
        %v1807 = vand.u32 %v1805, 31
        %v1808 = vsub.s32 32, %v1807
        %v1809 = vshrl.u32 683565275, %v1808
        %v1810 = vshll.u32 683565275, %v1807
        %v1811 = vshrl.u32 2475754826, %v1808
        %v1812 = vor.u32 %v1810, %v1811
        %v1813 = vshll.u32 2475754826, %v1807
        %v1814 = vshrl.u32 2131351028, %v1808
        %v1815 = vor.u32 %v1813, %v1814
        %v1816 = vshll.u32 2131351028, %v1807
        %v1817 = vshrl.u32 2102212464, %v1808
        %v1818 = vor.u32 %v1816, %v1817
        %v1819 = vshll.u32 2102212464, %v1807
        %v1820 = vshrl.u32 920167782, %v1808
        %v1821 = vor.u32 %v1819, %v1820
        %v1822 = vshll.u32 920167782, %v1807
        %v1823 = vshrl.u32 1326507024, %v1808
        %v1824 = vor.u32 %v1822, %v1823
        %vm1825 = vcmp.lt.s32.totalorder %v1806, 1
        %vm1826 = vcmp.lt.s32.totalorder %v1806, 2
        %vm1827 = vcmp.lt.s32.totalorder %v1806, 3
        %vm1828 = vcmp.lt.s32.totalorder %v1806, 4
        %v1829 = vsel %vm1825, %v1809, %v1812
        %v1830 = vsel %vm1828, %v1818, 2102212464
        %v1831 = vsel %vm1827, %v1815, %v1830
        %v1832 = vsel %vm1826, %v1829, %v1831
        %v1833 = vsel %vm1825, %v1812, %v1815
        %v1834 = vsel %vm1828, %v1821, 920167782
        %v1835 = vsel %vm1827, %v1818, %v1834
        %v1836 = vsel %vm1826, %v1833, %v1835
        %v1837 = vsel %vm1825, %v1815, %v1818
        %v1838 = vsel %vm1828, %v1824, 1326507024
        %v1839 = vsel %vm1827, %v1821, %v1838
        %v1840 = vsel %vm1826, %v1837, %v1839
        %v1841 = vshll.u32 %v1801, 8
        %v1842 = vand.u32 %v1841, 65535
        %v1843 = vshrl.u32 %v1841, 16
        %v1844 = vand.u32 %v1840, 65535
        %v1845 = vshrl.u32 %v1840, 16
        %v1846 = vmul.u32 %v1842, %v1844
        %v1847 = vmul.u32 %v1842, %v1845
        %v1848 = vmul.u32 %v1843, %v1844
        %v1849 = vmul.u32 %v1843, %v1845
        %v1850 = vshll.u32 %v1847, 16
        %v1851 = vshrl.u32 %v1847, 16
        %v1852 = vshll.u32 %v1848, 16
        %v1853 = vshrl.u32 %v1848, 16
        %vm1854 = vc.u32 %v1846, %v1850
        %v1855 = vsel %vm1854, 1, 0
        %v1856 = vadd.s32 %v1846, %v1850
        %v1857 = vadd.s32 %v1849, %v1855
        %vm1858 = vc.u32 %v1856, %v1852
        %v1859 = vsel %vm1858, 1, 0
        %v1860 = vadd.s32 %v1856, %v1852
        %v1861 = vadd.s32 %v1857, %v1859
        %v1862 = vadd.s32 %v1861, %v1851
        %v1863 = vadd.s32 %v1862, %v1853
        %v1864 = vand.u32 %v1841, 65535
        %v1865 = vshrl.u32 %v1841, 16
        %v1866 = vand.u32 %v1836, 65535
        %v1867 = vshrl.u32 %v1836, 16
        %v1868 = vmul.u32 %v1864, %v1866
        %v1869 = vmul.u32 %v1864, %v1867
        %v1870 = vmul.u32 %v1865, %v1866
        %v1871 = vmul.u32 %v1865, %v1867
        %v1872 = vshll.u32 %v1869, 16
        %v1873 = vshrl.u32 %v1869, 16
        %v1874 = vshll.u32 %v1870, 16
        %v1875 = vshrl.u32 %v1870, 16
        %vm1876 = vc.u32 %v1868, %v1872
        %v1877 = vsel %vm1876, 1, 0
        %v1878 = vadd.s32 %v1868, %v1872
        %v1879 = vadd.s32 %v1871, %v1877
        %vm1880 = vc.u32 %v1878, %v1874
        %v1881 = vsel %vm1880, 1, 0
        %v1882 = vadd.s32 %v1878, %v1874
        %v1883 = vadd.s32 %v1879, %v1881
        %v1884 = vadd.s32 %v1883, %v1873
        %v1885 = vadd.s32 %v1884, %v1875
        %v1886 = vmul.u32 %v1841, %v1832
        %v1887 = vadd.s32 %v1863, %v1882
        %vm1888 = vc.u32 %v1863, %v1882
        %v1889 = vadd.s32 %v1885, 1
        %v1890 = vsel %vm1888, %v1889, %v1885
        %v1891 = vadd.s32 %v1886, %v1890
        %v1892 = vadd.s32 %v1891, 536870912
        %v1893 = vshrl.u32 %v1892, 30
        %v1894 = vshll.u32 %v1893, 30
        %v1895 = vsub.s32 %v1891, %v1894
        %vm1896 = vcmp.lt.s32.totalorder %v1895, 0
        %v1897 = vsub.s32 0, %v1895
        %v1898 = vsel %vm1896, %v1897, %v1895
        %v1899 = vclz %v1898
        %v1900 = vsub.s32 %v1899, 2
        %vm1901 = vcmp.gt.s32.totalorder 0, %v1900
        %v1902 = vsel %vm1901, 0, %v1900
        %v1903 = vsub.s32 32, %v1902
        %v1904 = vshll.u32 %v1895, %v1902
        %v1905 = vshrl.u32 %v1887, %v1903
        %v1906 = vor.u32 %v1904, %v1905
        %v1907 = vsub.s32 4294967266, %v1902
        %v1908 = vadd.s32 %v1907, 127
        %v1909 = vshll.u32 %v1908, 23
        %v1910 = vor.u32 4788187, %v1909
        %v1911 = vand.u32 2147483647, %v1910
        %v1913 = vcvt.s32.f32 %v1906
        %v1914 = vmul.f32 %v1913, %v1911
        %v1915 = vxor.u32 %v1914, 2147483648
        %v1916 = vsel %vm1795, %v1915, %v1914
        %v1917 = vsub.s32 4, %v1893
        %v1918 = vsel %vm1795, %v1917, %v1893
        %v1919 = vsel %vm1794, %v251, %v1916
        %v1920 = vsel %vm1794, 0, %v1918
        %v1921 = vmul.f32 %v1919, %v1919
        %v1922 = vmul.f32 %v1921, -0.001358992
        %v1923 = vadd.f32 %v1922, 0.041655596
        %v1924 = vmul.f32 %v1921, %v1923
        %v1925 = vadd.f32 %v1924, -0.4999988
        %v1926 = vmul.f32 %v1921, %v1925
        %v1927 = vadd.f32 1.0, %v1926
        %v1928 = vmul.f32 %v1919, %v1919
        %v1929 = vmul.f32 %v1928, -0.00019511016
        %v1930 = vadd.f32 %v1929, 0.008332121
        %v1931 = vmul.f32 %v1928, %v1930
        %v1932 = vadd.f32 %v1931, -0.16666654
        %v1933 = vmul.f32 %v1928, %v1932
        %v1934 = vadd.f32 %v1933, 1.0
        %v1935 = vmul.f32 %v1934, %v1919
        %vm1936 = vweird.f32 %v251
        %v1937 = vand.u32 %v1920, 3
        %vm1938 = vcmp.lt.s32.totalorder %v1937, 2
        %vm1939 = vcmp.eq.s32.totalorder %v1937, 0
        %v1940 = vxor.u32 %v1935, 2147483648
        %v1941 = vsel %vm1939, %v1927, %v1940
        %vm1942 = vcmp.eq.s32.totalorder %v1937, 2
        %v1943 = vxor.u32 %v1927, 2147483648
        %v1944 = vsel %vm1942, %v1943, %v1935
        %v1945 = vsel %vm1938, %v1941, %v1944
        %v1946 = vsel %vm1936, nan, %v1945
        %v1947 = vand.u32 2147483647, %v252
        %vm1948 = vcmp.le.f32.partialorder %v1947, 0.7853982
        %vm1949 = vcmp.lt.s32.totalorder %v252, 0
        %v1950 = vand.u32 %v252, 2139095040
        %v1951 = vshrl.u32 %v1950, 23
        %v1952 = vsub.s32 %v1951, 127
        %v1953 = vand.u32 2147483647, %v252
        %v1954 = vand.u32 %v1953, 8388607
        %v1955 = vor.u32 %v1954, 8388608
        %v1956 = vsub.s32 0, %v1955
        %v1957 = vadd.s32 %v1952, 1
        %vm1958 = vcmp.gt.s32.totalorder %v1957, 0
        %v1959 = vsel %vm1958, %v1957, 0
        %v1960 = vshrl.u32 %v1959, 5
        %v1961 = vand.u32 %v1959, 31
        %v1962 = vsub.s32 32, %v1961
        %v1963 = vshrl.u32 683565275, %v1962
        %v1964 = vshll.u32 683565275, %v1961
        %v1965 = vshrl.u32 2475754826, %v1962
        %v1966 = vor.u32 %v1964, %v1965
        %v1967 = vshll.u32 2475754826, %v1961
        %v1968 = vshrl.u32 2131351028, %v1962
        %v1969 = vor.u32 %v1967, %v1968
        %v1970 = vshll.u32 2131351028, %v1961
        %v1971 = vshrl.u32 2102212464, %v1962
        %v1972 = vor.u32 %v1970, %v1971
        %v1973 = vshll.u32 2102212464, %v1961
        %v1974 = vshrl.u32 920167782, %v1962
        %v1975 = vor.u32 %v1973, %v1974
        %v1976 = vshll.u32 920167782, %v1961
        %v1977 = vshrl.u32 1326507024, %v1962
        %v1978 = vor.u32 %v1976, %v1977
        %vm1979 = vcmp.lt.s32.totalorder %v1960, 1
        %vm1980 = vcmp.lt.s32.totalorder %v1960, 2
        %vm1981 = vcmp.lt.s32.totalorder %v1960, 3
        %vm1982 = vcmp.lt.s32.totalorder %v1960, 4
        %v1983 = vsel %vm1979, %v1963, %v1966
        %v1984 = vsel %vm1982, %v1972, 2102212464
        %v1985 = vsel %vm1981, %v1969, %v1984
        %v1986 = vsel %vm1980, %v1983, %v1985
        %v1987 = vsel %vm1979, %v1966, %v1969
        %v1988 = vsel %vm1982, %v1975, 920167782
        %v1989 = vsel %vm1981, %v1972, %v1988
        %v1990 = vsel %vm1980, %v1987, %v1989
        %v1991 = vsel %vm1979, %v1969, %v1972
        %v1992 = vsel %vm1982, %v1978, 1326507024
        %v1993 = vsel %vm1981, %v1975, %v1992
        %v1994 = vsel %vm1980, %v1991, %v1993
        %v1995 = vshll.u32 %v1955, 8
        %v1996 = vand.u32 %v1995, 65535
        %v1997 = vshrl.u32 %v1995, 16
        %v1998 = vand.u32 %v1994, 65535
        %v1999 = vshrl.u32 %v1994, 16
        %v2000 = vmul.u32 %v1996, %v1998
        %v2001 = vmul.u32 %v1996, %v1999
        %v2002 = vmul.u32 %v1997, %v1998
        %v2003 = vmul.u32 %v1997, %v1999
        %v2004 = vshll.u32 %v2001, 16
        %v2005 = vshrl.u32 %v2001, 16
        %v2006 = vshll.u32 %v2002, 16
        %v2007 = vshrl.u32 %v2002, 16
        %vm2008 = vc.u32 %v2000, %v2004
        %v2009 = vsel %vm2008, 1, 0
        %v2010 = vadd.s32 %v2000, %v2004
        %v2011 = vadd.s32 %v2003, %v2009
        %vm2012 = vc.u32 %v2010, %v2006
        %v2013 = vsel %vm2012, 1, 0
        %v2014 = vadd.s32 %v2010, %v2006
        %v2015 = vadd.s32 %v2011, %v2013
        %v2016 = vadd.s32 %v2015, %v2005
        %v2017 = vadd.s32 %v2016, %v2007
        %v2018 = vand.u32 %v1995, 65535
        %v2019 = vshrl.u32 %v1995, 16
        %v2020 = vand.u32 %v1990, 65535
        %v2021 = vshrl.u32 %v1990, 16
        %v2022 = vmul.u32 %v2018, %v2020
        %v2023 = vmul.u32 %v2018, %v2021
        %v2024 = vmul.u32 %v2019, %v2020
        %v2025 = vmul.u32 %v2019, %v2021
        %v2026 = vshll.u32 %v2023, 16
        %v2027 = vshrl.u32 %v2023, 16
        %v2028 = vshll.u32 %v2024, 16
        %v2029 = vshrl.u32 %v2024, 16
        %vm2030 = vc.u32 %v2022, %v2026
        %v2031 = vsel %vm2030, 1, 0
        %v2032 = vadd.s32 %v2022, %v2026
        %v2033 = vadd.s32 %v2025, %v2031
        %vm2034 = vc.u32 %v2032, %v2028
        %v2035 = vsel %vm2034, 1, 0
        %v2036 = vadd.s32 %v2032, %v2028
        %v2037 = vadd.s32 %v2033, %v2035
        %v2038 = vadd.s32 %v2037, %v2027
        %v2039 = vadd.s32 %v2038, %v2029
        %v2040 = vmul.u32 %v1995, %v1986
        %v2041 = vadd.s32 %v2017, %v2036
        %vm2042 = vc.u32 %v2017, %v2036
        %v2043 = vadd.s32 %v2039, 1
        %v2044 = vsel %vm2042, %v2043, %v2039
        %v2045 = vadd.s32 %v2040, %v2044
        %v2046 = vadd.s32 %v2045, 536870912
        %v2047 = vshrl.u32 %v2046, 30
        %v2048 = vshll.u32 %v2047, 30
        %v2049 = vsub.s32 %v2045, %v2048
        %vm2050 = vcmp.lt.s32.totalorder %v2049, 0
        %v2051 = vsub.s32 0, %v2049
        %v2052 = vsel %vm2050, %v2051, %v2049
        %v2053 = vclz %v2052
        %v2054 = vsub.s32 %v2053, 2
        %vm2055 = vcmp.gt.s32.totalorder 0, %v2054
        %v2056 = vsel %vm2055, 0, %v2054
        %v2057 = vsub.s32 32, %v2056
        %v2058 = vshll.u32 %v2049, %v2056
        %v2059 = vshrl.u32 %v2041, %v2057
        %v2060 = vor.u32 %v2058, %v2059
        %v2061 = vsub.s32 4294967266, %v2056
        %v2062 = vadd.s32 %v2061, 127
        %v2063 = vshll.u32 %v2062, 23
        %v2064 = vor.u32 4788187, %v2063
        %v2065 = vand.u32 2147483647, %v2064
        %v2067 = vcvt.s32.f32 %v2060
        %v2068 = vmul.f32 %v2067, %v2065
        %v2069 = vxor.u32 %v2068, 2147483648
        %v2070 = vsel %vm1949, %v2069, %v2068
        %v2071 = vsub.s32 4, %v2047
        %v2072 = vsel %vm1949, %v2071, %v2047
        %v2073 = vsel %vm1948, %v252, %v2070
        %v2074 = vsel %vm1948, 0, %v2072
        %v2075 = vmul.f32 %v2073, %v2073
        %v2076 = vmul.f32 %v2075, -0.001358992
        %v2077 = vadd.f32 %v2076, 0.041655596
        %v2078 = vmul.f32 %v2075, %v2077
        %v2079 = vadd.f32 %v2078, -0.4999988
        %v2080 = vmul.f32 %v2075, %v2079
        %v2081 = vadd.f32 1.0, %v2080
        %v2082 = vmul.f32 %v2073, %v2073
        %v2083 = vmul.f32 %v2082, -0.00019511016
        %v2084 = vadd.f32 %v2083, 0.008332121
        %v2085 = vmul.f32 %v2082, %v2084
        %v2086 = vadd.f32 %v2085, -0.16666654
        %v2087 = vmul.f32 %v2082, %v2086
        %v2088 = vadd.f32 %v2087, 1.0
        %v2089 = vmul.f32 %v2088, %v2073
        %vm2090 = vweird.f32 %v252
        %v2091 = vand.u32 %v2074, 3
        %vm2092 = vcmp.lt.s32.totalorder %v2091, 2
        %vm2093 = vcmp.eq.s32.totalorder %v2091, 0
        %v2094 = vxor.u32 %v2089, 2147483648
        %v2095 = vsel %vm2093, %v2081, %v2094
        %vm2096 = vcmp.eq.s32.totalorder %v2091, 2
        %v2097 = vxor.u32 %v2081, 2147483648
        %v2098 = vsel %vm2096, %v2097, %v2089
        %v2099 = vsel %vm2092, %v2095, %v2098
        %v2100 = vsel %vm2090, nan, %v2099
        %v2113 = vrot.slane %v406, 1
        %v2114 = vrot.slane %v406, 2
        %v2115 = vrot.slane %v406, 3
        %v2116 = vrot.slane %v406, 4
        %v2117 = vrot.slane %v406, 5
        %v2118 = vrot.slane %v406, 6
        %v2119 = vrot.slane %v406, 7
        %v2120 = vrot.slane %v560, 1
        %v2121 = vrot.slane %v560, 2
        %v2122 = vrot.slane %v560, 3
        %v2123 = vrot.slane %v560, 4
        %v2124 = vrot.slane %v560, 5
        %v2125 = vrot.slane %v560, 6
        %v2126 = vrot.slane %v560, 7
        %v2127 = vrot.slane %v714, 1
        %v2128 = vrot.slane %v714, 2
        %v2129 = vrot.slane %v714, 3
        %v2130 = vrot.slane %v714, 4
        %v2131 = vrot.slane %v714, 5
        %v2132 = vrot.slane %v714, 6
        %v2133 = vrot.slane %v714, 7
        %v2134 = vrot.slane %v868, 1
        %v2135 = vrot.slane %v868, 2
        %v2136 = vrot.slane %v868, 3
        %v2137 = vrot.slane %v868, 4
        %v2138 = vrot.slane %v868, 5
        %v2139 = vrot.slane %v868, 6
        %v2140 = vrot.slane %v868, 7
        %v2141 = vrot.slane %v1022, 1
        %v2142 = vrot.slane %v1022, 2
        %v2143 = vrot.slane %v1022, 3
        %v2144 = vrot.slane %v1022, 4
        %v2145 = vrot.slane %v1022, 5
        %v2146 = vrot.slane %v1022, 6
        %v2147 = vrot.slane %v1022, 7
        %v2148 = vrot.slane %v1176, 1
        %v2149 = vrot.slane %v1176, 2
        %v2150 = vrot.slane %v1176, 3
        %v2151 = vrot.slane %v1176, 4
        %v2152 = vrot.slane %v1176, 5
        %v2153 = vrot.slane %v1176, 6
        %v2154 = vrot.slane %v1176, 7
        %v2155 = vrot.slane %v1330, 1
        %v2156 = vrot.slane %v1330, 2
        %v2157 = vrot.slane %v1330, 3
        %v2158 = vrot.slane %v1330, 4
        %v2159 = vrot.slane %v1330, 5
        %v2160 = vrot.slane %v1330, 6
        %v2161 = vrot.slane %v1330, 7
        %v2162 = vrot.slane %v1484, 1
        %v2163 = vrot.slane %v1484, 2
        %v2164 = vrot.slane %v1484, 3
        %v2165 = vrot.slane %v1484, 4
        %v2166 = vrot.slane %v1484, 5
        %v2167 = vrot.slane %v1484, 6
        %v2168 = vrot.slane %v1484, 7
        %v2169 = vrot.slane %v1638, 1
        %v2170 = vrot.slane %v1638, 2
        %v2171 = vrot.slane %v1638, 3
        %v2172 = vrot.slane %v1638, 4
        %v2173 = vrot.slane %v1638, 5
        %v2174 = vrot.slane %v1638, 6
        %v2175 = vrot.slane %v1638, 7
        %v2176 = vrot.slane %v1792, 1
        %v2177 = vrot.slane %v1792, 2
        %v2178 = vrot.slane %v1792, 3
        %v2179 = vrot.slane %v1792, 4
        %v2180 = vrot.slane %v1792, 5
        %v2181 = vrot.slane %v1792, 6
        %v2182 = vrot.slane %v1792, 7
        %v2183 = vrot.slane %v1946, 1
        %v2184 = vrot.slane %v1946, 2
        %v2185 = vrot.slane %v1946, 3
        %v2186 = vrot.slane %v1946, 4
        %v2187 = vrot.slane %v1946, 5
        %v2188 = vrot.slane %v1946, 6
        %v2189 = vrot.slane %v1946, 7
        %v2190 = vrot.slane %v2100, 1
        %v2191 = vrot.slane %v2100, 2
        %v2192 = vrot.slane %v2100, 3
        %v2193 = vrot.slane %v2100, 4
        %v2194 = vrot.slane %v2100, 5
        %v2195 = vrot.slane %v2100, 6
        %v2196 = vrot.slane %v2100, 7
        %vm2281 = vcmask 122880
        %2282 = vst.msk [vmem:[%s145] sm:$0x1] %vm2281, %v406
        %2283 = vst.msk [vmem:[%s145 + $0x2] sm:$0x1] %vm2281, %v2113
        %2284 = vst.msk [vmem:[%s145 + $0x4] sm:$0x1] %vm2281, %v2114
        %2285 = vst.msk [vmem:[%s145 + $0x6] sm:$0x1] %vm2281, %v2115
        %2286 = vst.msk [vmem:[%s145 + $0x8] sm:$0x1] %vm2281, %v2116
        %2287 = vst.msk [vmem:[%s145 + $0xa] sm:$0x1] %vm2281, %v2117
        %2288 = vst.msk [vmem:[%s145 + $0xc] sm:$0x1] %vm2281, %v2118
        %2289 = vst.msk [vmem:[%s145 + $0xe] sm:$0x1] %vm2281, %v2119
        %2290 = vst.msk [vmem:[%s145 + $0x10] sm:$0x1] %vm2281, %v560
        %2291 = vst.msk [vmem:[%s145 + $0x12] sm:$0x1] %vm2281, %v2120
        %2292 = vst.msk [vmem:[%s145 + $0x14] sm:$0x1] %vm2281, %v2121
        %2293 = vst.msk [vmem:[%s145 + $0x16] sm:$0x1] %vm2281, %v2122
        %2294 = vst.msk [vmem:[%s145 + $0x18] sm:$0x1] %vm2281, %v2123
        %2295 = vst.msk [vmem:[%s145 + $0x1a] sm:$0x1] %vm2281, %v2124
        %2296 = vst.msk [vmem:[%s145 + $0x1c] sm:$0x1] %vm2281, %v2125
        %2297 = vst.msk [vmem:[%s145 + $0x1e] sm:$0x1] %vm2281, %v2126
        %2298 = vst.msk [vmem:[%s145 + $0x20] sm:$0x1] %vm2281, %v714
        %2299 = vst.msk [vmem:[%s145 + $0x22] sm:$0x1] %vm2281, %v2127
        %2300 = vst.msk [vmem:[%s145 + $0x24] sm:$0x1] %vm2281, %v2128
        %2301 = vst.msk [vmem:[%s145 + $0x26] sm:$0x1] %vm2281, %v2129
        %2302 = vst.msk [vmem:[%s145 + $0x28] sm:$0x1] %vm2281, %v2130
        %2303 = vst.msk [vmem:[%s145 + $0x2a] sm:$0x1] %vm2281, %v2131
        %2304 = vst.msk [vmem:[%s145 + $0x2c] sm:$0x1] %vm2281, %v2132
        %2305 = vst.msk [vmem:[%s145 + $0x2e] sm:$0x1] %vm2281, %v2133
        %2306 = vst.msk [vmem:[%s145 + $0x30] sm:$0x1] %vm2281, %v868
        %2307 = vst.msk [vmem:[%s145 + $0x32] sm:$0x1] %vm2281, %v2134
        %2308 = vst.msk [vmem:[%s145 + $0x34] sm:$0x1] %vm2281, %v2135
        %2309 = vst.msk [vmem:[%s145 + $0x36] sm:$0x1] %vm2281, %v2136
        %2310 = vst.msk [vmem:[%s145 + $0x38] sm:$0x1] %vm2281, %v2137
        %2311 = vst.msk [vmem:[%s145 + $0x3a] sm:$0x1] %vm2281, %v2138
        %2312 = vst.msk [vmem:[%s145 + $0x3c] sm:$0x1] %vm2281, %v2139
        %2313 = vst.msk [vmem:[%s145 + $0x3e] sm:$0x1] %vm2281, %v2140
        %2314 = vst.msk [vmem:[%s145 + $0x40] sm:$0x1] %vm2281, %v1022
        %2315 = vst.msk [vmem:[%s145 + $0x42] sm:$0x1] %vm2281, %v2141
        %2316 = vst.msk [vmem:[%s145 + $0x44] sm:$0x1] %vm2281, %v2142
        %2317 = vst.msk [vmem:[%s145 + $0x46] sm:$0x1] %vm2281, %v2143
        %2318 = vst.msk [vmem:[%s145 + $0x48] sm:$0x1] %vm2281, %v2144
        %2319 = vst.msk [vmem:[%s145 + $0x4a] sm:$0x1] %vm2281, %v2145
        %2320 = vst.msk [vmem:[%s145 + $0x4c] sm:$0x1] %vm2281, %v2146
        %2321 = vst.msk [vmem:[%s145 + $0x4e] sm:$0x1] %vm2281, %v2147
        %2322 = vst.msk [vmem:[%s145 + $0x50] sm:$0x1] %vm2281, %v1176
        %2323 = vst.msk [vmem:[%s145 + $0x52] sm:$0x1] %vm2281, %v2148
        %2324 = vst.msk [vmem:[%s145 + $0x54] sm:$0x1] %vm2281, %v2149
        %2325 = vst.msk [vmem:[%s145 + $0x56] sm:$0x1] %vm2281, %v2150
        %2326 = vst.msk [vmem:[%s145 + $0x58] sm:$0x1] %vm2281, %v2151
        %2327 = vst.msk [vmem:[%s145 + $0x5a] sm:$0x1] %vm2281, %v2152
        %2328 = vst.msk [vmem:[%s145 + $0x5c] sm:$0x1] %vm2281, %v2153
        %2329 = vst.msk [vmem:[%s145 + $0x5e] sm:$0x1] %vm2281, %v2154
        %2330 = vst.msk [vmem:[%s145 + $0x60] sm:$0x1] %vm2281, %v1330
        %2331 = vst.msk [vmem:[%s145 + $0x62] sm:$0x1] %vm2281, %v2155
        %2332 = vst.msk [vmem:[%s145 + $0x64] sm:$0x1] %vm2281, %v2156
        %2333 = vst.msk [vmem:[%s145 + $0x66] sm:$0x1] %vm2281, %v2157
        %2334 = vst.msk [vmem:[%s145 + $0x68] sm:$0x1] %vm2281, %v2158
        %2335 = vst.msk [vmem:[%s145 + $0x6a] sm:$0x1] %vm2281, %v2159
        %2336 = vst.msk [vmem:[%s145 + $0x6c] sm:$0x1] %vm2281, %v2160
        %2337 = vst.msk [vmem:[%s145 + $0x6e] sm:$0x1] %vm2281, %v2161
        %2338 = vst.msk [vmem:[%s145 + $0x70] sm:$0x1] %vm2281, %v1484
        %2339 = vst.msk [vmem:[%s145 + $0x72] sm:$0x1] %vm2281, %v2162
        %2340 = vst.msk [vmem:[%s145 + $0x74] sm:$0x1] %vm2281, %v2163
        %2341 = vst.msk [vmem:[%s145 + $0x76] sm:$0x1] %vm2281, %v2164
        %2342 = vst.msk [vmem:[%s145 + $0x78] sm:$0x1] %vm2281, %v2165
        %2343 = vst.msk [vmem:[%s145 + $0x7a] sm:$0x1] %vm2281, %v2166
        %2344 = vst.msk [vmem:[%s145 + $0x7c] sm:$0x1] %vm2281, %v2167
        %2345 = vst.msk [vmem:[%s145 + $0x7e] sm:$0x1] %vm2281, %v2168
        %2346 = vst.msk [vmem:[%s145 + $0x80] sm:$0x1] %vm2281, %v1638
        %2347 = vst.msk [vmem:[%s145 + $0x82] sm:$0x1] %vm2281, %v2169
        %2348 = vst.msk [vmem:[%s145 + $0x84] sm:$0x1] %vm2281, %v2170
        %2349 = vst.msk [vmem:[%s145 + $0x86] sm:$0x1] %vm2281, %v2171
        %2350 = vst.msk [vmem:[%s145 + $0x88] sm:$0x1] %vm2281, %v2172
        %2351 = vst.msk [vmem:[%s145 + $0x8a] sm:$0x1] %vm2281, %v2173
        %2352 = vst.msk [vmem:[%s145 + $0x8c] sm:$0x1] %vm2281, %v2174
        %2353 = vst.msk [vmem:[%s145 + $0x8e] sm:$0x1] %vm2281, %v2175
        %2354 = vst.msk [vmem:[%s145 + $0x90] sm:$0x1] %vm2281, %v1792
        %2355 = vst.msk [vmem:[%s145 + $0x92] sm:$0x1] %vm2281, %v2176
        %2356 = vst.msk [vmem:[%s145 + $0x94] sm:$0x1] %vm2281, %v2177
        %2357 = vst.msk [vmem:[%s145 + $0x96] sm:$0x1] %vm2281, %v2178
        %2358 = vst.msk [vmem:[%s145 + $0x98] sm:$0x1] %vm2281, %v2179
        %2359 = vst.msk [vmem:[%s145 + $0x9a] sm:$0x1] %vm2281, %v2180
        %2360 = vst.msk [vmem:[%s145 + $0x9c] sm:$0x1] %vm2281, %v2181
        %2361 = vst.msk [vmem:[%s145 + $0x9e] sm:$0x1] %vm2281, %v2182
        %2362 = vst.msk [vmem:[%s145 + $0xa0] sm:$0x1] %vm2281, %v1946
        %2363 = vst.msk [vmem:[%s145 + $0xa2] sm:$0x1] %vm2281, %v2183
        %2364 = vst.msk [vmem:[%s145 + $0xa4] sm:$0x1] %vm2281, %v2184
        %2365 = vst.msk [vmem:[%s145 + $0xa6] sm:$0x1] %vm2281, %v2185
        %2366 = vst.msk [vmem:[%s145 + $0xa8] sm:$0x1] %vm2281, %v2186
        %2367 = vst.msk [vmem:[%s145 + $0xaa] sm:$0x1] %vm2281, %v2187
        %2368 = vst.msk [vmem:[%s145 + $0xac] sm:$0x1] %vm2281, %v2188
        %2369 = vst.msk [vmem:[%s145 + $0xae] sm:$0x1] %vm2281, %v2189
        %2370 = vst.msk [vmem:[%s145 + $0xb0] sm:$0x1] %vm2281, %v2100
        %2371 = vst.msk [vmem:[%s145 + $0xb2] sm:$0x1] %vm2281, %v2190
        %2372 = vst.msk [vmem:[%s145 + $0xb4] sm:$0x1] %vm2281, %v2191
        %2373 = vst.msk [vmem:[%s145 + $0xb6] sm:$0x1] %vm2281, %v2192
        %2374 = vst.msk [vmem:[%s145 + $0xb8] sm:$0x1] %vm2281, %v2193
        %2375 = vst.msk [vmem:[%s145 + $0xba] sm:$0x1] %vm2281, %v2194
        %2376 = vst.msk [vmem:[%s145 + $0xbc] sm:$0x1] %vm2281, %v2195
        %2377 = vst.msk [vmem:[%s145 + $0xbe] sm:$0x1] %vm2281, %v2196
        %v2378 = vand.u32 2147483647, %v241
        %vm2379 = vcmp.le.f32.partialorder %v2378, 0.7853982
        %vm2380 = vcmp.lt.s32.totalorder %v241, 0
        %v2381 = vand.u32 %v241, 2139095040
        %v2382 = vshrl.u32 %v2381, 23
        %v2383 = vsub.s32 %v2382, 127
        %v2384 = vand.u32 2147483647, %v241
        %v2385 = vand.u32 %v2384, 8388607
        %v2386 = vor.u32 %v2385, 8388608
        %v2387 = vsub.s32 0, %v2386
        %v2388 = vadd.s32 %v2383, 1
        %vm2389 = vcmp.gt.s32.totalorder %v2388, 0
        %v2390 = vsel %vm2389, %v2388, 0
        %v2391 = vshrl.u32 %v2390, 5
        %v2392 = vand.u32 %v2390, 31
        %v2393 = vsub.s32 32, %v2392
        %v2394 = vshrl.u32 683565275, %v2393
        %v2395 = vshll.u32 683565275, %v2392
        %v2396 = vshrl.u32 2475754826, %v2393
        %v2397 = vor.u32 %v2395, %v2396
        %v2398 = vshll.u32 2475754826, %v2392
        %v2399 = vshrl.u32 2131351028, %v2393
        %v2400 = vor.u32 %v2398, %v2399
        %v2401 = vshll.u32 2131351028, %v2392
        %v2402 = vshrl.u32 2102212464, %v2393
        %v2403 = vor.u32 %v2401, %v2402
        %v2404 = vshll.u32 2102212464, %v2392
        %v2405 = vshrl.u32 920167782, %v2393
        %v2406 = vor.u32 %v2404, %v2405
        %v2407 = vshll.u32 920167782, %v2392
        %v2408 = vshrl.u32 1326507024, %v2393
        %v2409 = vor.u32 %v2407, %v2408
        %vm2410 = vcmp.lt.s32.totalorder %v2391, 1
        %vm2411 = vcmp.lt.s32.totalorder %v2391, 2
        %vm2412 = vcmp.lt.s32.totalorder %v2391, 3
        %vm2413 = vcmp.lt.s32.totalorder %v2391, 4
        %v2414 = vsel %vm2410, %v2394, %v2397
        %v2415 = vsel %vm2413, %v2403, 2102212464
        %v2416 = vsel %vm2412, %v2400, %v2415
        %v2417 = vsel %vm2411, %v2414, %v2416
        %v2418 = vsel %vm2410, %v2397, %v2400
        %v2419 = vsel %vm2413, %v2406, 920167782
        %v2420 = vsel %vm2412, %v2403, %v2419
        %v2421 = vsel %vm2411, %v2418, %v2420
        %v2422 = vsel %vm2410, %v2400, %v2403
        %v2423 = vsel %vm2413, %v2409, 1326507024
        %v2424 = vsel %vm2412, %v2406, %v2423
        %v2425 = vsel %vm2411, %v2422, %v2424
        %v2426 = vshll.u32 %v2386, 8
        %v2427 = vand.u32 %v2426, 65535
        %v2428 = vshrl.u32 %v2426, 16
        %v2429 = vand.u32 %v2425, 65535
        %v2430 = vshrl.u32 %v2425, 16
        %v2431 = vmul.u32 %v2427, %v2429
        %v2432 = vmul.u32 %v2427, %v2430
        %v2433 = vmul.u32 %v2428, %v2429
        %v2434 = vmul.u32 %v2428, %v2430
        %v2435 = vshll.u32 %v2432, 16
        %v2436 = vshrl.u32 %v2432, 16
        %v2437 = vshll.u32 %v2433, 16
        %v2438 = vshrl.u32 %v2433, 16
        %vm2439 = vc.u32 %v2431, %v2435
        %v2440 = vsel %vm2439, 1, 0
        %v2441 = vadd.s32 %v2431, %v2435
        %v2442 = vadd.s32 %v2434, %v2440
        %vm2443 = vc.u32 %v2441, %v2437
        %v2444 = vsel %vm2443, 1, 0
        %v2445 = vadd.s32 %v2441, %v2437
        %v2446 = vadd.s32 %v2442, %v2444
        %v2447 = vadd.s32 %v2446, %v2436
        %v2448 = vadd.s32 %v2447, %v2438
        %v2449 = vand.u32 %v2426, 65535
        %v2450 = vshrl.u32 %v2426, 16
        %v2451 = vand.u32 %v2421, 65535
        %v2452 = vshrl.u32 %v2421, 16
        %v2453 = vmul.u32 %v2449, %v2451
        %v2454 = vmul.u32 %v2449, %v2452
        %v2455 = vmul.u32 %v2450, %v2451
        %v2456 = vmul.u32 %v2450, %v2452
        %v2457 = vshll.u32 %v2454, 16
        %v2458 = vshrl.u32 %v2454, 16
        %v2459 = vshll.u32 %v2455, 16
        %v2460 = vshrl.u32 %v2455, 16
        %vm2461 = vc.u32 %v2453, %v2457
        %v2462 = vsel %vm2461, 1, 0
        %v2463 = vadd.s32 %v2453, %v2457
        %v2464 = vadd.s32 %v2456, %v2462
        %vm2465 = vc.u32 %v2463, %v2459
        %v2466 = vsel %vm2465, 1, 0
        %v2467 = vadd.s32 %v2463, %v2459
        %v2468 = vadd.s32 %v2464, %v2466
        %v2469 = vadd.s32 %v2468, %v2458
        %v2470 = vadd.s32 %v2469, %v2460
        %v2471 = vmul.u32 %v2426, %v2417
        %v2472 = vadd.s32 %v2448, %v2467
        %vm2473 = vc.u32 %v2448, %v2467
        %v2474 = vadd.s32 %v2470, 1
        %v2475 = vsel %vm2473, %v2474, %v2470
        %v2476 = vadd.s32 %v2471, %v2475
        %v2477 = vadd.s32 %v2476, 536870912
        %v2478 = vshrl.u32 %v2477, 30
        %v2479 = vshll.u32 %v2478, 30
        %v2480 = vsub.s32 %v2476, %v2479
        %vm2481 = vcmp.lt.s32.totalorder %v2480, 0
        %v2482 = vsub.s32 0, %v2480
        %v2483 = vsel %vm2481, %v2482, %v2480
        %v2484 = vclz %v2483
        %v2485 = vsub.s32 %v2484, 2
        %vm2486 = vcmp.gt.s32.totalorder 0, %v2485
        %v2487 = vsel %vm2486, 0, %v2485
        %v2488 = vsub.s32 32, %v2487
        %v2489 = vshll.u32 %v2480, %v2487
        %v2490 = vshrl.u32 %v2472, %v2488
        %v2491 = vor.u32 %v2489, %v2490
        %v2492 = vsub.s32 4294967266, %v2487
        %v2493 = vadd.s32 %v2492, 127
        %v2494 = vshll.u32 %v2493, 23
        %v2495 = vor.u32 4788187, %v2494
        %v2496 = vand.u32 2147483647, %v2495
        %v2498 = vcvt.s32.f32 %v2491
        %v2499 = vmul.f32 %v2498, %v2496
        %v2500 = vxor.u32 %v2499, 2147483648
        %v2501 = vsel %vm2380, %v2500, %v2499
        %v2502 = vsub.s32 4, %v2478
        %v2503 = vsel %vm2380, %v2502, %v2478
        %v2504 = vsel %vm2379, %v241, %v2501
        %v2505 = vsel %vm2379, 0, %v2503
        %v2506 = vmul.f32 %v2504, %v2504
        %v2507 = vmul.f32 %v2506, -0.001358992
        %v2508 = vadd.f32 %v2507, 0.041655596
        %v2509 = vmul.f32 %v2506, %v2508
        %v2510 = vadd.f32 %v2509, -0.4999988
        %v2511 = vmul.f32 %v2506, %v2510
        %v2512 = vadd.f32 1.0, %v2511
        %v2513 = vmul.f32 %v2504, %v2504
        %v2514 = vmul.f32 %v2513, -0.00019511016
        %v2515 = vadd.f32 %v2514, 0.008332121
        %v2516 = vmul.f32 %v2513, %v2515
        %v2517 = vadd.f32 %v2516, -0.16666654
        %v2518 = vmul.f32 %v2513, %v2517
        %v2519 = vadd.f32 %v2518, 1.0
        %v2520 = vmul.f32 %v2519, %v2504
        %vm2521 = vweird.f32 %v241
        %v2522 = vadd.s32 %v2505, 3
        %v2523 = vand.u32 %v2522, 3
        %vm2524 = vcmp.lt.s32.totalorder %v2523, 2
        %vm2525 = vcmp.eq.s32.totalorder %v2523, 0
        %v2526 = vxor.u32 %v2520, 2147483648
        %v2527 = vsel %vm2525, %v2512, %v2526
        %vm2528 = vcmp.eq.s32.totalorder %v2523, 2
        %v2529 = vxor.u32 %v2512, 2147483648
        %v2530 = vsel %vm2528, %v2529, %v2520
        %v2531 = vsel %vm2524, %v2527, %v2530
        %v2532 = vsel %vm2521, nan, %v2531
        %v2533 = vand.u32 2147483647, %v242
        %vm2534 = vcmp.le.f32.partialorder %v2533, 0.7853982
        %vm2535 = vcmp.lt.s32.totalorder %v242, 0
        %v2536 = vand.u32 %v242, 2139095040
        %v2537 = vshrl.u32 %v2536, 23
        %v2538 = vsub.s32 %v2537, 127
        %v2539 = vand.u32 2147483647, %v242
        %v2540 = vand.u32 %v2539, 8388607
        %v2541 = vor.u32 %v2540, 8388608
        %v2542 = vsub.s32 0, %v2541
        %v2543 = vadd.s32 %v2538, 1
        %vm2544 = vcmp.gt.s32.totalorder %v2543, 0
        %v2545 = vsel %vm2544, %v2543, 0
        %v2546 = vshrl.u32 %v2545, 5
        %v2547 = vand.u32 %v2545, 31
        %v2548 = vsub.s32 32, %v2547
        %v2549 = vshrl.u32 683565275, %v2548
        %v2550 = vshll.u32 683565275, %v2547
        %v2551 = vshrl.u32 2475754826, %v2548
        %v2552 = vor.u32 %v2550, %v2551
        %v2553 = vshll.u32 2475754826, %v2547
        %v2554 = vshrl.u32 2131351028, %v2548
        %v2555 = vor.u32 %v2553, %v2554
        %v2556 = vshll.u32 2131351028, %v2547
        %v2557 = vshrl.u32 2102212464, %v2548
        %v2558 = vor.u32 %v2556, %v2557
        %v2559 = vshll.u32 2102212464, %v2547
        %v2560 = vshrl.u32 920167782, %v2548
        %v2561 = vor.u32 %v2559, %v2560
        %v2562 = vshll.u32 920167782, %v2547
        %v2563 = vshrl.u32 1326507024, %v2548
        %v2564 = vor.u32 %v2562, %v2563
        %vm2565 = vcmp.lt.s32.totalorder %v2546, 1
        %vm2566 = vcmp.lt.s32.totalorder %v2546, 2
        %vm2567 = vcmp.lt.s32.totalorder %v2546, 3
        %vm2568 = vcmp.lt.s32.totalorder %v2546, 4
        %v2569 = vsel %vm2565, %v2549, %v2552
        %v2570 = vsel %vm2568, %v2558, 2102212464
        %v2571 = vsel %vm2567, %v2555, %v2570
        %v2572 = vsel %vm2566, %v2569, %v2571
        %v2573 = vsel %vm2565, %v2552, %v2555
        %v2574 = vsel %vm2568, %v2561, 920167782
        %v2575 = vsel %vm2567, %v2558, %v2574
        %v2576 = vsel %vm2566, %v2573, %v2575
        %v2577 = vsel %vm2565, %v2555, %v2558
        %v2578 = vsel %vm2568, %v2564, 1326507024
        %v2579 = vsel %vm2567, %v2561, %v2578
        %v2580 = vsel %vm2566, %v2577, %v2579
        %v2581 = vshll.u32 %v2541, 8
        %v2582 = vand.u32 %v2581, 65535
        %v2583 = vshrl.u32 %v2581, 16
        %v2584 = vand.u32 %v2580, 65535
        %v2585 = vshrl.u32 %v2580, 16
        %v2586 = vmul.u32 %v2582, %v2584
        %v2587 = vmul.u32 %v2582, %v2585
        %v2588 = vmul.u32 %v2583, %v2584
        %v2589 = vmul.u32 %v2583, %v2585
        %v2590 = vshll.u32 %v2587, 16
        %v2591 = vshrl.u32 %v2587, 16
        %v2592 = vshll.u32 %v2588, 16
        %v2593 = vshrl.u32 %v2588, 16
        %vm2594 = vc.u32 %v2586, %v2590
        %v2595 = vsel %vm2594, 1, 0
        %v2596 = vadd.s32 %v2586, %v2590
        %v2597 = vadd.s32 %v2589, %v2595
        %vm2598 = vc.u32 %v2596, %v2592
        %v2599 = vsel %vm2598, 1, 0
        %v2600 = vadd.s32 %v2596, %v2592
        %v2601 = vadd.s32 %v2597, %v2599
        %v2602 = vadd.s32 %v2601, %v2591
        %v2603 = vadd.s32 %v2602, %v2593
        %v2604 = vand.u32 %v2581, 65535
        %v2605 = vshrl.u32 %v2581, 16
        %v2606 = vand.u32 %v2576, 65535
        %v2607 = vshrl.u32 %v2576, 16
        %v2608 = vmul.u32 %v2604, %v2606
        %v2609 = vmul.u32 %v2604, %v2607
        %v2610 = vmul.u32 %v2605, %v2606
        %v2611 = vmul.u32 %v2605, %v2607
        %v2612 = vshll.u32 %v2609, 16
        %v2613 = vshrl.u32 %v2609, 16
        %v2614 = vshll.u32 %v2610, 16
        %v2615 = vshrl.u32 %v2610, 16
        %vm2616 = vc.u32 %v2608, %v2612
        %v2617 = vsel %vm2616, 1, 0
        %v2618 = vadd.s32 %v2608, %v2612
        %v2619 = vadd.s32 %v2611, %v2617
        %vm2620 = vc.u32 %v2618, %v2614
        %v2621 = vsel %vm2620, 1, 0
        %v2622 = vadd.s32 %v2618, %v2614
        %v2623 = vadd.s32 %v2619, %v2621
        %v2624 = vadd.s32 %v2623, %v2613
        %v2625 = vadd.s32 %v2624, %v2615
        %v2626 = vmul.u32 %v2581, %v2572
        %v2627 = vadd.s32 %v2603, %v2622
        %vm2628 = vc.u32 %v2603, %v2622
        %v2629 = vadd.s32 %v2625, 1
        %v2630 = vsel %vm2628, %v2629, %v2625
        %v2631 = vadd.s32 %v2626, %v2630
        %v2632 = vadd.s32 %v2631, 536870912
        %v2633 = vshrl.u32 %v2632, 30
        %v2634 = vshll.u32 %v2633, 30
        %v2635 = vsub.s32 %v2631, %v2634
        %vm2636 = vcmp.lt.s32.totalorder %v2635, 0
        %v2637 = vsub.s32 0, %v2635
        %v2638 = vsel %vm2636, %v2637, %v2635
        %v2639 = vclz %v2638
        %v2640 = vsub.s32 %v2639, 2
        %vm2641 = vcmp.gt.s32.totalorder 0, %v2640
        %v2642 = vsel %vm2641, 0, %v2640
        %v2643 = vsub.s32 32, %v2642
        %v2644 = vshll.u32 %v2635, %v2642
        %v2645 = vshrl.u32 %v2627, %v2643
        %v2646 = vor.u32 %v2644, %v2645
        %v2647 = vsub.s32 4294967266, %v2642
        %v2648 = vadd.s32 %v2647, 127
        %v2649 = vshll.u32 %v2648, 23
        %v2650 = vor.u32 4788187, %v2649
        %v2651 = vand.u32 2147483647, %v2650
        %v2653 = vcvt.s32.f32 %v2646
        %v2654 = vmul.f32 %v2653, %v2651
        %v2655 = vxor.u32 %v2654, 2147483648
        %v2656 = vsel %vm2535, %v2655, %v2654
        %v2657 = vsub.s32 4, %v2633
        %v2658 = vsel %vm2535, %v2657, %v2633
        %v2659 = vsel %vm2534, %v242, %v2656
        %v2660 = vsel %vm2534, 0, %v2658
        %v2661 = vmul.f32 %v2659, %v2659
        %v2662 = vmul.f32 %v2661, -0.001358992
        %v2663 = vadd.f32 %v2662, 0.041655596
        %v2664 = vmul.f32 %v2661, %v2663
        %v2665 = vadd.f32 %v2664, -0.4999988
        %v2666 = vmul.f32 %v2661, %v2665
        %v2667 = vadd.f32 1.0, %v2666
        %v2668 = vmul.f32 %v2659, %v2659
        %v2669 = vmul.f32 %v2668, -0.00019511016
        %v2670 = vadd.f32 %v2669, 0.008332121
        %v2671 = vmul.f32 %v2668, %v2670
        %v2672 = vadd.f32 %v2671, -0.16666654
        %v2673 = vmul.f32 %v2668, %v2672
        %v2674 = vadd.f32 %v2673, 1.0
        %v2675 = vmul.f32 %v2674, %v2659
        %vm2676 = vweird.f32 %v242
        %v2677 = vadd.s32 %v2660, 3
        %v2678 = vand.u32 %v2677, 3
        %vm2679 = vcmp.lt.s32.totalorder %v2678, 2
        %vm2680 = vcmp.eq.s32.totalorder %v2678, 0
        %v2681 = vxor.u32 %v2675, 2147483648
        %v2682 = vsel %vm2680, %v2667, %v2681
        %vm2683 = vcmp.eq.s32.totalorder %v2678, 2
        %v2684 = vxor.u32 %v2667, 2147483648
        %v2685 = vsel %vm2683, %v2684, %v2675
        %v2686 = vsel %vm2679, %v2682, %v2685
        %v2687 = vsel %vm2676, nan, %v2686
        %v2688 = vand.u32 2147483647, %v243
        %vm2689 = vcmp.le.f32.partialorder %v2688, 0.7853982
        %vm2690 = vcmp.lt.s32.totalorder %v243, 0
        %v2691 = vand.u32 %v243, 2139095040
        %v2692 = vshrl.u32 %v2691, 23
        %v2693 = vsub.s32 %v2692, 127
        %v2694 = vand.u32 2147483647, %v243
        %v2695 = vand.u32 %v2694, 8388607
        %v2696 = vor.u32 %v2695, 8388608
        %v2697 = vsub.s32 0, %v2696
        %v2698 = vadd.s32 %v2693, 1
        %vm2699 = vcmp.gt.s32.totalorder %v2698, 0
        %v2700 = vsel %vm2699, %v2698, 0
        %v2701 = vshrl.u32 %v2700, 5
        %v2702 = vand.u32 %v2700, 31
        %v2703 = vsub.s32 32, %v2702
        %v2704 = vshrl.u32 683565275, %v2703
        %v2705 = vshll.u32 683565275, %v2702
        %v2706 = vshrl.u32 2475754826, %v2703
        %v2707 = vor.u32 %v2705, %v2706
        %v2708 = vshll.u32 2475754826, %v2702
        %v2709 = vshrl.u32 2131351028, %v2703
        %v2710 = vor.u32 %v2708, %v2709
        %v2711 = vshll.u32 2131351028, %v2702
        %v2712 = vshrl.u32 2102212464, %v2703
        %v2713 = vor.u32 %v2711, %v2712
        %v2714 = vshll.u32 2102212464, %v2702
        %v2715 = vshrl.u32 920167782, %v2703
        %v2716 = vor.u32 %v2714, %v2715
        %v2717 = vshll.u32 920167782, %v2702
        %v2718 = vshrl.u32 1326507024, %v2703
        %v2719 = vor.u32 %v2717, %v2718
        %vm2720 = vcmp.lt.s32.totalorder %v2701, 1
        %vm2721 = vcmp.lt.s32.totalorder %v2701, 2
        %vm2722 = vcmp.lt.s32.totalorder %v2701, 3
        %vm2723 = vcmp.lt.s32.totalorder %v2701, 4
        %v2724 = vsel %vm2720, %v2704, %v2707
        %v2725 = vsel %vm2723, %v2713, 2102212464
        %v2726 = vsel %vm2722, %v2710, %v2725
        %v2727 = vsel %vm2721, %v2724, %v2726
        %v2728 = vsel %vm2720, %v2707, %v2710
        %v2729 = vsel %vm2723, %v2716, 920167782
        %v2730 = vsel %vm2722, %v2713, %v2729
        %v2731 = vsel %vm2721, %v2728, %v2730
        %v2732 = vsel %vm2720, %v2710, %v2713
        %v2733 = vsel %vm2723, %v2719, 1326507024
        %v2734 = vsel %vm2722, %v2716, %v2733
        %v2735 = vsel %vm2721, %v2732, %v2734
        %v2736 = vshll.u32 %v2696, 8
        %v2737 = vand.u32 %v2736, 65535
        %v2738 = vshrl.u32 %v2736, 16
        %v2739 = vand.u32 %v2735, 65535
        %v2740 = vshrl.u32 %v2735, 16
        %v2741 = vmul.u32 %v2737, %v2739
        %v2742 = vmul.u32 %v2737, %v2740
        %v2743 = vmul.u32 %v2738, %v2739
        %v2744 = vmul.u32 %v2738, %v2740
        %v2745 = vshll.u32 %v2742, 16
        %v2746 = vshrl.u32 %v2742, 16
        %v2747 = vshll.u32 %v2743, 16
        %v2748 = vshrl.u32 %v2743, 16
        %vm2749 = vc.u32 %v2741, %v2745
        %v2750 = vsel %vm2749, 1, 0
        %v2751 = vadd.s32 %v2741, %v2745
        %v2752 = vadd.s32 %v2744, %v2750
        %vm2753 = vc.u32 %v2751, %v2747
        %v2754 = vsel %vm2753, 1, 0
        %v2755 = vadd.s32 %v2751, %v2747
        %v2756 = vadd.s32 %v2752, %v2754
        %v2757 = vadd.s32 %v2756, %v2746
        %v2758 = vadd.s32 %v2757, %v2748
        %v2759 = vand.u32 %v2736, 65535
        %v2760 = vshrl.u32 %v2736, 16
        %v2761 = vand.u32 %v2731, 65535
        %v2762 = vshrl.u32 %v2731, 16
        %v2763 = vmul.u32 %v2759, %v2761
        %v2764 = vmul.u32 %v2759, %v2762
        %v2765 = vmul.u32 %v2760, %v2761
        %v2766 = vmul.u32 %v2760, %v2762
        %v2767 = vshll.u32 %v2764, 16
        %v2768 = vshrl.u32 %v2764, 16
        %v2769 = vshll.u32 %v2765, 16
        %v2770 = vshrl.u32 %v2765, 16
        %vm2771 = vc.u32 %v2763, %v2767
        %v2772 = vsel %vm2771, 1, 0
        %v2773 = vadd.s32 %v2763, %v2767
        %v2774 = vadd.s32 %v2766, %v2772
        %vm2775 = vc.u32 %v2773, %v2769
        %v2776 = vsel %vm2775, 1, 0
        %v2777 = vadd.s32 %v2773, %v2769
        %v2778 = vadd.s32 %v2774, %v2776
        %v2779 = vadd.s32 %v2778, %v2768
        %v2780 = vadd.s32 %v2779, %v2770
        %v2781 = vmul.u32 %v2736, %v2727
        %v2782 = vadd.s32 %v2758, %v2777
        %vm2783 = vc.u32 %v2758, %v2777
        %v2784 = vadd.s32 %v2780, 1
        %v2785 = vsel %vm2783, %v2784, %v2780
        %v2786 = vadd.s32 %v2781, %v2785
        %v2787 = vadd.s32 %v2786, 536870912
        %v2788 = vshrl.u32 %v2787, 30
        %v2789 = vshll.u32 %v2788, 30
        %v2790 = vsub.s32 %v2786, %v2789
        %vm2791 = vcmp.lt.s32.totalorder %v2790, 0
        %v2792 = vsub.s32 0, %v2790
        %v2793 = vsel %vm2791, %v2792, %v2790
        %v2794 = vclz %v2793
        %v2795 = vsub.s32 %v2794, 2
        %vm2796 = vcmp.gt.s32.totalorder 0, %v2795
        %v2797 = vsel %vm2796, 0, %v2795
        %v2798 = vsub.s32 32, %v2797
        %v2799 = vshll.u32 %v2790, %v2797
        %v2800 = vshrl.u32 %v2782, %v2798
        %v2801 = vor.u32 %v2799, %v2800
        %v2802 = vsub.s32 4294967266, %v2797
        %v2803 = vadd.s32 %v2802, 127
        %v2804 = vshll.u32 %v2803, 23
        %v2805 = vor.u32 4788187, %v2804
        %v2806 = vand.u32 2147483647, %v2805
        %v2808 = vcvt.s32.f32 %v2801
        %v2809 = vmul.f32 %v2808, %v2806
        %v2810 = vxor.u32 %v2809, 2147483648
        %v2811 = vsel %vm2690, %v2810, %v2809
        %v2812 = vsub.s32 4, %v2788
        %v2813 = vsel %vm2690, %v2812, %v2788
        %v2814 = vsel %vm2689, %v243, %v2811
        %v2815 = vsel %vm2689, 0, %v2813
        %v2816 = vmul.f32 %v2814, %v2814
        %v2817 = vmul.f32 %v2816, -0.001358992
        %v2818 = vadd.f32 %v2817, 0.041655596
        %v2819 = vmul.f32 %v2816, %v2818
        %v2820 = vadd.f32 %v2819, -0.4999988
        %v2821 = vmul.f32 %v2816, %v2820
        %v2822 = vadd.f32 1.0, %v2821
        %v2823 = vmul.f32 %v2814, %v2814
        %v2824 = vmul.f32 %v2823, -0.00019511016
        %v2825 = vadd.f32 %v2824, 0.008332121
        %v2826 = vmul.f32 %v2823, %v2825
        %v2827 = vadd.f32 %v2826, -0.16666654
        %v2828 = vmul.f32 %v2823, %v2827
        %v2829 = vadd.f32 %v2828, 1.0
        %v2830 = vmul.f32 %v2829, %v2814
        %vm2831 = vweird.f32 %v243
        %v2832 = vadd.s32 %v2815, 3
        %v2833 = vand.u32 %v2832, 3
        %vm2834 = vcmp.lt.s32.totalorder %v2833, 2
        %vm2835 = vcmp.eq.s32.totalorder %v2833, 0
        %v2836 = vxor.u32 %v2830, 2147483648
        %v2837 = vsel %vm2835, %v2822, %v2836
        %vm2838 = vcmp.eq.s32.totalorder %v2833, 2
        %v2839 = vxor.u32 %v2822, 2147483648
        %v2840 = vsel %vm2838, %v2839, %v2830
        %v2841 = vsel %vm2834, %v2837, %v2840
        %v2842 = vsel %vm2831, nan, %v2841
        %v2843 = vand.u32 2147483647, %v244
        %vm2844 = vcmp.le.f32.partialorder %v2843, 0.7853982
        %vm2845 = vcmp.lt.s32.totalorder %v244, 0
        %v2846 = vand.u32 %v244, 2139095040
        %v2847 = vshrl.u32 %v2846, 23
        %v2848 = vsub.s32 %v2847, 127
        %v2849 = vand.u32 2147483647, %v244
        %v2850 = vand.u32 %v2849, 8388607
        %v2851 = vor.u32 %v2850, 8388608
        %v2852 = vsub.s32 0, %v2851
        %v2853 = vadd.s32 %v2848, 1
        %vm2854 = vcmp.gt.s32.totalorder %v2853, 0
        %v2855 = vsel %vm2854, %v2853, 0
        %v2856 = vshrl.u32 %v2855, 5
        %v2857 = vand.u32 %v2855, 31
        %v2858 = vsub.s32 32, %v2857
        %v2859 = vshrl.u32 683565275, %v2858
        %v2860 = vshll.u32 683565275, %v2857
        %v2861 = vshrl.u32 2475754826, %v2858
        %v2862 = vor.u32 %v2860, %v2861
        %v2863 = vshll.u32 2475754826, %v2857
        %v2864 = vshrl.u32 2131351028, %v2858
        %v2865 = vor.u32 %v2863, %v2864
        %v2866 = vshll.u32 2131351028, %v2857
        %v2867 = vshrl.u32 2102212464, %v2858
        %v2868 = vor.u32 %v2866, %v2867
        %v2869 = vshll.u32 2102212464, %v2857
        %v2870 = vshrl.u32 920167782, %v2858
        %v2871 = vor.u32 %v2869, %v2870
        %v2872 = vshll.u32 920167782, %v2857
        %v2873 = vshrl.u32 1326507024, %v2858
        %v2874 = vor.u32 %v2872, %v2873
        %vm2875 = vcmp.lt.s32.totalorder %v2856, 1
        %vm2876 = vcmp.lt.s32.totalorder %v2856, 2
        %vm2877 = vcmp.lt.s32.totalorder %v2856, 3
        %vm2878 = vcmp.lt.s32.totalorder %v2856, 4
        %v2879 = vsel %vm2875, %v2859, %v2862
        %v2880 = vsel %vm2878, %v2868, 2102212464
        %v2881 = vsel %vm2877, %v2865, %v2880
        %v2882 = vsel %vm2876, %v2879, %v2881
        %v2883 = vsel %vm2875, %v2862, %v2865
        %v2884 = vsel %vm2878, %v2871, 920167782
        %v2885 = vsel %vm2877, %v2868, %v2884
        %v2886 = vsel %vm2876, %v2883, %v2885
        %v2887 = vsel %vm2875, %v2865, %v2868
        %v2888 = vsel %vm2878, %v2874, 1326507024
        %v2889 = vsel %vm2877, %v2871, %v2888
        %v2890 = vsel %vm2876, %v2887, %v2889
        %v2891 = vshll.u32 %v2851, 8
        %v2892 = vand.u32 %v2891, 65535
        %v2893 = vshrl.u32 %v2891, 16
        %v2894 = vand.u32 %v2890, 65535
        %v2895 = vshrl.u32 %v2890, 16
        %v2896 = vmul.u32 %v2892, %v2894
        %v2897 = vmul.u32 %v2892, %v2895
        %v2898 = vmul.u32 %v2893, %v2894
        %v2899 = vmul.u32 %v2893, %v2895
        %v2900 = vshll.u32 %v2897, 16
        %v2901 = vshrl.u32 %v2897, 16
        %v2902 = vshll.u32 %v2898, 16
        %v2903 = vshrl.u32 %v2898, 16
        %vm2904 = vc.u32 %v2896, %v2900
        %v2905 = vsel %vm2904, 1, 0
        %v2906 = vadd.s32 %v2896, %v2900
        %v2907 = vadd.s32 %v2899, %v2905
        %vm2908 = vc.u32 %v2906, %v2902
        %v2909 = vsel %vm2908, 1, 0
        %v2910 = vadd.s32 %v2906, %v2902
        %v2911 = vadd.s32 %v2907, %v2909
        %v2912 = vadd.s32 %v2911, %v2901
        %v2913 = vadd.s32 %v2912, %v2903
        %v2914 = vand.u32 %v2891, 65535
        %v2915 = vshrl.u32 %v2891, 16
        %v2916 = vand.u32 %v2886, 65535
        %v2917 = vshrl.u32 %v2886, 16
        %v2918 = vmul.u32 %v2914, %v2916
        %v2919 = vmul.u32 %v2914, %v2917
        %v2920 = vmul.u32 %v2915, %v2916
        %v2921 = vmul.u32 %v2915, %v2917
        %v2922 = vshll.u32 %v2919, 16
        %v2923 = vshrl.u32 %v2919, 16
        %v2924 = vshll.u32 %v2920, 16
        %v2925 = vshrl.u32 %v2920, 16
        %vm2926 = vc.u32 %v2918, %v2922
        %v2927 = vsel %vm2926, 1, 0
        %v2928 = vadd.s32 %v2918, %v2922
        %v2929 = vadd.s32 %v2921, %v2927
        %vm2930 = vc.u32 %v2928, %v2924
        %v2931 = vsel %vm2930, 1, 0
        %v2932 = vadd.s32 %v2928, %v2924
        %v2933 = vadd.s32 %v2929, %v2931
        %v2934 = vadd.s32 %v2933, %v2923
        %v2935 = vadd.s32 %v2934, %v2925
        %v2936 = vmul.u32 %v2891, %v2882
        %v2937 = vadd.s32 %v2913, %v2932
        %vm2938 = vc.u32 %v2913, %v2932
        %v2939 = vadd.s32 %v2935, 1
        %v2940 = vsel %vm2938, %v2939, %v2935
        %v2941 = vadd.s32 %v2936, %v2940
        %v2942 = vadd.s32 %v2941, 536870912
        %v2943 = vshrl.u32 %v2942, 30
        %v2944 = vshll.u32 %v2943, 30
        %v2945 = vsub.s32 %v2941, %v2944
        %vm2946 = vcmp.lt.s32.totalorder %v2945, 0
        %v2947 = vsub.s32 0, %v2945
        %v2948 = vsel %vm2946, %v2947, %v2945
        %v2949 = vclz %v2948
        %v2950 = vsub.s32 %v2949, 2
        %vm2951 = vcmp.gt.s32.totalorder 0, %v2950
        %v2952 = vsel %vm2951, 0, %v2950
        %v2953 = vsub.s32 32, %v2952
        %v2954 = vshll.u32 %v2945, %v2952
        %v2955 = vshrl.u32 %v2937, %v2953
        %v2956 = vor.u32 %v2954, %v2955
        %v2957 = vsub.s32 4294967266, %v2952
        %v2958 = vadd.s32 %v2957, 127
        %v2959 = vshll.u32 %v2958, 23
        %v2960 = vor.u32 4788187, %v2959
        %v2961 = vand.u32 2147483647, %v2960
        %v2963 = vcvt.s32.f32 %v2956
        %v2964 = vmul.f32 %v2963, %v2961
        %v2965 = vxor.u32 %v2964, 2147483648
        %v2966 = vsel %vm2845, %v2965, %v2964
        %v2967 = vsub.s32 4, %v2943
        %v2968 = vsel %vm2845, %v2967, %v2943
        %v2969 = vsel %vm2844, %v244, %v2966
        %v2970 = vsel %vm2844, 0, %v2968
        %v2971 = vmul.f32 %v2969, %v2969
        %v2972 = vmul.f32 %v2971, -0.001358992
        %v2973 = vadd.f32 %v2972, 0.041655596
        %v2974 = vmul.f32 %v2971, %v2973
        %v2975 = vadd.f32 %v2974, -0.4999988
        %v2976 = vmul.f32 %v2971, %v2975
        %v2977 = vadd.f32 1.0, %v2976
        %v2978 = vmul.f32 %v2969, %v2969
        %v2979 = vmul.f32 %v2978, -0.00019511016
        %v2980 = vadd.f32 %v2979, 0.008332121
        %v2981 = vmul.f32 %v2978, %v2980
        %v2982 = vadd.f32 %v2981, -0.16666654
        %v2983 = vmul.f32 %v2978, %v2982
        %v2984 = vadd.f32 %v2983, 1.0
        %v2985 = vmul.f32 %v2984, %v2969
        %vm2986 = vweird.f32 %v244
        %v2987 = vadd.s32 %v2970, 3
        %v2988 = vand.u32 %v2987, 3
        %vm2989 = vcmp.lt.s32.totalorder %v2988, 2
        %vm2990 = vcmp.eq.s32.totalorder %v2988, 0
        %v2991 = vxor.u32 %v2985, 2147483648
        %v2992 = vsel %vm2990, %v2977, %v2991
        %vm2993 = vcmp.eq.s32.totalorder %v2988, 2
        %v2994 = vxor.u32 %v2977, 2147483648
        %v2995 = vsel %vm2993, %v2994, %v2985
        %v2996 = vsel %vm2989, %v2992, %v2995
        %v2997 = vsel %vm2986, nan, %v2996
        %v2998 = vand.u32 2147483647, %v245
        %vm2999 = vcmp.le.f32.partialorder %v2998, 0.7853982
        %vm3000 = vcmp.lt.s32.totalorder %v245, 0
        %v3001 = vand.u32 %v245, 2139095040
        %v3002 = vshrl.u32 %v3001, 23
        %v3003 = vsub.s32 %v3002, 127
        %v3004 = vand.u32 2147483647, %v245
        %v3005 = vand.u32 %v3004, 8388607
        %v3006 = vor.u32 %v3005, 8388608
        %v3007 = vsub.s32 0, %v3006
        %v3008 = vadd.s32 %v3003, 1
        %vm3009 = vcmp.gt.s32.totalorder %v3008, 0
        %v3010 = vsel %vm3009, %v3008, 0
        %v3011 = vshrl.u32 %v3010, 5
        %v3012 = vand.u32 %v3010, 31
        %v3013 = vsub.s32 32, %v3012
        %v3014 = vshrl.u32 683565275, %v3013
        %v3015 = vshll.u32 683565275, %v3012
        %v3016 = vshrl.u32 2475754826, %v3013
        %v3017 = vor.u32 %v3015, %v3016
        %v3018 = vshll.u32 2475754826, %v3012
        %v3019 = vshrl.u32 2131351028, %v3013
        %v3020 = vor.u32 %v3018, %v3019
        %v3021 = vshll.u32 2131351028, %v3012
        %v3022 = vshrl.u32 2102212464, %v3013
        %v3023 = vor.u32 %v3021, %v3022
        %v3024 = vshll.u32 2102212464, %v3012
        %v3025 = vshrl.u32 920167782, %v3013
        %v3026 = vor.u32 %v3024, %v3025
        %v3027 = vshll.u32 920167782, %v3012
        %v3028 = vshrl.u32 1326507024, %v3013
        %v3029 = vor.u32 %v3027, %v3028
        %vm3030 = vcmp.lt.s32.totalorder %v3011, 1
        %vm3031 = vcmp.lt.s32.totalorder %v3011, 2
        %vm3032 = vcmp.lt.s32.totalorder %v3011, 3
        %vm3033 = vcmp.lt.s32.totalorder %v3011, 4
        %v3034 = vsel %vm3030, %v3014, %v3017
        %v3035 = vsel %vm3033, %v3023, 2102212464
        %v3036 = vsel %vm3032, %v3020, %v3035
        %v3037 = vsel %vm3031, %v3034, %v3036
        %v3038 = vsel %vm3030, %v3017, %v3020
        %v3039 = vsel %vm3033, %v3026, 920167782
        %v3040 = vsel %vm3032, %v3023, %v3039
        %v3041 = vsel %vm3031, %v3038, %v3040
        %v3042 = vsel %vm3030, %v3020, %v3023
        %v3043 = vsel %vm3033, %v3029, 1326507024
        %v3044 = vsel %vm3032, %v3026, %v3043
        %v3045 = vsel %vm3031, %v3042, %v3044
        %v3046 = vshll.u32 %v3006, 8
        %v3047 = vand.u32 %v3046, 65535
        %v3048 = vshrl.u32 %v3046, 16
        %v3049 = vand.u32 %v3045, 65535
        %v3050 = vshrl.u32 %v3045, 16
        %v3051 = vmul.u32 %v3047, %v3049
        %v3052 = vmul.u32 %v3047, %v3050
        %v3053 = vmul.u32 %v3048, %v3049
        %v3054 = vmul.u32 %v3048, %v3050
        %v3055 = vshll.u32 %v3052, 16
        %v3056 = vshrl.u32 %v3052, 16
        %v3057 = vshll.u32 %v3053, 16
        %v3058 = vshrl.u32 %v3053, 16
        %vm3059 = vc.u32 %v3051, %v3055
        %v3060 = vsel %vm3059, 1, 0
        %v3061 = vadd.s32 %v3051, %v3055
        %v3062 = vadd.s32 %v3054, %v3060
        %vm3063 = vc.u32 %v3061, %v3057
        %v3064 = vsel %vm3063, 1, 0
        %v3065 = vadd.s32 %v3061, %v3057
        %v3066 = vadd.s32 %v3062, %v3064
        %v3067 = vadd.s32 %v3066, %v3056
        %v3068 = vadd.s32 %v3067, %v3058
        %v3069 = vand.u32 %v3046, 65535
        %v3070 = vshrl.u32 %v3046, 16
        %v3071 = vand.u32 %v3041, 65535
        %v3072 = vshrl.u32 %v3041, 16
        %v3073 = vmul.u32 %v3069, %v3071
        %v3074 = vmul.u32 %v3069, %v3072
        %v3075 = vmul.u32 %v3070, %v3071
        %v3076 = vmul.u32 %v3070, %v3072
        %v3077 = vshll.u32 %v3074, 16
        %v3078 = vshrl.u32 %v3074, 16
        %v3079 = vshll.u32 %v3075, 16
        %v3080 = vshrl.u32 %v3075, 16
        %vm3081 = vc.u32 %v3073, %v3077
        %v3082 = vsel %vm3081, 1, 0
        %v3083 = vadd.s32 %v3073, %v3077
        %v3084 = vadd.s32 %v3076, %v3082
        %vm3085 = vc.u32 %v3083, %v3079
        %v3086 = vsel %vm3085, 1, 0
        %v3087 = vadd.s32 %v3083, %v3079
        %v3088 = vadd.s32 %v3084, %v3086
        %v3089 = vadd.s32 %v3088, %v3078
        %v3090 = vadd.s32 %v3089, %v3080
        %v3091 = vmul.u32 %v3046, %v3037
        %v3092 = vadd.s32 %v3068, %v3087
        %vm3093 = vc.u32 %v3068, %v3087
        %v3094 = vadd.s32 %v3090, 1
        %v3095 = vsel %vm3093, %v3094, %v3090
        %v3096 = vadd.s32 %v3091, %v3095
        %v3097 = vadd.s32 %v3096, 536870912
        %v3098 = vshrl.u32 %v3097, 30
        %v3099 = vshll.u32 %v3098, 30
        %v3100 = vsub.s32 %v3096, %v3099
        %vm3101 = vcmp.lt.s32.totalorder %v3100, 0
        %v3102 = vsub.s32 0, %v3100
        %v3103 = vsel %vm3101, %v3102, %v3100
        %v3104 = vclz %v3103
        %v3105 = vsub.s32 %v3104, 2
        %vm3106 = vcmp.gt.s32.totalorder 0, %v3105
        %v3107 = vsel %vm3106, 0, %v3105
        %v3108 = vsub.s32 32, %v3107
        %v3109 = vshll.u32 %v3100, %v3107
        %v3110 = vshrl.u32 %v3092, %v3108
        %v3111 = vor.u32 %v3109, %v3110
        %v3112 = vsub.s32 4294967266, %v3107
        %v3113 = vadd.s32 %v3112, 127
        %v3114 = vshll.u32 %v3113, 23
        %v3115 = vor.u32 4788187, %v3114
        %v3116 = vand.u32 2147483647, %v3115
        %v3118 = vcvt.s32.f32 %v3111
        %v3119 = vmul.f32 %v3118, %v3116
        %v3120 = vxor.u32 %v3119, 2147483648
        %v3121 = vsel %vm3000, %v3120, %v3119
        %v3122 = vsub.s32 4, %v3098
        %v3123 = vsel %vm3000, %v3122, %v3098
        %v3124 = vsel %vm2999, %v245, %v3121
        %v3125 = vsel %vm2999, 0, %v3123
        %v3126 = vmul.f32 %v3124, %v3124
        %v3127 = vmul.f32 %v3126, -0.001358992
        %v3128 = vadd.f32 %v3127, 0.041655596
        %v3129 = vmul.f32 %v3126, %v3128
        %v3130 = vadd.f32 %v3129, -0.4999988
        %v3131 = vmul.f32 %v3126, %v3130
        %v3132 = vadd.f32 1.0, %v3131
        %v3133 = vmul.f32 %v3124, %v3124
        %v3134 = vmul.f32 %v3133, -0.00019511016
        %v3135 = vadd.f32 %v3134, 0.008332121
        %v3136 = vmul.f32 %v3133, %v3135
        %v3137 = vadd.f32 %v3136, -0.16666654
        %v3138 = vmul.f32 %v3133, %v3137
        %v3139 = vadd.f32 %v3138, 1.0
        %v3140 = vmul.f32 %v3139, %v3124
        %vm3141 = vweird.f32 %v245
        %v3142 = vadd.s32 %v3125, 3
        %v3143 = vand.u32 %v3142, 3
        %vm3144 = vcmp.lt.s32.totalorder %v3143, 2
        %vm3145 = vcmp.eq.s32.totalorder %v3143, 0
        %v3146 = vxor.u32 %v3140, 2147483648
        %v3147 = vsel %vm3145, %v3132, %v3146
        %vm3148 = vcmp.eq.s32.totalorder %v3143, 2
        %v3149 = vxor.u32 %v3132, 2147483648
        %v3150 = vsel %vm3148, %v3149, %v3140
        %v3151 = vsel %vm3144, %v3147, %v3150
        %v3152 = vsel %vm3141, nan, %v3151
        %v3153 = vand.u32 2147483647, %v246
        %vm3154 = vcmp.le.f32.partialorder %v3153, 0.7853982
        %vm3155 = vcmp.lt.s32.totalorder %v246, 0
        %v3156 = vand.u32 %v246, 2139095040
        %v3157 = vshrl.u32 %v3156, 23
        %v3158 = vsub.s32 %v3157, 127
        %v3159 = vand.u32 2147483647, %v246
        %v3160 = vand.u32 %v3159, 8388607
        %v3161 = vor.u32 %v3160, 8388608
        %v3162 = vsub.s32 0, %v3161
        %v3163 = vadd.s32 %v3158, 1
        %vm3164 = vcmp.gt.s32.totalorder %v3163, 0
        %v3165 = vsel %vm3164, %v3163, 0
        %v3166 = vshrl.u32 %v3165, 5
        %v3167 = vand.u32 %v3165, 31
        %v3168 = vsub.s32 32, %v3167
        %v3169 = vshrl.u32 683565275, %v3168
        %v3170 = vshll.u32 683565275, %v3167
        %v3171 = vshrl.u32 2475754826, %v3168
        %v3172 = vor.u32 %v3170, %v3171
        %v3173 = vshll.u32 2475754826, %v3167
        %v3174 = vshrl.u32 2131351028, %v3168
        %v3175 = vor.u32 %v3173, %v3174
        %v3176 = vshll.u32 2131351028, %v3167
        %v3177 = vshrl.u32 2102212464, %v3168
        %v3178 = vor.u32 %v3176, %v3177
        %v3179 = vshll.u32 2102212464, %v3167
        %v3180 = vshrl.u32 920167782, %v3168
        %v3181 = vor.u32 %v3179, %v3180
        %v3182 = vshll.u32 920167782, %v3167
        %v3183 = vshrl.u32 1326507024, %v3168
        %v3184 = vor.u32 %v3182, %v3183
        %vm3185 = vcmp.lt.s32.totalorder %v3166, 1
        %vm3186 = vcmp.lt.s32.totalorder %v3166, 2
        %vm3187 = vcmp.lt.s32.totalorder %v3166, 3
        %vm3188 = vcmp.lt.s32.totalorder %v3166, 4
        %v3189 = vsel %vm3185, %v3169, %v3172
        %v3190 = vsel %vm3188, %v3178, 2102212464
        %v3191 = vsel %vm3187, %v3175, %v3190
        %v3192 = vsel %vm3186, %v3189, %v3191
        %v3193 = vsel %vm3185, %v3172, %v3175
        %v3194 = vsel %vm3188, %v3181, 920167782
        %v3195 = vsel %vm3187, %v3178, %v3194
        %v3196 = vsel %vm3186, %v3193, %v3195
        %v3197 = vsel %vm3185, %v3175, %v3178
        %v3198 = vsel %vm3188, %v3184, 1326507024
        %v3199 = vsel %vm3187, %v3181, %v3198
        %v3200 = vsel %vm3186, %v3197, %v3199
        %v3201 = vshll.u32 %v3161, 8
        %v3202 = vand.u32 %v3201, 65535
        %v3203 = vshrl.u32 %v3201, 16
        %v3204 = vand.u32 %v3200, 65535
        %v3205 = vshrl.u32 %v3200, 16
        %v3206 = vmul.u32 %v3202, %v3204
        %v3207 = vmul.u32 %v3202, %v3205
        %v3208 = vmul.u32 %v3203, %v3204
        %v3209 = vmul.u32 %v3203, %v3205
        %v3210 = vshll.u32 %v3207, 16
        %v3211 = vshrl.u32 %v3207, 16
        %v3212 = vshll.u32 %v3208, 16
        %v3213 = vshrl.u32 %v3208, 16
        %vm3214 = vc.u32 %v3206, %v3210
        %v3215 = vsel %vm3214, 1, 0
        %v3216 = vadd.s32 %v3206, %v3210
        %v3217 = vadd.s32 %v3209, %v3215
        %vm3218 = vc.u32 %v3216, %v3212
        %v3219 = vsel %vm3218, 1, 0
        %v3220 = vadd.s32 %v3216, %v3212
        %v3221 = vadd.s32 %v3217, %v3219
        %v3222 = vadd.s32 %v3221, %v3211
        %v3223 = vadd.s32 %v3222, %v3213
        %v3224 = vand.u32 %v3201, 65535
        %v3225 = vshrl.u32 %v3201, 16
        %v3226 = vand.u32 %v3196, 65535
        %v3227 = vshrl.u32 %v3196, 16
        %v3228 = vmul.u32 %v3224, %v3226
        %v3229 = vmul.u32 %v3224, %v3227
        %v3230 = vmul.u32 %v3225, %v3226
        %v3231 = vmul.u32 %v3225, %v3227
        %v3232 = vshll.u32 %v3229, 16
        %v3233 = vshrl.u32 %v3229, 16
        %v3234 = vshll.u32 %v3230, 16
        %v3235 = vshrl.u32 %v3230, 16
        %vm3236 = vc.u32 %v3228, %v3232
        %v3237 = vsel %vm3236, 1, 0
        %v3238 = vadd.s32 %v3228, %v3232
        %v3239 = vadd.s32 %v3231, %v3237
        %vm3240 = vc.u32 %v3238, %v3234
        %v3241 = vsel %vm3240, 1, 0
        %v3242 = vadd.s32 %v3238, %v3234
        %v3243 = vadd.s32 %v3239, %v3241
        %v3244 = vadd.s32 %v3243, %v3233
        %v3245 = vadd.s32 %v3244, %v3235
        %v3246 = vmul.u32 %v3201, %v3192
        %v3247 = vadd.s32 %v3223, %v3242
        %vm3248 = vc.u32 %v3223, %v3242
        %v3249 = vadd.s32 %v3245, 1
        %v3250 = vsel %vm3248, %v3249, %v3245
        %v3251 = vadd.s32 %v3246, %v3250
        %v3252 = vadd.s32 %v3251, 536870912
        %v3253 = vshrl.u32 %v3252, 30
        %v3254 = vshll.u32 %v3253, 30
        %v3255 = vsub.s32 %v3251, %v3254
        %vm3256 = vcmp.lt.s32.totalorder %v3255, 0
        %v3257 = vsub.s32 0, %v3255
        %v3258 = vsel %vm3256, %v3257, %v3255
        %v3259 = vclz %v3258
        %v3260 = vsub.s32 %v3259, 2
        %vm3261 = vcmp.gt.s32.totalorder 0, %v3260
        %v3262 = vsel %vm3261, 0, %v3260
        %v3263 = vsub.s32 32, %v3262
        %v3264 = vshll.u32 %v3255, %v3262
        %v3265 = vshrl.u32 %v3247, %v3263
        %v3266 = vor.u32 %v3264, %v3265
        %v3267 = vsub.s32 4294967266, %v3262
        %v3268 = vadd.s32 %v3267, 127
        %v3269 = vshll.u32 %v3268, 23
        %v3270 = vor.u32 4788187, %v3269
        %v3271 = vand.u32 2147483647, %v3270
        %v3273 = vcvt.s32.f32 %v3266
        %v3274 = vmul.f32 %v3273, %v3271
        %v3275 = vxor.u32 %v3274, 2147483648
        %v3276 = vsel %vm3155, %v3275, %v3274
        %v3277 = vsub.s32 4, %v3253
        %v3278 = vsel %vm3155, %v3277, %v3253
        %v3279 = vsel %vm3154, %v246, %v3276
        %v3280 = vsel %vm3154, 0, %v3278
        %v3281 = vmul.f32 %v3279, %v3279
        %v3282 = vmul.f32 %v3281, -0.001358992
        %v3283 = vadd.f32 %v3282, 0.041655596
        %v3284 = vmul.f32 %v3281, %v3283
        %v3285 = vadd.f32 %v3284, -0.4999988
        %v3286 = vmul.f32 %v3281, %v3285
        %v3287 = vadd.f32 1.0, %v3286
        %v3288 = vmul.f32 %v3279, %v3279
        %v3289 = vmul.f32 %v3288, -0.00019511016
        %v3290 = vadd.f32 %v3289, 0.008332121
        %v3291 = vmul.f32 %v3288, %v3290
        %v3292 = vadd.f32 %v3291, -0.16666654
        %v3293 = vmul.f32 %v3288, %v3292
        %v3294 = vadd.f32 %v3293, 1.0
        %v3295 = vmul.f32 %v3294, %v3279
        %vm3296 = vweird.f32 %v246
        %v3297 = vadd.s32 %v3280, 3
        %v3298 = vand.u32 %v3297, 3
        %vm3299 = vcmp.lt.s32.totalorder %v3298, 2
        %vm3300 = vcmp.eq.s32.totalorder %v3298, 0
        %v3301 = vxor.u32 %v3295, 2147483648
        %v3302 = vsel %vm3300, %v3287, %v3301
        %vm3303 = vcmp.eq.s32.totalorder %v3298, 2
        %v3304 = vxor.u32 %v3287, 2147483648
        %v3305 = vsel %vm3303, %v3304, %v3295
        %v3306 = vsel %vm3299, %v3302, %v3305
        %v3307 = vsel %vm3296, nan, %v3306
        %v3308 = vand.u32 2147483647, %v247
        %vm3309 = vcmp.le.f32.partialorder %v3308, 0.7853982
        %vm3310 = vcmp.lt.s32.totalorder %v247, 0
        %v3311 = vand.u32 %v247, 2139095040
        %v3312 = vshrl.u32 %v3311, 23
        %v3313 = vsub.s32 %v3312, 127
        %v3314 = vand.u32 2147483647, %v247
        %v3315 = vand.u32 %v3314, 8388607
        %v3316 = vor.u32 %v3315, 8388608
        %v3317 = vsub.s32 0, %v3316
        %v3318 = vadd.s32 %v3313, 1
        %vm3319 = vcmp.gt.s32.totalorder %v3318, 0
        %v3320 = vsel %vm3319, %v3318, 0
        %v3321 = vshrl.u32 %v3320, 5
        %v3322 = vand.u32 %v3320, 31
        %v3323 = vsub.s32 32, %v3322
        %v3324 = vshrl.u32 683565275, %v3323
        %v3325 = vshll.u32 683565275, %v3322
        %v3326 = vshrl.u32 2475754826, %v3323
        %v3327 = vor.u32 %v3325, %v3326
        %v3328 = vshll.u32 2475754826, %v3322
        %v3329 = vshrl.u32 2131351028, %v3323
        %v3330 = vor.u32 %v3328, %v3329
        %v3331 = vshll.u32 2131351028, %v3322
        %v3332 = vshrl.u32 2102212464, %v3323
        %v3333 = vor.u32 %v3331, %v3332
        %v3334 = vshll.u32 2102212464, %v3322
        %v3335 = vshrl.u32 920167782, %v3323
        %v3336 = vor.u32 %v3334, %v3335
        %v3337 = vshll.u32 920167782, %v3322
        %v3338 = vshrl.u32 1326507024, %v3323
        %v3339 = vor.u32 %v3337, %v3338
        %vm3340 = vcmp.lt.s32.totalorder %v3321, 1
        %vm3341 = vcmp.lt.s32.totalorder %v3321, 2
        %vm3342 = vcmp.lt.s32.totalorder %v3321, 3
        %vm3343 = vcmp.lt.s32.totalorder %v3321, 4
        %v3344 = vsel %vm3340, %v3324, %v3327
        %v3345 = vsel %vm3343, %v3333, 2102212464
        %v3346 = vsel %vm3342, %v3330, %v3345
        %v3347 = vsel %vm3341, %v3344, %v3346
        %v3348 = vsel %vm3340, %v3327, %v3330
        %v3349 = vsel %vm3343, %v3336, 920167782
        %v3350 = vsel %vm3342, %v3333, %v3349
        %v3351 = vsel %vm3341, %v3348, %v3350
        %v3352 = vsel %vm3340, %v3330, %v3333
        %v3353 = vsel %vm3343, %v3339, 1326507024
        %v3354 = vsel %vm3342, %v3336, %v3353
        %v3355 = vsel %vm3341, %v3352, %v3354
        %v3356 = vshll.u32 %v3316, 8
        %v3357 = vand.u32 %v3356, 65535
        %v3358 = vshrl.u32 %v3356, 16
        %v3359 = vand.u32 %v3355, 65535
        %v3360 = vshrl.u32 %v3355, 16
        %v3361 = vmul.u32 %v3357, %v3359
        %v3362 = vmul.u32 %v3357, %v3360
        %v3363 = vmul.u32 %v3358, %v3359
        %v3364 = vmul.u32 %v3358, %v3360
        %v3365 = vshll.u32 %v3362, 16
        %v3366 = vshrl.u32 %v3362, 16
        %v3367 = vshll.u32 %v3363, 16
        %v3368 = vshrl.u32 %v3363, 16
        %vm3369 = vc.u32 %v3361, %v3365
        %v3370 = vsel %vm3369, 1, 0
        %v3371 = vadd.s32 %v3361, %v3365
        %v3372 = vadd.s32 %v3364, %v3370
        %vm3373 = vc.u32 %v3371, %v3367
        %v3374 = vsel %vm3373, 1, 0
        %v3375 = vadd.s32 %v3371, %v3367
        %v3376 = vadd.s32 %v3372, %v3374
        %v3377 = vadd.s32 %v3376, %v3366
        %v3378 = vadd.s32 %v3377, %v3368
        %v3379 = vand.u32 %v3356, 65535
        %v3380 = vshrl.u32 %v3356, 16
        %v3381 = vand.u32 %v3351, 65535
        %v3382 = vshrl.u32 %v3351, 16
        %v3383 = vmul.u32 %v3379, %v3381
        %v3384 = vmul.u32 %v3379, %v3382
        %v3385 = vmul.u32 %v3380, %v3381
        %v3386 = vmul.u32 %v3380, %v3382
        %v3387 = vshll.u32 %v3384, 16
        %v3388 = vshrl.u32 %v3384, 16
        %v3389 = vshll.u32 %v3385, 16
        %v3390 = vshrl.u32 %v3385, 16
        %vm3391 = vc.u32 %v3383, %v3387
        %v3392 = vsel %vm3391, 1, 0
        %v3393 = vadd.s32 %v3383, %v3387
        %v3394 = vadd.s32 %v3386, %v3392
        %vm3395 = vc.u32 %v3393, %v3389
        %v3396 = vsel %vm3395, 1, 0
        %v3397 = vadd.s32 %v3393, %v3389
        %v3398 = vadd.s32 %v3394, %v3396
        %v3399 = vadd.s32 %v3398, %v3388
        %v3400 = vadd.s32 %v3399, %v3390
        %v3401 = vmul.u32 %v3356, %v3347
        %v3402 = vadd.s32 %v3378, %v3397
        %vm3403 = vc.u32 %v3378, %v3397
        %v3404 = vadd.s32 %v3400, 1
        %v3405 = vsel %vm3403, %v3404, %v3400
        %v3406 = vadd.s32 %v3401, %v3405
        %v3407 = vadd.s32 %v3406, 536870912
        %v3408 = vshrl.u32 %v3407, 30
        %v3409 = vshll.u32 %v3408, 30
        %v3410 = vsub.s32 %v3406, %v3409
        %vm3411 = vcmp.lt.s32.totalorder %v3410, 0
        %v3412 = vsub.s32 0, %v3410
        %v3413 = vsel %vm3411, %v3412, %v3410
        %v3414 = vclz %v3413
        %v3415 = vsub.s32 %v3414, 2
        %vm3416 = vcmp.gt.s32.totalorder 0, %v3415
        %v3417 = vsel %vm3416, 0, %v3415
        %v3418 = vsub.s32 32, %v3417
        %v3419 = vshll.u32 %v3410, %v3417
        %v3420 = vshrl.u32 %v3402, %v3418
        %v3421 = vor.u32 %v3419, %v3420
        %v3422 = vsub.s32 4294967266, %v3417
        %v3423 = vadd.s32 %v3422, 127
        %v3424 = vshll.u32 %v3423, 23
        %v3425 = vor.u32 4788187, %v3424
        %v3426 = vand.u32 2147483647, %v3425
        %v3428 = vcvt.s32.f32 %v3421
        %v3429 = vmul.f32 %v3428, %v3426
        %v3430 = vxor.u32 %v3429, 2147483648
        %v3431 = vsel %vm3310, %v3430, %v3429
        %v3432 = vsub.s32 4, %v3408
        %v3433 = vsel %vm3310, %v3432, %v3408
        %v3434 = vsel %vm3309, %v247, %v3431
        %v3435 = vsel %vm3309, 0, %v3433
        %v3436 = vmul.f32 %v3434, %v3434
        %v3437 = vmul.f32 %v3436, -0.001358992
        %v3438 = vadd.f32 %v3437, 0.041655596
        %v3439 = vmul.f32 %v3436, %v3438
        %v3440 = vadd.f32 %v3439, -0.4999988
        %v3441 = vmul.f32 %v3436, %v3440
        %v3442 = vadd.f32 1.0, %v3441
        %v3443 = vmul.f32 %v3434, %v3434
        %v3444 = vmul.f32 %v3443, -0.00019511016
        %v3445 = vadd.f32 %v3444, 0.008332121
        %v3446 = vmul.f32 %v3443, %v3445
        %v3447 = vadd.f32 %v3446, -0.16666654
        %v3448 = vmul.f32 %v3443, %v3447
        %v3449 = vadd.f32 %v3448, 1.0
        %v3450 = vmul.f32 %v3449, %v3434
        %vm3451 = vweird.f32 %v247
        %v3452 = vadd.s32 %v3435, 3
        %v3453 = vand.u32 %v3452, 3
        %vm3454 = vcmp.lt.s32.totalorder %v3453, 2
        %vm3455 = vcmp.eq.s32.totalorder %v3453, 0
        %v3456 = vxor.u32 %v3450, 2147483648
        %v3457 = vsel %vm3455, %v3442, %v3456
        %vm3458 = vcmp.eq.s32.totalorder %v3453, 2
        %v3459 = vxor.u32 %v3442, 2147483648
        %v3460 = vsel %vm3458, %v3459, %v3450
        %v3461 = vsel %vm3454, %v3457, %v3460
        %v3462 = vsel %vm3451, nan, %v3461
        %v3463 = vand.u32 2147483647, %v248
        %vm3464 = vcmp.le.f32.partialorder %v3463, 0.7853982
        %vm3465 = vcmp.lt.s32.totalorder %v248, 0
        %v3466 = vand.u32 %v248, 2139095040
        %v3467 = vshrl.u32 %v3466, 23
        %v3468 = vsub.s32 %v3467, 127
        %v3469 = vand.u32 2147483647, %v248
        %v3470 = vand.u32 %v3469, 8388607
        %v3471 = vor.u32 %v3470, 8388608
        %v3472 = vsub.s32 0, %v3471
        %v3473 = vadd.s32 %v3468, 1
        %vm3474 = vcmp.gt.s32.totalorder %v3473, 0
        %v3475 = vsel %vm3474, %v3473, 0
        %v3476 = vshrl.u32 %v3475, 5
        %v3477 = vand.u32 %v3475, 31
        %v3478 = vsub.s32 32, %v3477
        %v3479 = vshrl.u32 683565275, %v3478
        %v3480 = vshll.u32 683565275, %v3477
        %v3481 = vshrl.u32 2475754826, %v3478
        %v3482 = vor.u32 %v3480, %v3481
        %v3483 = vshll.u32 2475754826, %v3477
        %v3484 = vshrl.u32 2131351028, %v3478
        %v3485 = vor.u32 %v3483, %v3484
        %v3486 = vshll.u32 2131351028, %v3477
        %v3487 = vshrl.u32 2102212464, %v3478
        %v3488 = vor.u32 %v3486, %v3487
        %v3489 = vshll.u32 2102212464, %v3477
        %v3490 = vshrl.u32 920167782, %v3478
        %v3491 = vor.u32 %v3489, %v3490
        %v3492 = vshll.u32 920167782, %v3477
        %v3493 = vshrl.u32 1326507024, %v3478
        %v3494 = vor.u32 %v3492, %v3493
        %vm3495 = vcmp.lt.s32.totalorder %v3476, 1
        %vm3496 = vcmp.lt.s32.totalorder %v3476, 2
        %vm3497 = vcmp.lt.s32.totalorder %v3476, 3
        %vm3498 = vcmp.lt.s32.totalorder %v3476, 4
        %v3499 = vsel %vm3495, %v3479, %v3482
        %v3500 = vsel %vm3498, %v3488, 2102212464
        %v3501 = vsel %vm3497, %v3485, %v3500
        %v3502 = vsel %vm3496, %v3499, %v3501
        %v3503 = vsel %vm3495, %v3482, %v3485
        %v3504 = vsel %vm3498, %v3491, 920167782
        %v3505 = vsel %vm3497, %v3488, %v3504
        %v3506 = vsel %vm3496, %v3503, %v3505
        %v3507 = vsel %vm3495, %v3485, %v3488
        %v3508 = vsel %vm3498, %v3494, 1326507024
        %v3509 = vsel %vm3497, %v3491, %v3508
        %v3510 = vsel %vm3496, %v3507, %v3509
        %v3511 = vshll.u32 %v3471, 8
        %v3512 = vand.u32 %v3511, 65535
        %v3513 = vshrl.u32 %v3511, 16
        %v3514 = vand.u32 %v3510, 65535
        %v3515 = vshrl.u32 %v3510, 16
        %v3516 = vmul.u32 %v3512, %v3514
        %v3517 = vmul.u32 %v3512, %v3515
        %v3518 = vmul.u32 %v3513, %v3514
        %v3519 = vmul.u32 %v3513, %v3515
        %v3520 = vshll.u32 %v3517, 16
        %v3521 = vshrl.u32 %v3517, 16
        %v3522 = vshll.u32 %v3518, 16
        %v3523 = vshrl.u32 %v3518, 16
        %vm3524 = vc.u32 %v3516, %v3520
        %v3525 = vsel %vm3524, 1, 0
        %v3526 = vadd.s32 %v3516, %v3520
        %v3527 = vadd.s32 %v3519, %v3525
        %vm3528 = vc.u32 %v3526, %v3522
        %v3529 = vsel %vm3528, 1, 0
        %v3530 = vadd.s32 %v3526, %v3522
        %v3531 = vadd.s32 %v3527, %v3529
        %v3532 = vadd.s32 %v3531, %v3521
        %v3533 = vadd.s32 %v3532, %v3523
        %v3534 = vand.u32 %v3511, 65535
        %v3535 = vshrl.u32 %v3511, 16
        %v3536 = vand.u32 %v3506, 65535
        %v3537 = vshrl.u32 %v3506, 16
        %v3538 = vmul.u32 %v3534, %v3536
        %v3539 = vmul.u32 %v3534, %v3537
        %v3540 = vmul.u32 %v3535, %v3536
        %v3541 = vmul.u32 %v3535, %v3537
        %v3542 = vshll.u32 %v3539, 16
        %v3543 = vshrl.u32 %v3539, 16
        %v3544 = vshll.u32 %v3540, 16
        %v3545 = vshrl.u32 %v3540, 16
        %vm3546 = vc.u32 %v3538, %v3542
        %v3547 = vsel %vm3546, 1, 0
        %v3548 = vadd.s32 %v3538, %v3542
        %v3549 = vadd.s32 %v3541, %v3547
        %vm3550 = vc.u32 %v3548, %v3544
        %v3551 = vsel %vm3550, 1, 0
        %v3552 = vadd.s32 %v3548, %v3544
        %v3553 = vadd.s32 %v3549, %v3551
        %v3554 = vadd.s32 %v3553, %v3543
        %v3555 = vadd.s32 %v3554, %v3545
        %v3556 = vmul.u32 %v3511, %v3502
        %v3557 = vadd.s32 %v3533, %v3552
        %vm3558 = vc.u32 %v3533, %v3552
        %v3559 = vadd.s32 %v3555, 1
        %v3560 = vsel %vm3558, %v3559, %v3555
        %v3561 = vadd.s32 %v3556, %v3560
        %v3562 = vadd.s32 %v3561, 536870912
        %v3563 = vshrl.u32 %v3562, 30
        %v3564 = vshll.u32 %v3563, 30
        %v3565 = vsub.s32 %v3561, %v3564
        %vm3566 = vcmp.lt.s32.totalorder %v3565, 0
        %v3567 = vsub.s32 0, %v3565
        %v3568 = vsel %vm3566, %v3567, %v3565
        %v3569 = vclz %v3568
        %v3570 = vsub.s32 %v3569, 2
        %vm3571 = vcmp.gt.s32.totalorder 0, %v3570
        %v3572 = vsel %vm3571, 0, %v3570
        %v3573 = vsub.s32 32, %v3572
        %v3574 = vshll.u32 %v3565, %v3572
        %v3575 = vshrl.u32 %v3557, %v3573
        %v3576 = vor.u32 %v3574, %v3575
        %v3577 = vsub.s32 4294967266, %v3572
        %v3578 = vadd.s32 %v3577, 127
        %v3579 = vshll.u32 %v3578, 23
        %v3580 = vor.u32 4788187, %v3579
        %v3581 = vand.u32 2147483647, %v3580
        %v3583 = vcvt.s32.f32 %v3576
        %v3584 = vmul.f32 %v3583, %v3581
        %v3585 = vxor.u32 %v3584, 2147483648
        %v3586 = vsel %vm3465, %v3585, %v3584
        %v3587 = vsub.s32 4, %v3563
        %v3588 = vsel %vm3465, %v3587, %v3563
        %v3589 = vsel %vm3464, %v248, %v3586
        %v3590 = vsel %vm3464, 0, %v3588
        %v3591 = vmul.f32 %v3589, %v3589
        %v3592 = vmul.f32 %v3591, -0.001358992
        %v3593 = vadd.f32 %v3592, 0.041655596
        %v3594 = vmul.f32 %v3591, %v3593
        %v3595 = vadd.f32 %v3594, -0.4999988
        %v3596 = vmul.f32 %v3591, %v3595
        %v3597 = vadd.f32 1.0, %v3596
        %v3598 = vmul.f32 %v3589, %v3589
        %v3599 = vmul.f32 %v3598, -0.00019511016
        %v3600 = vadd.f32 %v3599, 0.008332121
        %v3601 = vmul.f32 %v3598, %v3600
        %v3602 = vadd.f32 %v3601, -0.16666654
        %v3603 = vmul.f32 %v3598, %v3602
        %v3604 = vadd.f32 %v3603, 1.0
        %v3605 = vmul.f32 %v3604, %v3589
        %vm3606 = vweird.f32 %v248
        %v3607 = vadd.s32 %v3590, 3
        %v3608 = vand.u32 %v3607, 3
        %vm3609 = vcmp.lt.s32.totalorder %v3608, 2
        %vm3610 = vcmp.eq.s32.totalorder %v3608, 0
        %v3611 = vxor.u32 %v3605, 2147483648
        %v3612 = vsel %vm3610, %v3597, %v3611
        %vm3613 = vcmp.eq.s32.totalorder %v3608, 2
        %v3614 = vxor.u32 %v3597, 2147483648
        %v3615 = vsel %vm3613, %v3614, %v3605
        %v3616 = vsel %vm3609, %v3612, %v3615
        %v3617 = vsel %vm3606, nan, %v3616
        %v3618 = vand.u32 2147483647, %v249
        %vm3619 = vcmp.le.f32.partialorder %v3618, 0.7853982
        %vm3620 = vcmp.lt.s32.totalorder %v249, 0
        %v3621 = vand.u32 %v249, 2139095040
        %v3622 = vshrl.u32 %v3621, 23
        %v3623 = vsub.s32 %v3622, 127
        %v3624 = vand.u32 2147483647, %v249
        %v3625 = vand.u32 %v3624, 8388607
        %v3626 = vor.u32 %v3625, 8388608
        %v3627 = vsub.s32 0, %v3626
        %v3628 = vadd.s32 %v3623, 1
        %vm3629 = vcmp.gt.s32.totalorder %v3628, 0
        %v3630 = vsel %vm3629, %v3628, 0
        %v3631 = vshrl.u32 %v3630, 5
        %v3632 = vand.u32 %v3630, 31
        %v3633 = vsub.s32 32, %v3632
        %v3634 = vshrl.u32 683565275, %v3633
        %v3635 = vshll.u32 683565275, %v3632
        %v3636 = vshrl.u32 2475754826, %v3633
        %v3637 = vor.u32 %v3635, %v3636
        %v3638 = vshll.u32 2475754826, %v3632
        %v3639 = vshrl.u32 2131351028, %v3633
        %v3640 = vor.u32 %v3638, %v3639
        %v3641 = vshll.u32 2131351028, %v3632
        %v3642 = vshrl.u32 2102212464, %v3633
        %v3643 = vor.u32 %v3641, %v3642
        %v3644 = vshll.u32 2102212464, %v3632
        %v3645 = vshrl.u32 920167782, %v3633
        %v3646 = vor.u32 %v3644, %v3645
        %v3647 = vshll.u32 920167782, %v3632
        %v3648 = vshrl.u32 1326507024, %v3633
        %v3649 = vor.u32 %v3647, %v3648
        %vm3650 = vcmp.lt.s32.totalorder %v3631, 1
        %vm3651 = vcmp.lt.s32.totalorder %v3631, 2
        %vm3652 = vcmp.lt.s32.totalorder %v3631, 3
        %vm3653 = vcmp.lt.s32.totalorder %v3631, 4
        %v3654 = vsel %vm3650, %v3634, %v3637
        %v3655 = vsel %vm3653, %v3643, 2102212464
        %v3656 = vsel %vm3652, %v3640, %v3655
        %v3657 = vsel %vm3651, %v3654, %v3656
        %v3658 = vsel %vm3650, %v3637, %v3640
        %v3659 = vsel %vm3653, %v3646, 920167782
        %v3660 = vsel %vm3652, %v3643, %v3659
        %v3661 = vsel %vm3651, %v3658, %v3660
        %v3662 = vsel %vm3650, %v3640, %v3643
        %v3663 = vsel %vm3653, %v3649, 1326507024
        %v3664 = vsel %vm3652, %v3646, %v3663
        %v3665 = vsel %vm3651, %v3662, %v3664
        %v3666 = vshll.u32 %v3626, 8
        %v3667 = vand.u32 %v3666, 65535
        %v3668 = vshrl.u32 %v3666, 16
        %v3669 = vand.u32 %v3665, 65535
        %v3670 = vshrl.u32 %v3665, 16
        %v3671 = vmul.u32 %v3667, %v3669
        %v3672 = vmul.u32 %v3667, %v3670
        %v3673 = vmul.u32 %v3668, %v3669
        %v3674 = vmul.u32 %v3668, %v3670
        %v3675 = vshll.u32 %v3672, 16
        %v3676 = vshrl.u32 %v3672, 16
        %v3677 = vshll.u32 %v3673, 16
        %v3678 = vshrl.u32 %v3673, 16
        %vm3679 = vc.u32 %v3671, %v3675
        %v3680 = vsel %vm3679, 1, 0
        %v3681 = vadd.s32 %v3671, %v3675
        %v3682 = vadd.s32 %v3674, %v3680
        %vm3683 = vc.u32 %v3681, %v3677
        %v3684 = vsel %vm3683, 1, 0
        %v3685 = vadd.s32 %v3681, %v3677
        %v3686 = vadd.s32 %v3682, %v3684
        %v3687 = vadd.s32 %v3686, %v3676
        %v3688 = vadd.s32 %v3687, %v3678
        %v3689 = vand.u32 %v3666, 65535
        %v3690 = vshrl.u32 %v3666, 16
        %v3691 = vand.u32 %v3661, 65535
        %v3692 = vshrl.u32 %v3661, 16
        %v3693 = vmul.u32 %v3689, %v3691
        %v3694 = vmul.u32 %v3689, %v3692
        %v3695 = vmul.u32 %v3690, %v3691
        %v3696 = vmul.u32 %v3690, %v3692
        %v3697 = vshll.u32 %v3694, 16
        %v3698 = vshrl.u32 %v3694, 16
        %v3699 = vshll.u32 %v3695, 16
        %v3700 = vshrl.u32 %v3695, 16
        %vm3701 = vc.u32 %v3693, %v3697
        %v3702 = vsel %vm3701, 1, 0
        %v3703 = vadd.s32 %v3693, %v3697
        %v3704 = vadd.s32 %v3696, %v3702
        %vm3705 = vc.u32 %v3703, %v3699
        %v3706 = vsel %vm3705, 1, 0
        %v3707 = vadd.s32 %v3703, %v3699
        %v3708 = vadd.s32 %v3704, %v3706
        %v3709 = vadd.s32 %v3708, %v3698
        %v3710 = vadd.s32 %v3709, %v3700
        %v3711 = vmul.u32 %v3666, %v3657
        %v3712 = vadd.s32 %v3688, %v3707
        %vm3713 = vc.u32 %v3688, %v3707
        %v3714 = vadd.s32 %v3710, 1
        %v3715 = vsel %vm3713, %v3714, %v3710
        %v3716 = vadd.s32 %v3711, %v3715
        %v3717 = vadd.s32 %v3716, 536870912
        %v3718 = vshrl.u32 %v3717, 30
        %v3719 = vshll.u32 %v3718, 30
        %v3720 = vsub.s32 %v3716, %v3719
        %vm3721 = vcmp.lt.s32.totalorder %v3720, 0
        %v3722 = vsub.s32 0, %v3720
        %v3723 = vsel %vm3721, %v3722, %v3720
        %v3724 = vclz %v3723
        %v3725 = vsub.s32 %v3724, 2
        %vm3726 = vcmp.gt.s32.totalorder 0, %v3725
        %v3727 = vsel %vm3726, 0, %v3725
        %v3728 = vsub.s32 32, %v3727
        %v3729 = vshll.u32 %v3720, %v3727
        %v3730 = vshrl.u32 %v3712, %v3728
        %v3731 = vor.u32 %v3729, %v3730
        %v3732 = vsub.s32 4294967266, %v3727
        %v3733 = vadd.s32 %v3732, 127
        %v3734 = vshll.u32 %v3733, 23
        %v3735 = vor.u32 4788187, %v3734
        %v3736 = vand.u32 2147483647, %v3735
        %v3738 = vcvt.s32.f32 %v3731
        %v3739 = vmul.f32 %v3738, %v3736
        %v3740 = vxor.u32 %v3739, 2147483648
        %v3741 = vsel %vm3620, %v3740, %v3739
        %v3742 = vsub.s32 4, %v3718
        %v3743 = vsel %vm3620, %v3742, %v3718
        %v3744 = vsel %vm3619, %v249, %v3741
        %v3745 = vsel %vm3619, 0, %v3743
        %v3746 = vmul.f32 %v3744, %v3744
        %v3747 = vmul.f32 %v3746, -0.001358992
        %v3748 = vadd.f32 %v3747, 0.041655596
        %v3749 = vmul.f32 %v3746, %v3748
        %v3750 = vadd.f32 %v3749, -0.4999988
        %v3751 = vmul.f32 %v3746, %v3750
        %v3752 = vadd.f32 1.0, %v3751
        %v3753 = vmul.f32 %v3744, %v3744
        %v3754 = vmul.f32 %v3753, -0.00019511016
        %v3755 = vadd.f32 %v3754, 0.008332121
        %v3756 = vmul.f32 %v3753, %v3755
        %v3757 = vadd.f32 %v3756, -0.16666654
        %v3758 = vmul.f32 %v3753, %v3757
        %v3759 = vadd.f32 %v3758, 1.0
        %v3760 = vmul.f32 %v3759, %v3744
        %vm3761 = vweird.f32 %v249
        %v3762 = vadd.s32 %v3745, 3
        %v3763 = vand.u32 %v3762, 3
        %vm3764 = vcmp.lt.s32.totalorder %v3763, 2
        %vm3765 = vcmp.eq.s32.totalorder %v3763, 0
        %v3766 = vxor.u32 %v3760, 2147483648
        %v3767 = vsel %vm3765, %v3752, %v3766
        %vm3768 = vcmp.eq.s32.totalorder %v3763, 2
        %v3769 = vxor.u32 %v3752, 2147483648
        %v3770 = vsel %vm3768, %v3769, %v3760
        %v3771 = vsel %vm3764, %v3767, %v3770
        %v3772 = vsel %vm3761, nan, %v3771
        %v3773 = vand.u32 2147483647, %v250
        %vm3774 = vcmp.le.f32.partialorder %v3773, 0.7853982
        %vm3775 = vcmp.lt.s32.totalorder %v250, 0
        %v3776 = vand.u32 %v250, 2139095040
        %v3777 = vshrl.u32 %v3776, 23
        %v3778 = vsub.s32 %v3777, 127
        %v3779 = vand.u32 2147483647, %v250
        %v3780 = vand.u32 %v3779, 8388607
        %v3781 = vor.u32 %v3780, 8388608
        %v3782 = vsub.s32 0, %v3781
        %v3783 = vadd.s32 %v3778, 1
        %vm3784 = vcmp.gt.s32.totalorder %v3783, 0
        %v3785 = vsel %vm3784, %v3783, 0
        %v3786 = vshrl.u32 %v3785, 5
        %v3787 = vand.u32 %v3785, 31
        %v3788 = vsub.s32 32, %v3787
        %v3789 = vshrl.u32 683565275, %v3788
        %v3790 = vshll.u32 683565275, %v3787
        %v3791 = vshrl.u32 2475754826, %v3788
        %v3792 = vor.u32 %v3790, %v3791
        %v3793 = vshll.u32 2475754826, %v3787
        %v3794 = vshrl.u32 2131351028, %v3788
        %v3795 = vor.u32 %v3793, %v3794
        %v3796 = vshll.u32 2131351028, %v3787
        %v3797 = vshrl.u32 2102212464, %v3788
        %v3798 = vor.u32 %v3796, %v3797
        %v3799 = vshll.u32 2102212464, %v3787
        %v3800 = vshrl.u32 920167782, %v3788
        %v3801 = vor.u32 %v3799, %v3800
        %v3802 = vshll.u32 920167782, %v3787
        %v3803 = vshrl.u32 1326507024, %v3788
        %v3804 = vor.u32 %v3802, %v3803
        %vm3805 = vcmp.lt.s32.totalorder %v3786, 1
        %vm3806 = vcmp.lt.s32.totalorder %v3786, 2
        %vm3807 = vcmp.lt.s32.totalorder %v3786, 3
        %vm3808 = vcmp.lt.s32.totalorder %v3786, 4
        %v3809 = vsel %vm3805, %v3789, %v3792
        %v3810 = vsel %vm3808, %v3798, 2102212464
        %v3811 = vsel %vm3807, %v3795, %v3810
        %v3812 = vsel %vm3806, %v3809, %v3811
        %v3813 = vsel %vm3805, %v3792, %v3795
        %v3814 = vsel %vm3808, %v3801, 920167782
        %v3815 = vsel %vm3807, %v3798, %v3814
        %v3816 = vsel %vm3806, %v3813, %v3815
        %v3817 = vsel %vm3805, %v3795, %v3798
        %v3818 = vsel %vm3808, %v3804, 1326507024
        %v3819 = vsel %vm3807, %v3801, %v3818
        %v3820 = vsel %vm3806, %v3817, %v3819
        %v3821 = vshll.u32 %v3781, 8
        %v3822 = vand.u32 %v3821, 65535
        %v3823 = vshrl.u32 %v3821, 16
        %v3824 = vand.u32 %v3820, 65535
        %v3825 = vshrl.u32 %v3820, 16
        %v3826 = vmul.u32 %v3822, %v3824
        %v3827 = vmul.u32 %v3822, %v3825
        %v3828 = vmul.u32 %v3823, %v3824
        %v3829 = vmul.u32 %v3823, %v3825
        %v3830 = vshll.u32 %v3827, 16
        %v3831 = vshrl.u32 %v3827, 16
        %v3832 = vshll.u32 %v3828, 16
        %v3833 = vshrl.u32 %v3828, 16
        %vm3834 = vc.u32 %v3826, %v3830
        %v3835 = vsel %vm3834, 1, 0
        %v3836 = vadd.s32 %v3826, %v3830
        %v3837 = vadd.s32 %v3829, %v3835
        %vm3838 = vc.u32 %v3836, %v3832
        %v3839 = vsel %vm3838, 1, 0
        %v3840 = vadd.s32 %v3836, %v3832
        %v3841 = vadd.s32 %v3837, %v3839
        %v3842 = vadd.s32 %v3841, %v3831
        %v3843 = vadd.s32 %v3842, %v3833
        %v3844 = vand.u32 %v3821, 65535
        %v3845 = vshrl.u32 %v3821, 16
        %v3846 = vand.u32 %v3816, 65535
        %v3847 = vshrl.u32 %v3816, 16
        %v3848 = vmul.u32 %v3844, %v3846
        %v3849 = vmul.u32 %v3844, %v3847
        %v3850 = vmul.u32 %v3845, %v3846
        %v3851 = vmul.u32 %v3845, %v3847
        %v3852 = vshll.u32 %v3849, 16
        %v3853 = vshrl.u32 %v3849, 16
        %v3854 = vshll.u32 %v3850, 16
        %v3855 = vshrl.u32 %v3850, 16
        %vm3856 = vc.u32 %v3848, %v3852
        %v3857 = vsel %vm3856, 1, 0
        %v3858 = vadd.s32 %v3848, %v3852
        %v3859 = vadd.s32 %v3851, %v3857
        %vm3860 = vc.u32 %v3858, %v3854
        %v3861 = vsel %vm3860, 1, 0
        %v3862 = vadd.s32 %v3858, %v3854
        %v3863 = vadd.s32 %v3859, %v3861
        %v3864 = vadd.s32 %v3863, %v3853
        %v3865 = vadd.s32 %v3864, %v3855
        %v3866 = vmul.u32 %v3821, %v3812
        %v3867 = vadd.s32 %v3843, %v3862
        %vm3868 = vc.u32 %v3843, %v3862
        %v3869 = vadd.s32 %v3865, 1
        %v3870 = vsel %vm3868, %v3869, %v3865
        %v3871 = vadd.s32 %v3866, %v3870
        %v3872 = vadd.s32 %v3871, 536870912
        %v3873 = vshrl.u32 %v3872, 30
        %v3874 = vshll.u32 %v3873, 30
        %v3875 = vsub.s32 %v3871, %v3874
        %vm3876 = vcmp.lt.s32.totalorder %v3875, 0
        %v3877 = vsub.s32 0, %v3875
        %v3878 = vsel %vm3876, %v3877, %v3875
        %v3879 = vclz %v3878
        %v3880 = vsub.s32 %v3879, 2
        %vm3881 = vcmp.gt.s32.totalorder 0, %v3880
        %v3882 = vsel %vm3881, 0, %v3880
        %v3883 = vsub.s32 32, %v3882
        %v3884 = vshll.u32 %v3875, %v3882
        %v3885 = vshrl.u32 %v3867, %v3883
        %v3886 = vor.u32 %v3884, %v3885
        %v3887 = vsub.s32 4294967266, %v3882
        %v3888 = vadd.s32 %v3887, 127
        %v3889 = vshll.u32 %v3888, 23
        %v3890 = vor.u32 4788187, %v3889
        %v3891 = vand.u32 2147483647, %v3890
        %v3893 = vcvt.s32.f32 %v3886
        %v3894 = vmul.f32 %v3893, %v3891
        %v3895 = vxor.u32 %v3894, 2147483648
        %v3896 = vsel %vm3775, %v3895, %v3894
        %v3897 = vsub.s32 4, %v3873
        %v3898 = vsel %vm3775, %v3897, %v3873
        %v3899 = vsel %vm3774, %v250, %v3896
        %v3900 = vsel %vm3774, 0, %v3898
        %v3901 = vmul.f32 %v3899, %v3899
        %v3902 = vmul.f32 %v3901, -0.001358992
        %v3903 = vadd.f32 %v3902, 0.041655596
        %v3904 = vmul.f32 %v3901, %v3903
        %v3905 = vadd.f32 %v3904, -0.4999988
        %v3906 = vmul.f32 %v3901, %v3905
        %v3907 = vadd.f32 1.0, %v3906
        %v3908 = vmul.f32 %v3899, %v3899
        %v3909 = vmul.f32 %v3908, -0.00019511016
        %v3910 = vadd.f32 %v3909, 0.008332121
        %v3911 = vmul.f32 %v3908, %v3910
        %v3912 = vadd.f32 %v3911, -0.16666654
        %v3913 = vmul.f32 %v3908, %v3912
        %v3914 = vadd.f32 %v3913, 1.0
        %v3915 = vmul.f32 %v3914, %v3899
        %vm3916 = vweird.f32 %v250
        %v3917 = vadd.s32 %v3900, 3
        %v3918 = vand.u32 %v3917, 3
        %vm3919 = vcmp.lt.s32.totalorder %v3918, 2
        %vm3920 = vcmp.eq.s32.totalorder %v3918, 0
        %v3921 = vxor.u32 %v3915, 2147483648
        %v3922 = vsel %vm3920, %v3907, %v3921
        %vm3923 = vcmp.eq.s32.totalorder %v3918, 2
        %v3924 = vxor.u32 %v3907, 2147483648
        %v3925 = vsel %vm3923, %v3924, %v3915
        %v3926 = vsel %vm3919, %v3922, %v3925
        %v3927 = vsel %vm3916, nan, %v3926
        %v3928 = vand.u32 2147483647, %v251
        %vm3929 = vcmp.le.f32.partialorder %v3928, 0.7853982
        %vm3930 = vcmp.lt.s32.totalorder %v251, 0
        %v3931 = vand.u32 %v251, 2139095040
        %v3932 = vshrl.u32 %v3931, 23
        %v3933 = vsub.s32 %v3932, 127
        %v3934 = vand.u32 2147483647, %v251
        %v3935 = vand.u32 %v3934, 8388607
        %v3936 = vor.u32 %v3935, 8388608
        %v3937 = vsub.s32 0, %v3936
        %v3938 = vadd.s32 %v3933, 1
        %vm3939 = vcmp.gt.s32.totalorder %v3938, 0
        %v3940 = vsel %vm3939, %v3938, 0
        %v3941 = vshrl.u32 %v3940, 5
        %v3942 = vand.u32 %v3940, 31
        %v3943 = vsub.s32 32, %v3942
        %v3944 = vshrl.u32 683565275, %v3943
        %v3945 = vshll.u32 683565275, %v3942
        %v3946 = vshrl.u32 2475754826, %v3943
        %v3947 = vor.u32 %v3945, %v3946
        %v3948 = vshll.u32 2475754826, %v3942
        %v3949 = vshrl.u32 2131351028, %v3943
        %v3950 = vor.u32 %v3948, %v3949
        %v3951 = vshll.u32 2131351028, %v3942
        %v3952 = vshrl.u32 2102212464, %v3943
        %v3953 = vor.u32 %v3951, %v3952
        %v3954 = vshll.u32 2102212464, %v3942
        %v3955 = vshrl.u32 920167782, %v3943
        %v3956 = vor.u32 %v3954, %v3955
        %v3957 = vshll.u32 920167782, %v3942
        %v3958 = vshrl.u32 1326507024, %v3943
        %v3959 = vor.u32 %v3957, %v3958
        %vm3960 = vcmp.lt.s32.totalorder %v3941, 1
        %vm3961 = vcmp.lt.s32.totalorder %v3941, 2
        %vm3962 = vcmp.lt.s32.totalorder %v3941, 3
        %vm3963 = vcmp.lt.s32.totalorder %v3941, 4
        %v3964 = vsel %vm3960, %v3944, %v3947
        %v3965 = vsel %vm3963, %v3953, 2102212464
        %v3966 = vsel %vm3962, %v3950, %v3965
        %v3967 = vsel %vm3961, %v3964, %v3966
        %v3968 = vsel %vm3960, %v3947, %v3950
        %v3969 = vsel %vm3963, %v3956, 920167782
        %v3970 = vsel %vm3962, %v3953, %v3969
        %v3971 = vsel %vm3961, %v3968, %v3970
        %v3972 = vsel %vm3960, %v3950, %v3953
        %v3973 = vsel %vm3963, %v3959, 1326507024
        %v3974 = vsel %vm3962, %v3956, %v3973
        %v3975 = vsel %vm3961, %v3972, %v3974
        %v3976 = vshll.u32 %v3936, 8
        %v3977 = vand.u32 %v3976, 65535
        %v3978 = vshrl.u32 %v3976, 16
        %v3979 = vand.u32 %v3975, 65535
        %v3980 = vshrl.u32 %v3975, 16
        %v3981 = vmul.u32 %v3977, %v3979
        %v3982 = vmul.u32 %v3977, %v3980
        %v3983 = vmul.u32 %v3978, %v3979
        %v3984 = vmul.u32 %v3978, %v3980
        %v3985 = vshll.u32 %v3982, 16
        %v3986 = vshrl.u32 %v3982, 16
        %v3987 = vshll.u32 %v3983, 16
        %v3988 = vshrl.u32 %v3983, 16
        %vm3989 = vc.u32 %v3981, %v3985
        %v3990 = vsel %vm3989, 1, 0
        %v3991 = vadd.s32 %v3981, %v3985
        %v3992 = vadd.s32 %v3984, %v3990
        %vm3993 = vc.u32 %v3991, %v3987
        %v3994 = vsel %vm3993, 1, 0
        %v3995 = vadd.s32 %v3991, %v3987
        %v3996 = vadd.s32 %v3992, %v3994
        %v3997 = vadd.s32 %v3996, %v3986
        %v3998 = vadd.s32 %v3997, %v3988
        %v3999 = vand.u32 %v3976, 65535
        %v4000 = vshrl.u32 %v3976, 16
        %v4001 = vand.u32 %v3971, 65535
        %v4002 = vshrl.u32 %v3971, 16
        %v4003 = vmul.u32 %v3999, %v4001
        %v4004 = vmul.u32 %v3999, %v4002
        %v4005 = vmul.u32 %v4000, %v4001
        %v4006 = vmul.u32 %v4000, %v4002
        %v4007 = vshll.u32 %v4004, 16
        %v4008 = vshrl.u32 %v4004, 16
        %v4009 = vshll.u32 %v4005, 16
        %v4010 = vshrl.u32 %v4005, 16
        %vm4011 = vc.u32 %v4003, %v4007
        %v4012 = vsel %vm4011, 1, 0
        %v4013 = vadd.s32 %v4003, %v4007
        %v4014 = vadd.s32 %v4006, %v4012
        %vm4015 = vc.u32 %v4013, %v4009
        %v4016 = vsel %vm4015, 1, 0
        %v4017 = vadd.s32 %v4013, %v4009
        %v4018 = vadd.s32 %v4014, %v4016
        %v4019 = vadd.s32 %v4018, %v4008
        %v4020 = vadd.s32 %v4019, %v4010
        %v4021 = vmul.u32 %v3976, %v3967
        %v4022 = vadd.s32 %v3998, %v4017
        %vm4023 = vc.u32 %v3998, %v4017
        %v4024 = vadd.s32 %v4020, 1
        %v4025 = vsel %vm4023, %v4024, %v4020
        %v4026 = vadd.s32 %v4021, %v4025
        %v4027 = vadd.s32 %v4026, 536870912
        %v4028 = vshrl.u32 %v4027, 30
        %v4029 = vshll.u32 %v4028, 30
        %v4030 = vsub.s32 %v4026, %v4029
        %vm4031 = vcmp.lt.s32.totalorder %v4030, 0
        %v4032 = vsub.s32 0, %v4030
        %v4033 = vsel %vm4031, %v4032, %v4030
        %v4034 = vclz %v4033
        %v4035 = vsub.s32 %v4034, 2
        %vm4036 = vcmp.gt.s32.totalorder 0, %v4035
        %v4037 = vsel %vm4036, 0, %v4035
        %v4038 = vsub.s32 32, %v4037
        %v4039 = vshll.u32 %v4030, %v4037
        %v4040 = vshrl.u32 %v4022, %v4038
        %v4041 = vor.u32 %v4039, %v4040
        %v4042 = vsub.s32 4294967266, %v4037
        %v4043 = vadd.s32 %v4042, 127
        %v4044 = vshll.u32 %v4043, 23
        %v4045 = vor.u32 4788187, %v4044
        %v4046 = vand.u32 2147483647, %v4045
        %v4048 = vcvt.s32.f32 %v4041
        %v4049 = vmul.f32 %v4048, %v4046
        %v4050 = vxor.u32 %v4049, 2147483648
        %v4051 = vsel %vm3930, %v4050, %v4049
        %v4052 = vsub.s32 4, %v4028
        %v4053 = vsel %vm3930, %v4052, %v4028
        %v4054 = vsel %vm3929, %v251, %v4051
        %v4055 = vsel %vm3929, 0, %v4053
        %v4056 = vmul.f32 %v4054, %v4054
        %v4057 = vmul.f32 %v4056, -0.001358992
        %v4058 = vadd.f32 %v4057, 0.041655596
        %v4059 = vmul.f32 %v4056, %v4058
        %v4060 = vadd.f32 %v4059, -0.4999988
        %v4061 = vmul.f32 %v4056, %v4060
        %v4062 = vadd.f32 1.0, %v4061
        %v4063 = vmul.f32 %v4054, %v4054
        %v4064 = vmul.f32 %v4063, -0.00019511016
        %v4065 = vadd.f32 %v4064, 0.008332121
        %v4066 = vmul.f32 %v4063, %v4065
        %v4067 = vadd.f32 %v4066, -0.16666654
        %v4068 = vmul.f32 %v4063, %v4067
        %v4069 = vadd.f32 %v4068, 1.0
        %v4070 = vmul.f32 %v4069, %v4054
        %vm4071 = vweird.f32 %v251
        %v4072 = vadd.s32 %v4055, 3
        %v4073 = vand.u32 %v4072, 3
        %vm4074 = vcmp.lt.s32.totalorder %v4073, 2
        %vm4075 = vcmp.eq.s32.totalorder %v4073, 0
        %v4076 = vxor.u32 %v4070, 2147483648
        %v4077 = vsel %vm4075, %v4062, %v4076
        %vm4078 = vcmp.eq.s32.totalorder %v4073, 2
        %v4079 = vxor.u32 %v4062, 2147483648
        %v4080 = vsel %vm4078, %v4079, %v4070
        %v4081 = vsel %vm4074, %v4077, %v4080
        %v4082 = vsel %vm4071, nan, %v4081
        %v4083 = vand.u32 2147483647, %v252
        %vm4084 = vcmp.le.f32.partialorder %v4083, 0.7853982
        %vm4085 = vcmp.lt.s32.totalorder %v252, 0
        %v4086 = vand.u32 %v252, 2139095040
        %v4087 = vshrl.u32 %v4086, 23
        %v4088 = vsub.s32 %v4087, 127
        %v4089 = vand.u32 2147483647, %v252
        %v4090 = vand.u32 %v4089, 8388607
        %v4091 = vor.u32 %v4090, 8388608
        %v4092 = vsub.s32 0, %v4091
        %v4093 = vadd.s32 %v4088, 1
        %vm4094 = vcmp.gt.s32.totalorder %v4093, 0
        %v4095 = vsel %vm4094, %v4093, 0
        %v4096 = vshrl.u32 %v4095, 5
        %v4097 = vand.u32 %v4095, 31
        %v4098 = vsub.s32 32, %v4097
        %v4099 = vshrl.u32 683565275, %v4098
        %v4100 = vshll.u32 683565275, %v4097
        %v4101 = vshrl.u32 2475754826, %v4098
        %v4102 = vor.u32 %v4100, %v4101
        %v4103 = vshll.u32 2475754826, %v4097
        %v4104 = vshrl.u32 2131351028, %v4098
        %v4105 = vor.u32 %v4103, %v4104
        %v4106 = vshll.u32 2131351028, %v4097
        %v4107 = vshrl.u32 2102212464, %v4098
        %v4108 = vor.u32 %v4106, %v4107
        %v4109 = vshll.u32 2102212464, %v4097
        %v4110 = vshrl.u32 920167782, %v4098
        %v4111 = vor.u32 %v4109, %v4110
        %v4112 = vshll.u32 920167782, %v4097
        %v4113 = vshrl.u32 1326507024, %v4098
        %v4114 = vor.u32 %v4112, %v4113
        %vm4115 = vcmp.lt.s32.totalorder %v4096, 1
        %vm4116 = vcmp.lt.s32.totalorder %v4096, 2
        %vm4117 = vcmp.lt.s32.totalorder %v4096, 3
        %vm4118 = vcmp.lt.s32.totalorder %v4096, 4
        %v4119 = vsel %vm4115, %v4099, %v4102
        %v4120 = vsel %vm4118, %v4108, 2102212464
        %v4121 = vsel %vm4117, %v4105, %v4120
        %v4122 = vsel %vm4116, %v4119, %v4121
        %v4123 = vsel %vm4115, %v4102, %v4105
        %v4124 = vsel %vm4118, %v4111, 920167782
        %v4125 = vsel %vm4117, %v4108, %v4124
        %v4126 = vsel %vm4116, %v4123, %v4125
        %v4127 = vsel %vm4115, %v4105, %v4108
        %v4128 = vsel %vm4118, %v4114, 1326507024
        %v4129 = vsel %vm4117, %v4111, %v4128
        %v4130 = vsel %vm4116, %v4127, %v4129
        %v4131 = vshll.u32 %v4091, 8
        %v4132 = vand.u32 %v4131, 65535
        %v4133 = vshrl.u32 %v4131, 16
        %v4134 = vand.u32 %v4130, 65535
        %v4135 = vshrl.u32 %v4130, 16
        %v4136 = vmul.u32 %v4132, %v4134
        %v4137 = vmul.u32 %v4132, %v4135
        %v4138 = vmul.u32 %v4133, %v4134
        %v4139 = vmul.u32 %v4133, %v4135
        %v4140 = vshll.u32 %v4137, 16
        %v4141 = vshrl.u32 %v4137, 16
        %v4142 = vshll.u32 %v4138, 16
        %v4143 = vshrl.u32 %v4138, 16
        %vm4144 = vc.u32 %v4136, %v4140
        %v4145 = vsel %vm4144, 1, 0
        %v4146 = vadd.s32 %v4136, %v4140
        %v4147 = vadd.s32 %v4139, %v4145
        %vm4148 = vc.u32 %v4146, %v4142
        %v4149 = vsel %vm4148, 1, 0
        %v4150 = vadd.s32 %v4146, %v4142
        %v4151 = vadd.s32 %v4147, %v4149
        %v4152 = vadd.s32 %v4151, %v4141
        %v4153 = vadd.s32 %v4152, %v4143
        %v4154 = vand.u32 %v4131, 65535
        %v4155 = vshrl.u32 %v4131, 16
        %v4156 = vand.u32 %v4126, 65535
        %v4157 = vshrl.u32 %v4126, 16
        %v4158 = vmul.u32 %v4154, %v4156
        %v4159 = vmul.u32 %v4154, %v4157
        %v4160 = vmul.u32 %v4155, %v4156
        %v4161 = vmul.u32 %v4155, %v4157
        %v4162 = vshll.u32 %v4159, 16
        %v4163 = vshrl.u32 %v4159, 16
        %v4164 = vshll.u32 %v4160, 16
        %v4165 = vshrl.u32 %v4160, 16
        %vm4166 = vc.u32 %v4158, %v4162
        %v4167 = vsel %vm4166, 1, 0
        %v4168 = vadd.s32 %v4158, %v4162
        %v4169 = vadd.s32 %v4161, %v4167
        %vm4170 = vc.u32 %v4168, %v4164
        %v4171 = vsel %vm4170, 1, 0
        %v4172 = vadd.s32 %v4168, %v4164
        %v4173 = vadd.s32 %v4169, %v4171
        %v4174 = vadd.s32 %v4173, %v4163
        %v4175 = vadd.s32 %v4174, %v4165
        %v4176 = vmul.u32 %v4131, %v4122
        %v4177 = vadd.s32 %v4153, %v4172
        %vm4178 = vc.u32 %v4153, %v4172
        %v4179 = vadd.s32 %v4175, 1
        %v4180 = vsel %vm4178, %v4179, %v4175
        %v4181 = vadd.s32 %v4176, %v4180
        %v4182 = vadd.s32 %v4181, 536870912
        %v4183 = vshrl.u32 %v4182, 30
        %v4184 = vshll.u32 %v4183, 30
        %v4185 = vsub.s32 %v4181, %v4184
        %vm4186 = vcmp.lt.s32.totalorder %v4185, 0
        %v4187 = vsub.s32 0, %v4185
        %v4188 = vsel %vm4186, %v4187, %v4185
        %v4189 = vclz %v4188
        %v4190 = vsub.s32 %v4189, 2
        %vm4191 = vcmp.gt.s32.totalorder 0, %v4190
        %v4192 = vsel %vm4191, 0, %v4190
        %v4193 = vsub.s32 32, %v4192
        %v4194 = vshll.u32 %v4185, %v4192
        %v4195 = vshrl.u32 %v4177, %v4193
        %v4196 = vor.u32 %v4194, %v4195
        %v4197 = vsub.s32 4294967266, %v4192
        %v4198 = vadd.s32 %v4197, 127
        %v4199 = vshll.u32 %v4198, 23
        %v4200 = vor.u32 4788187, %v4199
        %v4201 = vand.u32 2147483647, %v4200
        %v4203 = vcvt.s32.f32 %v4196
        %v4204 = vmul.f32 %v4203, %v4201
        %v4205 = vxor.u32 %v4204, 2147483648
        %v4206 = vsel %vm4085, %v4205, %v4204
        %v4207 = vsub.s32 4, %v4183
        %v4208 = vsel %vm4085, %v4207, %v4183
        %v4209 = vsel %vm4084, %v252, %v4206
        %v4210 = vsel %vm4084, 0, %v4208
        %v4211 = vmul.f32 %v4209, %v4209
        %v4212 = vmul.f32 %v4211, -0.001358992
        %v4213 = vadd.f32 %v4212, 0.041655596
        %v4214 = vmul.f32 %v4211, %v4213
        %v4215 = vadd.f32 %v4214, -0.4999988
        %v4216 = vmul.f32 %v4211, %v4215
        %v4217 = vadd.f32 1.0, %v4216
        %v4218 = vmul.f32 %v4209, %v4209
        %v4219 = vmul.f32 %v4218, -0.00019511016
        %v4220 = vadd.f32 %v4219, 0.008332121
        %v4221 = vmul.f32 %v4218, %v4220
        %v4222 = vadd.f32 %v4221, -0.16666654
        %v4223 = vmul.f32 %v4218, %v4222
        %v4224 = vadd.f32 %v4223, 1.0
        %v4225 = vmul.f32 %v4224, %v4209
        %vm4226 = vweird.f32 %v252
        %v4227 = vadd.s32 %v4210, 3
        %v4228 = vand.u32 %v4227, 3
        %vm4229 = vcmp.lt.s32.totalorder %v4228, 2
        %vm4230 = vcmp.eq.s32.totalorder %v4228, 0
        %v4231 = vxor.u32 %v4225, 2147483648
        %v4232 = vsel %vm4230, %v4217, %v4231
        %vm4233 = vcmp.eq.s32.totalorder %v4228, 2
        %v4234 = vxor.u32 %v4217, 2147483648
        %v4235 = vsel %vm4233, %v4234, %v4225
        %v4236 = vsel %vm4229, %v4232, %v4235
        %v4237 = vsel %vm4226, nan, %v4236
        %v4250 = vrot.slane %v2532, 1
        %v4251 = vrot.slane %v2532, 2
        %v4252 = vrot.slane %v2532, 3
        %v4253 = vrot.slane %v2532, 4
        %v4254 = vrot.slane %v2532, 5
        %v4255 = vrot.slane %v2532, 6
        %v4256 = vrot.slane %v2532, 7
        %v4257 = vrot.slane %v2687, 1
        %v4258 = vrot.slane %v2687, 2
        %v4259 = vrot.slane %v2687, 3
        %v4260 = vrot.slane %v2687, 4
        %v4261 = vrot.slane %v2687, 5
        %v4262 = vrot.slane %v2687, 6
        %v4263 = vrot.slane %v2687, 7
        %v4264 = vrot.slane %v2842, 1
        %v4265 = vrot.slane %v2842, 2
        %v4266 = vrot.slane %v2842, 3
        %v4267 = vrot.slane %v2842, 4
        %v4268 = vrot.slane %v2842, 5
        %v4269 = vrot.slane %v2842, 6
        %v4270 = vrot.slane %v2842, 7
        %v4271 = vrot.slane %v2997, 1
        %v4272 = vrot.slane %v2997, 2
        %v4273 = vrot.slane %v2997, 3
        %v4274 = vrot.slane %v2997, 4
        %v4275 = vrot.slane %v2997, 5
        %v4276 = vrot.slane %v2997, 6
        %v4277 = vrot.slane %v2997, 7
        %v4278 = vrot.slane %v3152, 1
        %v4279 = vrot.slane %v3152, 2
        %v4280 = vrot.slane %v3152, 3
        %v4281 = vrot.slane %v3152, 4
        %v4282 = vrot.slane %v3152, 5
        %v4283 = vrot.slane %v3152, 6
        %v4284 = vrot.slane %v3152, 7
        %v4285 = vrot.slane %v3307, 1
        %v4286 = vrot.slane %v3307, 2
        %v4287 = vrot.slane %v3307, 3
        %v4288 = vrot.slane %v3307, 4
        %v4289 = vrot.slane %v3307, 5
        %v4290 = vrot.slane %v3307, 6
        %v4291 = vrot.slane %v3307, 7
        %v4292 = vrot.slane %v3462, 1
        %v4293 = vrot.slane %v3462, 2
        %v4294 = vrot.slane %v3462, 3
        %v4295 = vrot.slane %v3462, 4
        %v4296 = vrot.slane %v3462, 5
        %v4297 = vrot.slane %v3462, 6
        %v4298 = vrot.slane %v3462, 7
        %v4299 = vrot.slane %v3617, 1
        %v4300 = vrot.slane %v3617, 2
        %v4301 = vrot.slane %v3617, 3
        %v4302 = vrot.slane %v3617, 4
        %v4303 = vrot.slane %v3617, 5
        %v4304 = vrot.slane %v3617, 6
        %v4305 = vrot.slane %v3617, 7
        %v4306 = vrot.slane %v3772, 1
        %v4307 = vrot.slane %v3772, 2
        %v4308 = vrot.slane %v3772, 3
        %v4309 = vrot.slane %v3772, 4
        %v4310 = vrot.slane %v3772, 5
        %v4311 = vrot.slane %v3772, 6
        %v4312 = vrot.slane %v3772, 7
        %v4313 = vrot.slane %v3927, 1
        %v4314 = vrot.slane %v3927, 2
        %v4315 = vrot.slane %v3927, 3
        %v4316 = vrot.slane %v3927, 4
        %v4317 = vrot.slane %v3927, 5
        %v4318 = vrot.slane %v3927, 6
        %v4319 = vrot.slane %v3927, 7
        %v4320 = vrot.slane %v4082, 1
        %v4321 = vrot.slane %v4082, 2
        %v4322 = vrot.slane %v4082, 3
        %v4323 = vrot.slane %v4082, 4
        %v4324 = vrot.slane %v4082, 5
        %v4325 = vrot.slane %v4082, 6
        %v4326 = vrot.slane %v4082, 7
        %v4327 = vrot.slane %v4237, 1
        %v4328 = vrot.slane %v4237, 2
        %v4329 = vrot.slane %v4237, 3
        %v4330 = vrot.slane %v4237, 4
        %v4331 = vrot.slane %v4237, 5
        %v4332 = vrot.slane %v4237, 6
        %v4333 = vrot.slane %v4237, 7
        %4418 = vst.msk [vmem:[%s145 + $0x1] sm:$0x1] %vm2281, %v2532
        %4419 = vst.msk [vmem:[%s145 + $0x3] sm:$0x1] %vm2281, %v4250
        %4420 = vst.msk [vmem:[%s145 + $0x5] sm:$0x1] %vm2281, %v4251
        %4421 = vst.msk [vmem:[%s145 + $0x7] sm:$0x1] %vm2281, %v4252
        %4422 = vst.msk [vmem:[%s145 + $0x9] sm:$0x1] %vm2281, %v4253
        %4423 = vst.msk [vmem:[%s145 + $0xb] sm:$0x1] %vm2281, %v4254
        %4424 = vst.msk [vmem:[%s145 + $0xd] sm:$0x1] %vm2281, %v4255
        %4425 = vst.msk [vmem:[%s145 + $0xf] sm:$0x1] %vm2281, %v4256
        %4426 = vst.msk [vmem:[%s145 + $0x11] sm:$0x1] %vm2281, %v2687
        %4427 = vst.msk [vmem:[%s145 + $0x13] sm:$0x1] %vm2281, %v4257
        %4428 = vst.msk [vmem:[%s145 + $0x15] sm:$0x1] %vm2281, %v4258
        %4429 = vst.msk [vmem:[%s145 + $0x17] sm:$0x1] %vm2281, %v4259
        %4430 = vst.msk [vmem:[%s145 + $0x19] sm:$0x1] %vm2281, %v4260
        %4431 = vst.msk [vmem:[%s145 + $0x1b] sm:$0x1] %vm2281, %v4261
        %4432 = vst.msk [vmem:[%s145 + $0x1d] sm:$0x1] %vm2281, %v4262
        %4433 = vst.msk [vmem:[%s145 + $0x1f] sm:$0x1] %vm2281, %v4263
        %4434 = vst.msk [vmem:[%s145 + $0x21] sm:$0x1] %vm2281, %v2842
        %4435 = vst.msk [vmem:[%s145 + $0x23] sm:$0x1] %vm2281, %v4264
        %4436 = vst.msk [vmem:[%s145 + $0x25] sm:$0x1] %vm2281, %v4265
        %4437 = vst.msk [vmem:[%s145 + $0x27] sm:$0x1] %vm2281, %v4266
        %4438 = vst.msk [vmem:[%s145 + $0x29] sm:$0x1] %vm2281, %v4267
        %4439 = vst.msk [vmem:[%s145 + $0x2b] sm:$0x1] %vm2281, %v4268
        %4440 = vst.msk [vmem:[%s145 + $0x2d] sm:$0x1] %vm2281, %v4269
        %4441 = vst.msk [vmem:[%s145 + $0x2f] sm:$0x1] %vm2281, %v4270
        %4442 = vst.msk [vmem:[%s145 + $0x31] sm:$0x1] %vm2281, %v2997
        %4443 = vst.msk [vmem:[%s145 + $0x33] sm:$0x1] %vm2281, %v4271
        %4444 = vst.msk [vmem:[%s145 + $0x35] sm:$0x1] %vm2281, %v4272
        %4445 = vst.msk [vmem:[%s145 + $0x37] sm:$0x1] %vm2281, %v4273
        %4446 = vst.msk [vmem:[%s145 + $0x39] sm:$0x1] %vm2281, %v4274
        %4447 = vst.msk [vmem:[%s145 + $0x3b] sm:$0x1] %vm2281, %v4275
        %4448 = vst.msk [vmem:[%s145 + $0x3d] sm:$0x1] %vm2281, %v4276
        %4449 = vst.msk [vmem:[%s145 + $0x3f] sm:$0x1] %vm2281, %v4277
        %4450 = vst.msk [vmem:[%s145 + $0x41] sm:$0x1] %vm2281, %v3152
        %4451 = vst.msk [vmem:[%s145 + $0x43] sm:$0x1] %vm2281, %v4278
        %4452 = vst.msk [vmem:[%s145 + $0x45] sm:$0x1] %vm2281, %v4279
        %4453 = vst.msk [vmem:[%s145 + $0x47] sm:$0x1] %vm2281, %v4280
        %4454 = vst.msk [vmem:[%s145 + $0x49] sm:$0x1] %vm2281, %v4281
        %4455 = vst.msk [vmem:[%s145 + $0x4b] sm:$0x1] %vm2281, %v4282
        %4456 = vst.msk [vmem:[%s145 + $0x4d] sm:$0x1] %vm2281, %v4283
        %4457 = vst.msk [vmem:[%s145 + $0x4f] sm:$0x1] %vm2281, %v4284
        %4458 = vst.msk [vmem:[%s145 + $0x51] sm:$0x1] %vm2281, %v3307
        %4459 = vst.msk [vmem:[%s145 + $0x53] sm:$0x1] %vm2281, %v4285
        %4460 = vst.msk [vmem:[%s145 + $0x55] sm:$0x1] %vm2281, %v4286
        %4461 = vst.msk [vmem:[%s145 + $0x57] sm:$0x1] %vm2281, %v4287
        %4462 = vst.msk [vmem:[%s145 + $0x59] sm:$0x1] %vm2281, %v4288
        %4463 = vst.msk [vmem:[%s145 + $0x5b] sm:$0x1] %vm2281, %v4289
        %4464 = vst.msk [vmem:[%s145 + $0x5d] sm:$0x1] %vm2281, %v4290
        %4465 = vst.msk [vmem:[%s145 + $0x5f] sm:$0x1] %vm2281, %v4291
        %4466 = vst.msk [vmem:[%s145 + $0x61] sm:$0x1] %vm2281, %v3462
        %4467 = vst.msk [vmem:[%s145 + $0x63] sm:$0x1] %vm2281, %v4292
        %4468 = vst.msk [vmem:[%s145 + $0x65] sm:$0x1] %vm2281, %v4293
        %4469 = vst.msk [vmem:[%s145 + $0x67] sm:$0x1] %vm2281, %v4294
        %4470 = vst.msk [vmem:[%s145 + $0x69] sm:$0x1] %vm2281, %v4295
        %4471 = vst.msk [vmem:[%s145 + $0x6b] sm:$0x1] %vm2281, %v4296
        %4472 = vst.msk [vmem:[%s145 + $0x6d] sm:$0x1] %vm2281, %v4297
        %4473 = vst.msk [vmem:[%s145 + $0x6f] sm:$0x1] %vm2281, %v4298
        %4474 = vst.msk [vmem:[%s145 + $0x71] sm:$0x1] %vm2281, %v3617
        %4475 = vst.msk [vmem:[%s145 + $0x73] sm:$0x1] %vm2281, %v4299
        %4476 = vst.msk [vmem:[%s145 + $0x75] sm:$0x1] %vm2281, %v4300
        %4477 = vst.msk [vmem:[%s145 + $0x77] sm:$0x1] %vm2281, %v4301
        %4478 = vst.msk [vmem:[%s145 + $0x79] sm:$0x1] %vm2281, %v4302
        %4479 = vst.msk [vmem:[%s145 + $0x7b] sm:$0x1] %vm2281, %v4303
        %4480 = vst.msk [vmem:[%s145 + $0x7d] sm:$0x1] %vm2281, %v4304
        %4481 = vst.msk [vmem:[%s145 + $0x7f] sm:$0x1] %vm2281, %v4305
        %4482 = vst.msk [vmem:[%s145 + $0x81] sm:$0x1] %vm2281, %v3772
        %4483 = vst.msk [vmem:[%s145 + $0x83] sm:$0x1] %vm2281, %v4306
        %4484 = vst.msk [vmem:[%s145 + $0x85] sm:$0x1] %vm2281, %v4307
        %4485 = vst.msk [vmem:[%s145 + $0x87] sm:$0x1] %vm2281, %v4308
        %4486 = vst.msk [vmem:[%s145 + $0x89] sm:$0x1] %vm2281, %v4309
        %4487 = vst.msk [vmem:[%s145 + $0x8b] sm:$0x1] %vm2281, %v4310
        %4488 = vst.msk [vmem:[%s145 + $0x8d] sm:$0x1] %vm2281, %v4311
        %4489 = vst.msk [vmem:[%s145 + $0x8f] sm:$0x1] %vm2281, %v4312
        %4490 = vst.msk [vmem:[%s145 + $0x91] sm:$0x1] %vm2281, %v3927
        %4491 = vst.msk [vmem:[%s145 + $0x93] sm:$0x1] %vm2281, %v4313
        %4492 = vst.msk [vmem:[%s145 + $0x95] sm:$0x1] %vm2281, %v4314
        %4493 = vst.msk [vmem:[%s145 + $0x97] sm:$0x1] %vm2281, %v4315
        %4494 = vst.msk [vmem:[%s145 + $0x99] sm:$0x1] %vm2281, %v4316
        %4495 = vst.msk [vmem:[%s145 + $0x9b] sm:$0x1] %vm2281, %v4317
        %4496 = vst.msk [vmem:[%s145 + $0x9d] sm:$0x1] %vm2281, %v4318
        %4497 = vst.msk [vmem:[%s145 + $0x9f] sm:$0x1] %vm2281, %v4319
        %4498 = vst.msk [vmem:[%s145 + $0xa1] sm:$0x1] %vm2281, %v4082
        %4499 = vst.msk [vmem:[%s145 + $0xa3] sm:$0x1] %vm2281, %v4320
        %4500 = vst.msk [vmem:[%s145 + $0xa5] sm:$0x1] %vm2281, %v4321
        %4501 = vst.msk [vmem:[%s145 + $0xa7] sm:$0x1] %vm2281, %v4322
        %4502 = vst.msk [vmem:[%s145 + $0xa9] sm:$0x1] %vm2281, %v4323
        %4503 = vst.msk [vmem:[%s145 + $0xab] sm:$0x1] %vm2281, %v4324
        %4504 = vst.msk [vmem:[%s145 + $0xad] sm:$0x1] %vm2281, %v4325
        %4505 = vst.msk [vmem:[%s145 + $0xaf] sm:$0x1] %vm2281, %v4326
        %4506 = vst.msk [vmem:[%s145 + $0xb1] sm:$0x1] %vm2281, %v4237
        %4507 = vst.msk [vmem:[%s145 + $0xb3] sm:$0x1] %vm2281, %v4327
        %4508 = vst.msk [vmem:[%s145 + $0xb5] sm:$0x1] %vm2281, %v4328
        %4509 = vst.msk [vmem:[%s145 + $0xb7] sm:$0x1] %vm2281, %v4329
        %4510 = vst.msk [vmem:[%s145 + $0xb9] sm:$0x1] %vm2281, %v4330
        %4511 = vst.msk [vmem:[%s145 + $0xbb] sm:$0x1] %vm2281, %v4331
        %4512 = vst.msk [vmem:[%s145 + $0xbd] sm:$0x1] %vm2281, %v4332
        %4513 = vst.msk [vmem:[%s145 + $0xbf] sm:$0x1] %vm2281, %v4333
        %s4514 = sand.u32 %s68, 1
        %s4515 = sand.u32 %s68, 1
        %s4516 = smul.addr %s4515, 192
        %s4517 = scalar_lea.vmem [#allocation2], %s4516
        // Predicated region
        $region29: #{tpu_custom_call.1} parent=27 // pred_check
          %p4518 = pneg %p78
        $region30: #{tpu_custom_call.1} parent=27 // pred_check_branch
          %4520 = sbr.rel (%p4518) target = $region32
        $region31: #{tpu_custom_call.1} parent=27 // pred_region
          %s4521 = smul.u32 96, %s13
          %s4522 = ssub.s32 200, %s4521
          %p4523 = scmp.lt.s32.totalorder %s4522, 96
          %s4524 = scalar_select %p4523, %s4522, 96
          %s4525 = smul.u32 2, %s4524
          %p4526 = scmp.ne.s32.totalorder 0, %s4525
          %s4527 = smul.addr %s4521, 2
          %s4528 = scalar_lea.vmem %s2, %s4527
          // Predicated region
          $region33: #{tpu_custom_call.1} parent=31 // pred_check
            %p4529 = pneg %p4526
          $region34: #{tpu_custom_call.1} parent=31 // pred_check_branch
            %4531 = sbr.rel (%p4529) target = $region36
          $region35: #{tpu_custom_call.1} parent=31 // pred_region
            // Predicated region
            $region37: #{tpu_custom_call.1} parent=35 // pred_check
              _
            $region38: #{tpu_custom_call.1} parent=35 // pred_check_branch
              %4533 = sbr.rel target = $region40
            $region39: #{tpu_custom_call.1} parent=35 // pred_region
              // Predicated region
              $region59: #{tpu_custom_call.1} parent=39 // pred_check
                _
              $region60: #{tpu_custom_call.1} parent=39 // pred_check_branch
                %4645 = sbr.rel (0) target = $region62
              $region61: #{tpu_custom_call.1} parent=39 // pred_region
                %s4647 = ssub.s32 4, 1
                %s4648 = sshrl.u32 %s4524, 5
                // While loop
                $region63: #{tpu_custom_call.1} parent=61 // loop_pre_header
                  _
                $region64: #{tpu_custom_call.1} parent=61 // loop_header
                  %s4650 = sphi 0, %s4652
                  %p4651 = scmp.ge.s32.totalorder %s4650, %s4648
                  %s4655 = sphi 0, %s4724
                  %s4656 = sphi %s4517, %s4727
                  %s4657 = sphi %s4528, %s4728
                $region65: #{tpu_custom_call.1} parent=61 // loop_header_branch
                  %4654 = sbr.rel (%p4651) target = $region69
                $region66: #{tpu_custom_call.1} parent=61 // loop_body
                  %v4658 = vld [vmem:[%s4656] sm:%s4647]
                  %4659 = vst [vmem:[%s4657] sm:%s4647] %v4658
                  %v4660 = vld [vmem:[%s4656 + $0x2] sm:%s4647]
                  %4661 = vst [vmem:[%s4657 + $0x2] sm:%s4647] %v4660
                  %v4662 = vld [vmem:[%s4656 + $0x4] sm:%s4647]
                  %4663 = vst [vmem:[%s4657 + $0x4] sm:%s4647] %v4662
                  %v4664 = vld [vmem:[%s4656 + $0x6] sm:%s4647]
                  %4665 = vst [vmem:[%s4657 + $0x6] sm:%s4647] %v4664
                  %v4666 = vld [vmem:[%s4656 + $0x8] sm:%s4647]
                  %4667 = vst [vmem:[%s4657 + $0x8] sm:%s4647] %v4666
                  %v4668 = vld [vmem:[%s4656 + $0xa] sm:%s4647]
                  %4669 = vst [vmem:[%s4657 + $0xa] sm:%s4647] %v4668
                  %v4670 = vld [vmem:[%s4656 + $0xc] sm:%s4647]
                  %4671 = vst [vmem:[%s4657 + $0xc] sm:%s4647] %v4670
                  %v4672 = vld [vmem:[%s4656 + $0xe] sm:%s4647]
                  %4673 = vst [vmem:[%s4657 + $0xe] sm:%s4647] %v4672
                  %v4674 = vld [vmem:[%s4656 + $0x10] sm:%s4647]
                  %4675 = vst [vmem:[%s4657 + $0x10] sm:%s4647] %v4674
                  %v4676 = vld [vmem:[%s4656 + $0x12] sm:%s4647]
                  %4677 = vst [vmem:[%s4657 + $0x12] sm:%s4647] %v4676
                  %v4678 = vld [vmem:[%s4656 + $0x14] sm:%s4647]
                  %4679 = vst [vmem:[%s4657 + $0x14] sm:%s4647] %v4678
                  %v4680 = vld [vmem:[%s4656 + $0x16] sm:%s4647]
                  %4681 = vst [vmem:[%s4657 + $0x16] sm:%s4647] %v4680
                  %v4682 = vld [vmem:[%s4656 + $0x18] sm:%s4647]
                  %4683 = vst [vmem:[%s4657 + $0x18] sm:%s4647] %v4682
                  %v4684 = vld [vmem:[%s4656 + $0x1a] sm:%s4647]
                  %4685 = vst [vmem:[%s4657 + $0x1a] sm:%s4647] %v4684
                  %v4686 = vld [vmem:[%s4656 + $0x1c] sm:%s4647]
                  %4687 = vst [vmem:[%s4657 + $0x1c] sm:%s4647] %v4686
                  %v4688 = vld [vmem:[%s4656 + $0x1e] sm:%s4647]
                  %4689 = vst [vmem:[%s4657 + $0x1e] sm:%s4647] %v4688
                  %v4690 = vld [vmem:[%s4656 + $0x20] sm:%s4647]
                  %4691 = vst [vmem:[%s4657 + $0x20] sm:%s4647] %v4690
                  %v4692 = vld [vmem:[%s4656 + $0x22] sm:%s4647]
                  %4693 = vst [vmem:[%s4657 + $0x22] sm:%s4647] %v4692
                  %v4694 = vld [vmem:[%s4656 + $0x24] sm:%s4647]
                  %4695 = vst [vmem:[%s4657 + $0x24] sm:%s4647] %v4694
                  %v4696 = vld [vmem:[%s4656 + $0x26] sm:%s4647]
                  %4697 = vst [vmem:[%s4657 + $0x26] sm:%s4647] %v4696
                  %v4698 = vld [vmem:[%s4656 + $0x28] sm:%s4647]
                  %4699 = vst [vmem:[%s4657 + $0x28] sm:%s4647] %v4698
                  %v4700 = vld [vmem:[%s4656 + $0x2a] sm:%s4647]
                  %4701 = vst [vmem:[%s4657 + $0x2a] sm:%s4647] %v4700
                  %v4702 = vld [vmem:[%s4656 + $0x2c] sm:%s4647]
                  %4703 = vst [vmem:[%s4657 + $0x2c] sm:%s4647] %v4702
                  %v4704 = vld [vmem:[%s4656 + $0x2e] sm:%s4647]
                  %4705 = vst [vmem:[%s4657 + $0x2e] sm:%s4647] %v4704
                  %v4706 = vld [vmem:[%s4656 + $0x30] sm:%s4647]
                  %4707 = vst [vmem:[%s4657 + $0x30] sm:%s4647] %v4706
                  %v4708 = vld [vmem:[%s4656 + $0x32] sm:%s4647]
                  %4709 = vst [vmem:[%s4657 + $0x32] sm:%s4647] %v4708
                  %v4710 = vld [vmem:[%s4656 + $0x34] sm:%s4647]
                  %4711 = vst [vmem:[%s4657 + $0x34] sm:%s4647] %v4710
                  %v4712 = vld [vmem:[%s4656 + $0x36] sm:%s4647]
                  %4713 = vst [vmem:[%s4657 + $0x36] sm:%s4647] %v4712
                  %v4714 = vld [vmem:[%s4656 + $0x38] sm:%s4647]
                  %4715 = vst [vmem:[%s4657 + $0x38] sm:%s4647] %v4714
                  %v4716 = vld [vmem:[%s4656 + $0x3a] sm:%s4647]
                  %4717 = vst [vmem:[%s4657 + $0x3a] sm:%s4647] %v4716
                  %v4718 = vld [vmem:[%s4656 + $0x3c] sm:%s4647]
                  %4719 = vst [vmem:[%s4657 + $0x3c] sm:%s4647] %v4718
                  %v4720 = vld [vmem:[%s4656 + $0x3e] sm:%s4647]
                  %4721 = vst [vmem:[%s4657 + $0x3e] sm:%s4647] %v4720
                  %s4722 = sadd.s32 1, %s4655
                  %p4723 = scmp.ge.s32.totalorder %s4722, %s4648
                  %s4724 = scalar_select %p4723, 0, %s4722
                  %s4725 = smul.u32 %s4724, 64
                  %s4726 = smul.u32 %s4724, 64
                  %s4727 = scalar_lea.vmem %s4517, %s4725 [#allocation2]
                  %s4728 = scalar_lea.vmem %s4528, %s4726
                $region67: #{tpu_custom_call.1} parent=61 // loop_footer
                  %s4652 = sadd.s32 %s4650, 1
                $region68: #{tpu_custom_call.1} parent=61 // loop_footer_branch
                  %4649 = sbr.rel target = $region64
                $region69: #{tpu_custom_call.1} parent=61 // loop_exit
                  _
                %s4729 = sshrl.u32 %s4524, 5
                %s4730 = sand.u32 %s4524, 31
                %s4731 = smul.u32 %s4729, 32
                %s4732 = smul.u32 2, %s4731
                %s4733 = scalar_lea.vmem %s4517, %s4732 [#allocation2]
                %s4734 = smul.u32 2, %s4731
                %s4735 = scalar_lea.vmem %s4528, %s4734
                // While loop
                $region70: #{tpu_custom_call.1} parent=61 // loop_pre_header
                  _
                $region71: #{tpu_custom_call.1} parent=61 // loop_header
                  %s4737 = sphi 0, %s4739
                  %p4738 = scmp.ge.s32.totalorder %s4737, %s4730
                  %s4742 = sphi 0, %s4749
                  %s4743 = sphi %s4733, %s4752
                  %s4744 = sphi %s4735, %s4753
                $region72: #{tpu_custom_call.1} parent=61 // loop_header_branch
                  %4741 = sbr.rel (%p4738) target = $region76
                $region73: #{tpu_custom_call.1} parent=61 // loop_body
                  %v4745 = vld [vmem:[%s4743] sm:%s4647]
                  %4746 = vst [vmem:[%s4744] sm:%s4647] %v4745
                  %s4747 = sadd.s32 1, %s4742
                  %p4748 = scmp.ge.s32.totalorder %s4747, %s4730
                  %s4749 = scalar_select %p4748, 0, %s4747
                  %s4750 = smul.u32 %s4749, 2
                  %s4751 = smul.u32 %s4749, 2
                  %s4752 = scalar_lea.vmem %s4733, %s4750 [#allocation2]
                  %s4753 = scalar_lea.vmem %s4735, %s4751
                $region74: #{tpu_custom_call.1} parent=61 // loop_footer
                  %s4739 = sadd.s32 %s4737, 1
                $region75: #{tpu_custom_call.1} parent=61 // loop_footer_branch
                  %4736 = sbr.rel target = $region71
                $region76: #{tpu_custom_call.1} parent=61 // loop_exit
                  _
              $region62: #{tpu_custom_call.1} parent=39 // pred_fallthru
                _
            $region40: #{tpu_custom_call.1} parent=35 // pred_fallthru
              _
            // Predicated region
            $region41: #{tpu_custom_call.1} parent=35 // pred_check
              _
            $region42: #{tpu_custom_call.1} parent=35 // pred_check_branch
              %4535 = sbr.rel (0) target = $region44
            $region43: #{tpu_custom_call.1} parent=35 // pred_region
              %s4537 = ssub.s32 4, 1
              %s4538 = sshrl.u32 %s4524, 5
              // While loop
              $region45: #{tpu_custom_call.1} parent=43 // loop_pre_header
                _
              $region46: #{tpu_custom_call.1} parent=43 // loop_header
                %s4540 = sphi 0, %s4542
                %p4541 = scmp.ge.s32.totalorder %s4540, %s4538
                %s4545 = sphi 0, %s4614
                %s4546 = sphi %s4517, %s4617
                %s4547 = sphi %s4528, %s4618
              $region47: #{tpu_custom_call.1} parent=43 // loop_header_branch
                %4544 = sbr.rel (%p4541) target = $region51
              $region48: #{tpu_custom_call.1} parent=43 // loop_body
                %v4548 = vld [vmem:[%s4546] sm:%s4537]
                %4549 = vst [vmem:[%s4547] sm:%s4537] %v4548
                %v4550 = vld [vmem:[%s4546 + $0x2] sm:%s4537]
                %4551 = vst [vmem:[%s4547 + $0x2] sm:%s4537] %v4550
                %v4552 = vld [vmem:[%s4546 + $0x4] sm:%s4537]
                %4553 = vst [vmem:[%s4547 + $0x4] sm:%s4537] %v4552
                %v4554 = vld [vmem:[%s4546 + $0x6] sm:%s4537]
                %4555 = vst [vmem:[%s4547 + $0x6] sm:%s4537] %v4554
                %v4556 = vld [vmem:[%s4546 + $0x8] sm:%s4537]
                %4557 = vst [vmem:[%s4547 + $0x8] sm:%s4537] %v4556
                %v4558 = vld [vmem:[%s4546 + $0xa] sm:%s4537]
                %4559 = vst [vmem:[%s4547 + $0xa] sm:%s4537] %v4558
                %v4560 = vld [vmem:[%s4546 + $0xc] sm:%s4537]
                %4561 = vst [vmem:[%s4547 + $0xc] sm:%s4537] %v4560
                %v4562 = vld [vmem:[%s4546 + $0xe] sm:%s4537]
                %4563 = vst [vmem:[%s4547 + $0xe] sm:%s4537] %v4562
                %v4564 = vld [vmem:[%s4546 + $0x10] sm:%s4537]
                %4565 = vst [vmem:[%s4547 + $0x10] sm:%s4537] %v4564
                %v4566 = vld [vmem:[%s4546 + $0x12] sm:%s4537]
                %4567 = vst [vmem:[%s4547 + $0x12] sm:%s4537] %v4566
                %v4568 = vld [vmem:[%s4546 + $0x14] sm:%s4537]
                %4569 = vst [vmem:[%s4547 + $0x14] sm:%s4537] %v4568
                %v4570 = vld [vmem:[%s4546 + $0x16] sm:%s4537]
                %4571 = vst [vmem:[%s4547 + $0x16] sm:%s4537] %v4570
                %v4572 = vld [vmem:[%s4546 + $0x18] sm:%s4537]
                %4573 = vst [vmem:[%s4547 + $0x18] sm:%s4537] %v4572
                %v4574 = vld [vmem:[%s4546 + $0x1a] sm:%s4537]
                %4575 = vst [vmem:[%s4547 + $0x1a] sm:%s4537] %v4574
                %v4576 = vld [vmem:[%s4546 + $0x1c] sm:%s4537]
                %4577 = vst [vmem:[%s4547 + $0x1c] sm:%s4537] %v4576
                %v4578 = vld [vmem:[%s4546 + $0x1e] sm:%s4537]
                %4579 = vst [vmem:[%s4547 + $0x1e] sm:%s4537] %v4578
                %v4580 = vld [vmem:[%s4546 + $0x20] sm:%s4537]
                %4581 = vst [vmem:[%s4547 + $0x20] sm:%s4537] %v4580
                %v4582 = vld [vmem:[%s4546 + $0x22] sm:%s4537]
                %4583 = vst [vmem:[%s4547 + $0x22] sm:%s4537] %v4582
                %v4584 = vld [vmem:[%s4546 + $0x24] sm:%s4537]
                %4585 = vst [vmem:[%s4547 + $0x24] sm:%s4537] %v4584
                %v4586 = vld [vmem:[%s4546 + $0x26] sm:%s4537]
                %4587 = vst [vmem:[%s4547 + $0x26] sm:%s4537] %v4586
                %v4588 = vld [vmem:[%s4546 + $0x28] sm:%s4537]
                %4589 = vst [vmem:[%s4547 + $0x28] sm:%s4537] %v4588
                %v4590 = vld [vmem:[%s4546 + $0x2a] sm:%s4537]
                %4591 = vst [vmem:[%s4547 + $0x2a] sm:%s4537] %v4590
                %v4592 = vld [vmem:[%s4546 + $0x2c] sm:%s4537]
                %4593 = vst [vmem:[%s4547 + $0x2c] sm:%s4537] %v4592
                %v4594 = vld [vmem:[%s4546 + $0x2e] sm:%s4537]
                %4595 = vst [vmem:[%s4547 + $0x2e] sm:%s4537] %v4594
                %v4596 = vld [vmem:[%s4546 + $0x30] sm:%s4537]
                %4597 = vst [vmem:[%s4547 + $0x30] sm:%s4537] %v4596
                %v4598 = vld [vmem:[%s4546 + $0x32] sm:%s4537]
                %4599 = vst [vmem:[%s4547 + $0x32] sm:%s4537] %v4598
                %v4600 = vld [vmem:[%s4546 + $0x34] sm:%s4537]
                %4601 = vst [vmem:[%s4547 + $0x34] sm:%s4537] %v4600
                %v4602 = vld [vmem:[%s4546 + $0x36] sm:%s4537]
                %4603 = vst [vmem:[%s4547 + $0x36] sm:%s4537] %v4602
                %v4604 = vld [vmem:[%s4546 + $0x38] sm:%s4537]
                %4605 = vst [vmem:[%s4547 + $0x38] sm:%s4537] %v4604
                %v4606 = vld [vmem:[%s4546 + $0x3a] sm:%s4537]
                %4607 = vst [vmem:[%s4547 + $0x3a] sm:%s4537] %v4606
                %v4608 = vld [vmem:[%s4546 + $0x3c] sm:%s4537]
                %4609 = vst [vmem:[%s4547 + $0x3c] sm:%s4537] %v4608
                %v4610 = vld [vmem:[%s4546 + $0x3e] sm:%s4537]
                %4611 = vst [vmem:[%s4547 + $0x3e] sm:%s4537] %v4610
                %s4612 = sadd.s32 1, %s4545
                %p4613 = scmp.ge.s32.totalorder %s4612, %s4538
                %s4614 = scalar_select %p4613, 0, %s4612
                %s4615 = smul.u32 %s4614, 64
                %s4616 = smul.u32 %s4614, 64
                %s4617 = scalar_lea.vmem %s4517, %s4615 [#allocation2]
                %s4618 = scalar_lea.vmem %s4528, %s4616
              $region49: #{tpu_custom_call.1} parent=43 // loop_footer
                %s4542 = sadd.s32 %s4540, 1
              $region50: #{tpu_custom_call.1} parent=43 // loop_footer_branch
                %4539 = sbr.rel target = $region46
              $region51: #{tpu_custom_call.1} parent=43 // loop_exit
                _
              %s4619 = sshrl.u32 %s4524, 5
              %s4620 = sand.u32 %s4524, 31
              %s4621 = smul.u32 %s4619, 32
              %s4622 = smul.u32 2, %s4621
              %s4623 = scalar_lea.vmem %s4517, %s4622 [#allocation2]
              %s4624 = smul.u32 2, %s4621
              %s4625 = scalar_lea.vmem %s4528, %s4624
              // While loop
              $region52: #{tpu_custom_call.1} parent=43 // loop_pre_header
                _
              $region53: #{tpu_custom_call.1} parent=43 // loop_header
                %s4627 = sphi 0, %s4629
                %p4628 = scmp.ge.s32.totalorder %s4627, %s4620
                %s4632 = sphi 0, %s4639
                %s4633 = sphi %s4623, %s4642
                %s4634 = sphi %s4625, %s4643
              $region54: #{tpu_custom_call.1} parent=43 // loop_header_branch
                %4631 = sbr.rel (%p4628) target = $region58
              $region55: #{tpu_custom_call.1} parent=43 // loop_body
                %v4635 = vld [vmem:[%s4633] sm:%s4537]
                %4636 = vst [vmem:[%s4634] sm:%s4537] %v4635
                %s4637 = sadd.s32 1, %s4632
                %p4638 = scmp.ge.s32.totalorder %s4637, %s4620
                %s4639 = scalar_select %p4638, 0, %s4637
                %s4640 = smul.u32 %s4639, 2
                %s4641 = smul.u32 %s4639, 2
                %s4642 = scalar_lea.vmem %s4623, %s4640 [#allocation2]
                %s4643 = scalar_lea.vmem %s4625, %s4641
              $region56: #{tpu_custom_call.1} parent=43 // loop_footer
                %s4629 = sadd.s32 %s4627, 1
              $region57: #{tpu_custom_call.1} parent=43 // loop_footer_branch
                %4626 = sbr.rel target = $region53
              $region58: #{tpu_custom_call.1} parent=43 // loop_exit
                _
            $region44: #{tpu_custom_call.1} parent=35 // pred_fallthru
              _
          $region36: #{tpu_custom_call.1} parent=31 // pred_fallthru
            _
          %4754 = vnop
        $region32: #{tpu_custom_call.1} parent=27 // pred_fallthru
          _
      $region28: #{tpu_custom_call.1} parent=5 // pred_fallthru
        _
      %p4755 = scmp.le.s32.totalorder 2, %s8
      // Predicated region
      $region77: #{tpu_custom_call.1} parent=5 // pred_check
        %p4756 = pneg %p4755
      $region78: #{tpu_custom_call.1} parent=5 // pred_check_branch
        %4758 = sbr.rel (%p4756) target = $region80
      $region79: #{tpu_custom_call.1} parent=5 // pred_region
        %s4759 = ssub.s32 %s8, 2
        // Predicated region
        $region81: #{tpu_custom_call.1} parent=79 // pred_check
          %p4760 = pneg %p84
        $region82: #{tpu_custom_call.1} parent=79 // pred_check_branch
          %4762 = sbr.rel (%p4760) target = $region84
        $region83: #{tpu_custom_call.1} parent=79 // pred_region
          %s4763 = sand.u32 %s69, 1
          %s4764 = sand.u32 %s69, 1
          %s4765 = smul.addr %s4764, 192
          %s4766 = scalar_lea.vmem [#allocation2], %s4765
        $region84: #{tpu_custom_call.1} parent=79 // pred_fallthru
          _
      $region80: #{tpu_custom_call.1} parent=5 // pred_fallthru
        _
    $region6: #{tpu_custom_call.1} parent=1 // loop_footer
      %s12 = sadd.s32 1, %s8
    $region7: #{tpu_custom_call.1} parent=1 // loop_footer_branch
      %7 = sbr.rel target = $region3
    $region8: #{tpu_custom_call.1} parent=1 // loop_exit
      _

</llo_original>
